<compile_context>
chip_gen: v6e
topology: v6e:2x2x1
jax: 0.10.0
libtpu: 0.0.40
codegen_flags: <defaults>
</compile_context>

<pallas_src>
import jax
import jax.numpy as jnp
from jax.experimental import pallas as pl
from jax.experimental.pallas import tpu as pltpu


def _round_up(x, m):
    return ((x + m - 1) // m) * m


# ----------------------------------------------------------------------------
# Fused Pallas kernel (all layers, wavefront recurrence, fc/relu head)
# grid = (num_time_chunks,)
# ----------------------------------------------------------------------------
def _make_fused_lstm_kernel(num_layers, bp, hidden, chunk, seq_len):
    H, BP, L, CH, T = hidden, bp, num_layers, chunk, seq_len
    total_steps = CH + L - 1          # wavefront fill + steady + drain
    unroll = True if total_steps <= 16 else 2

    def kernel(*args):
        # ---- unpack refs ----------------------------------------------------
        x_ref = args[0]                      # (CH*BP, Din) time-major, flat
        p = 1
        w_ih_refs, w_hh_refs, b_refs = [], [], []
        for _ in range(L):
            w_ih_refs.append(args[p])        # (Din or H, 4H)
            w_hh_refs.append(args[p + 1])    # (H, 4H)
            b_refs.append(args[p + 2])       # (1, 4H)
            p += 3
        w_fc_ref = args[p]                   # (1, H)
        b_fc_ref = args[p + 1]               # (1, 1)
        out_ref = args[p + 2]                # (BP, 1) resident output
        xp_ref = args[p + 3]                 # (CH*BP, 4H) scratch
        h_ref = args[p + 4]                  # (L, BP, H) scratch (persists)
        c_ref = args[p + 5]                  # (L, BP, H) scratch (persists)

        c_idx = pl.program_id(0)

        # Initialize recurrent state on the first chunk; the scratch persists
        # across grid steps and carries (h, c) between chunks.
        @pl.when(c_idx == 0)
        def _():
            h_ref[...] = jnp.zeros_like(h_ref)
            c_ref[...] = jnp.zeros_like(c_ref)

        # ---- hoisted layer-0 input projection for the whole chunk -----------
        # One MXU matmul with M = CH*BP rows; bias broadcast added once.
        xp_ref[...] = (
            jnp.dot(x_ref[...], w_ih_refs[0][...],
                    preferred_element_type=jnp.float32)
            + b_refs[0][...]
        )

        # Loop-invariant weight loads, hoisted out of the recurrence.
        w_hh = [w_hh_refs[l][...] for l in range(L)]
        w_ih = [None] + [w_ih_refs[l][...] for l in range(1, L)]
        bias = [None] + [b_refs[l][...] for l in range(1, L)]

        t_base = c_idx * CH                  # global time of this chunk's step 0

        hs0 = tuple(h_ref[l] for l in range(L))
        cs0 = tuple(c_ref[l] for l in range(L))

        # ---- wavefront recurrence: layer l runs timestep t = j - l ----------
        def wave_step(j, carry):
            hs, cs = carry
            new_hs, new_cs = [], []
            for l in range(L):
                t = j - l
                if l == 0:
                    row = pl.multiple_of(jnp.minimum(t, CH - 1) * BP, BP)
                    pre = xp_ref[pl.ds(row, BP), :]          # (BP, 4H)
                    gates = pre + jnp.dot(
                        hs[0], w_hh[0], preferred_element_type=jnp.float32)
                else:
                    # Skew: hs[l-1] holds layer l-1's output at exactly step t
                    # (produced in the previous wavefront iteration).
                    gates = (
                        jnp.dot(hs[l - 1], w_ih[l],
                                preferred_element_type=jnp.float32)
                        + jnp.dot(hs[l], w_hh[l],
                                  preferred_element_type=jnp.float32)
                        + bias[l]
                    )
                i_g = jax.nn.sigmoid(gates[:, 0 * H:1 * H])
                f_g = jax.nn.sigmoid(gates[:, 1 * H:2 * H])
                g_g = jnp.tanh(gates[:, 2 * H:3 * H])
                o_g = jax.nn.sigmoid(gates[:, 3 * H:4 * H])
                c_new = f_g * cs[l] + i_g * g_g
                h_new = o_g * jnp.tanh(c_new)
                # Mask wavefront fill/drain and the zero-padded global tail.
                active = jnp.logical_and(
                    jnp.logical_and(t >= 0, t < CH), (t_base + t) < T)
                new_hs.append(jnp.where(active, h_new, hs[l]))
                new_cs.append(jnp.where(active, c_new, cs[l]))
            return tuple(new_hs), tuple(new_cs)

        hs, cs = jax.lax.fori_loop(0, total_steps, wave_step, (hs0, cs0),
                                   unroll=unroll)

        for l in range(L):
            h_ref[l] = hs[l]
            c_ref[l] = cs[l]

        # ---- fused fc + relu head on the final hidden state ------------------
        @pl.when(c_idx == pl.num_programs(0) - 1)
        def _():
            out = jnp.sum(hs[L - 1] * w_fc_ref[...], axis=-1, keepdims=True)
            out_ref[...] = jnp.maximum(out + b_fc_ref[...], 0.0)

    return kernel


# ----------------------------------------------------------------------------
# Wrapper helpers
# ----------------------------------------------------------------------------
_WEIGHT_SINGLE_BUFFER_BYTES = 1 << 20   # single-buffer weights larger than 1 MiB


def _weight_spec(shape):
    """Constant-index (loop-invariant) weight BlockSpec; single-buffer if big."""
    assert len(shape) == 2
    nbytes = 4 * shape[0] * shape[1]
    if nbytes >= _WEIGHT_SINGLE_BUFFER_BYTES:
        return pl.BlockSpec(shape, lambda c: (0, 0),
                            pipeline_mode=pl.Buffered(1))
    return pl.BlockSpec(shape, lambda c: (0, 0))


def _pick_chunk(T, BP, H, Din, budget_bytes=8 << 20, max_chunk=256):
    """Largest time chunk whose per-chunk VMEM buffers fit a fixed budget."""
    per_step = BP * 4 * H * 4 + 2 * BP * max(Din, 1) * 4   # xp + 2x x buffers
    chunk = max(1, min(max_chunk, budget_bytes // max(per_step, 1)))
    return int(max(1, min(chunk, T)))


def _vmem_limit_bytes(chunk, BP, Din, H, L):
    f32 = 4
    total = chunk * BP * 4 * H * f32                 # xp scratch
    total += 2 * chunk * BP * max(Din, 1) * f32      # double-buffered x block
    total += 2 * L * BP * H * f32                    # h / c state scratch
    for l in range(L):
        d_in = Din if l == 0 else H
        total += 2 * (d_in * 4 * H + H * 4 * H + 4 * H) * f32   # weights (2x)
    total += 2 * (H + 1) * f32 + 2 * BP * f32        # fc head + output
    return int(min(100 << 20, max(2 * total + (4 << 20), 32 << 20)))


# ----------------------------------------------------------------------------
# Forward wrapper
# ----------------------------------------------------------------------------
def lstm1_forward_impl(x, layer_params, w_fc, b_fc):
    """Equivalent of LSTM1.forward: LSTM stack -> hn[-1] -> fc -> relu."""
    B, T, Din = x.shape
    L = len(layer_params)
    H = layer_params[0][1].shape[0]

    BP = max(8, _round_up(B, 8))                 # batch padded to sublane tiles
    chunk = _pick_chunk(T, BP, H, Din)
    n_chunks = (T + chunk - 1) // chunk
    T_pad = n_chunks * chunk

    # Time-major, batch padded, flattened to (T_pad*BP, Din) so the chunk input
    # projection is a single lane/sublane-dense MXU matmul.
    x_tm = jnp.swapaxes(x, 0, 1)                 # (T, B, Din)
    x_tm = jnp.pad(x_tm, ((0, T_pad - T), (0, BP - B), (0, 0)))
    x_flat = x_tm.reshape(T_pad * BP, Din)

    w_fc_t = jnp.transpose(w_fc)                 # (1, H) for a lane-wise reduce

    in_specs = [pl.BlockSpec((chunk * BP, Din), lambda c: (c, 0))]
    operands = [x_flat]
    for (w_ih, w_hh, b) in layer_params:
        d_in = w_ih.shape[0]
        in_specs.append(_weight_spec((d_in, 4 * H)))
        in_specs.append(_weight_spec((H, 4 * H)))
        in_specs.append(_weight_spec((1, 4 * H)))
        operands.extend([w_ih, w_hh, b])
    in_specs.append(_weight_spec((1, H)))
    in_specs.append(_weight_spec((1, 1)))
    operands.extend([w_fc_t, b_fc])

    out_pad = pl.pallas_call(
        _make_fused_lstm_kernel(L, BP, H, chunk, T),
        out_shape=jax.ShapeDtypeStruct((BP, 1), jnp.float32),
        grid_spec=pltpu.PrefetchScalarGridSpec(
            num_scalar_prefetch=0,
            grid=(n_chunks,),
            in_specs=in_specs,
            out_specs=pl.BlockSpec((BP, 1), lambda c: (0, 0)),
            scratch_shapes=[
                pltpu.VMEM((chunk * BP, 4 * H), jnp.float32),  # layer-0 proj
                pltpu.VMEM((L, BP, H), jnp.float32),           # carried h state
                pltpu.VMEM((L, BP, H), jnp.float32),           # carried c state
            ],
        ),
        compiler_params=pltpu.CompilerParams(
            # Time recurrence is sequential. (On v7x a leading "parallel"
            # batch-shard grid axis would occupy both TensorCores; the demo
            # batch here is far too small for that to pay off.)
            dimension_semantics=("arbitrary",),
            vmem_limit_bytes=_vmem_limit_bytes(chunk, BP, Din, H, L),
        ),
    )(*operands)
    return out_pad[:B]


lstm1_forward = jax.jit(lstm1_forward_impl)


# ----------------------------------------------------------------------------
# Pure-JAX reference (sanity check)
# ----------------------------------------------------------------------------
def lstm1_reference(x, layer_params, w_fc, b_fc):
    B = x.shape[0]
    inp = x
    h = None
    for (w_ih, w_hh, b) in layer_params:
        H = w_hh.shape[0]

        def step(carry, x_t, w_ih=w_ih, w_hh=w_hh, b=b, H=H):
            h, c = carry
            gates = x_t @ w_ih + h @ w_hh + b[0]
            i = jax.nn.sigmoid(gates[:, 0 * H:1 * H])
            f = jax.nn.sigmoid(gates[:, 1 * H:2 * H])
            g = jnp.tanh(gates[:, 2 * H:3 * H])
            o = jax.nn.sigmoid(gates[:, 3 * H:4 * H])
            c = f * c + i * g
            h = o * jnp.tanh(c)
            return (h, c), h

        init = (jnp.zeros((B, H), jnp.float32), jnp.zeros((B, H), jnp.float32))
        (h, _), ys = jax.lax.scan(step, init, jnp.swapaxes(inp, 0, 1))
        inp = jnp.swapaxes(ys, 0, 1)
    return jnp.maximum(h @ w_fc + b_fc, 0.0)


# ----------------------------------------------------------------------------
# Parameter construction (deterministic, PyTorch-style uniform init)
# ----------------------------------------------------------------------------
def make_params(key, input_size, hidden_size, num_layers):
    bound = 1.0 / jnp.sqrt(hidden_size)
    layer_params = []
    for layer in range(num_layers):
        d_in = input_size if layer == 0 else hidden_size
        key, k1, k2, k3, k4 = jax.random.split(key, 5)
        # stored pre-transposed: (in, 4H), gate order [i, f, g, o]
        w_ih = jax.random.uniform(k1, (d_in, 4 * hidden_size), jnp.float32,
                                  -bound, bound)
        w_hh = jax.random.uniform(k2, (hidden_size, 4 * hidden_size),
                                  jnp.float32, -bound, bound)
        b_ih = jax.random.uniform(k3, (4 * hidden_size,), jnp.float32,
                                  -bound, bound)
        b_hh = jax.random.uniform(k4, (4 * hidden_size,), jnp.float32,
                                  -bound, bound)
        layer_params.append((w_ih, w_hh, (b_ih + b_hh)[None, :]))
    key, k5, k6 = jax.random.split(key, 3)
    fc_bound = 1.0 / jnp.sqrt(hidden_size)
    w_fc = jax.random.uniform(k5, (hidden_size, 1), jnp.float32,
                              -fc_bound, fc_bound)
    b_fc = jax.random.uniform(k6, (1, 1), jnp.float32, -fc_bound, fc_bound)
    return layer_params, w_fc, b_fc


if __name__ == "__main__":
    # Shapes consistent with LSTM1(input_size=4, hidden_size=32, num_layers=2)
    batch, seq, input_size, hidden_size, num_layers = 2, 8, 4, 32, 2

    key = jax.random.PRNGKey(0)
    key, kx = jax.random.split(key)
    x = jax.random.normal(kx, (batch, seq, input_size), jnp.float32)

    layer_params, w_fc, b_fc = make_params(key, input_size, hidden_size,
                                           num_layers)

    out = lstm1_forward(x, tuple(layer_params), w_fc, b_fc)
    out = jax.block_until_ready(out)

    ref = lstm1_reference(x, layer_params, w_fc, b_fc)
    assert out.shape == (batch, 1), out.shape
    assert jnp.allclose(out, ref, atol=1e-4, rtol=1e-4), (out, ref)

    print("KERNEL_OK")
</pallas_src>

<mosaic_0001>
module attributes {stable_mosaic.version = 11 : i64} {
  func.func @kernel(%arg0: i32, %arg1: memref<64x4xf32, #tpu.memory_space<vmem>>, %arg2: memref<4x128xf32, #tpu.memory_space<vmem>>, %arg3: memref<32x128xf32, #tpu.memory_space<vmem>>, %arg4: memref<1x128xf32, #tpu.memory_space<vmem>>, %arg5: memref<32x128xf32, #tpu.memory_space<vmem>>, %arg6: memref<32x128xf32, #tpu.memory_space<vmem>>, %arg7: memref<1x128xf32, #tpu.memory_space<vmem>>, %arg8: memref<1x32xf32, #tpu.memory_space<vmem>>, %arg9: memref<1x1xf32, #tpu.memory_space<vmem>>, %arg10: memref<8x1xf32, #tpu.memory_space<vmem>>, %arg11: memref<64x128xf32, #tpu.memory_space<vmem>>, %arg12: memref<2x8x32xf32, #tpu.memory_space<vmem>>, %arg13: memref<2x8x32xf32, #tpu.memory_space<vmem>>) attributes {dimension_semantics = [#tpu.dimension_semantics<arbitrary>], iteration_bounds = array<i64: 1>, scalar_prefetch = 0 : i64, scratch_operands = 3 : i64, tpu.core_type = #tpu.core_type<tc>, window_params = [{transform_indices = @transform_0, window_bounds = array<i64: 64, 4>}, {pipeline_mode = #tpu.pipeline_mode<synchronous>, transform_indices = @transform_1, window_bounds = array<i64: 4, 128>}, {pipeline_mode = #tpu.pipeline_mode<synchronous>, transform_indices = @transform_2, window_bounds = array<i64: 32, 128>}, {pipeline_mode = #tpu.pipeline_mode<synchronous>, transform_indices = @transform_3, window_bounds = array<i64: 1, 128>}, {pipeline_mode = #tpu.pipeline_mode<synchronous>, transform_indices = @transform_4, window_bounds = array<i64: 32, 128>}, {pipeline_mode = #tpu.pipeline_mode<synchronous>, transform_indices = @transform_5, window_bounds = array<i64: 32, 128>}, {pipeline_mode = #tpu.pipeline_mode<synchronous>, transform_indices = @transform_6, window_bounds = array<i64: 1, 128>}, {pipeline_mode = #tpu.pipeline_mode<synchronous>, transform_indices = @transform_7, window_bounds = array<i64: 1, 32>}, {pipeline_mode = #tpu.pipeline_mode<synchronous>, transform_indices = @transform_8, window_bounds = array<i64: 1, 1>}, {pipeline_mode = #tpu.pipeline_mode<synchronous>, transform_indices = @transform_9, window_bounds = array<i64: 8, 1>}]} {
    %c0_i32 = arith.constant 0 : i32
    %0 = arith.cmpi eq, %arg0, %c0_i32 : i32
    %1 = arith.extui %0 : i1 to i32
    %c0_i32_0 = arith.constant 0 : i32
    %2 = arith.cmpi ne, %1, %c0_i32_0 : i32
    scf.if %2 {
      %cst_223 = arith.constant 0.000000e+00 : f32
      %758 = vector.broadcast %cst_223 : f32 to vector<2x8x32xf32>
      %c0_224 = arith.constant 0 : index
      %c0_225 = arith.constant 0 : index
      %c0_226 = arith.constant 0 : index
      %759 = vector.load %arg12[%c0_224, %c0_225, %c0_226] : memref<2x8x32xf32, #tpu.memory_space<vmem>>, vector<2x8x32xf32>
      tpu.vector_store %arg12[%c0_224, %c0_225, %c0_226], %758 {strides = array<i32>} : memref<2x8x32xf32, #tpu.memory_space<vmem>>, vector<2x8x32xf32>,
      %cst_227 = arith.constant 0.000000e+00 : f32
      %760 = vector.broadcast %cst_227 : f32 to vector<2x8x32xf32>
      %c0_228 = arith.constant 0 : index
      %c0_229 = arith.constant 0 : index
      %c0_230 = arith.constant 0 : index
      %761 = vector.load %arg13[%c0_228, %c0_229, %c0_230] : memref<2x8x32xf32, #tpu.memory_space<vmem>>, vector<2x8x32xf32>
      tpu.vector_store %arg13[%c0_228, %c0_229, %c0_230], %760 {strides = array<i32>} : memref<2x8x32xf32, #tpu.memory_space<vmem>>, vector<2x8x32xf32>,
    } else {
    }
    %c0 = arith.constant 0 : index
    %c0_1 = arith.constant 0 : index
    %3 = vector.load %arg1[%c0, %c0_1] : memref<64x4xf32, #tpu.memory_space<vmem>>, vector<64x4xf32>
    %c0_2 = arith.constant 0 : index
    %c0_3 = arith.constant 0 : index
    %4 = vector.load %arg2[%c0_2, %c0_3] : memref<4x128xf32, #tpu.memory_space<vmem>>, vector<4x128xf32>
    %cst = arith.constant dense<0.000000e+00> : vector<64x128xf32>
    %5 = tpu.matmul %3, %4, %cst {dimension_numbers = #tpu.dot_dimension_numbers<[1], [0], [0], [1], [0, 0, 1, 1], [], []>} : vector<64x4xf32>, vector<4x128xf32>, vector<64x128xf32> -> vector<64x128xf32>
    %c0_4 = arith.constant 0 : index
    %c0_5 = arith.constant 0 : index
    %6 = vector.load %arg4[%c0_4, %c0_5] : memref<1x128xf32, #tpu.memory_space<vmem>>, vector<1x128xf32>
    %7 = vector.broadcast %6 : vector<1x128xf32> to vector<64x128xf32>
    %8 = arith.addf %5, %7 : vector<64x128xf32>
    %c0_6 = arith.constant 0 : index
    %c0_7 = arith.constant 0 : index
    %9 = vector.load %arg11[%c0_6, %c0_7] : memref<64x128xf32, #tpu.memory_space<vmem>>, vector<64x128xf32>
    tpu.vector_store %arg11[%c0_6, %c0_7], %8 {strides = array<i32>} : memref<64x128xf32, #tpu.memory_space<vmem>>, vector<64x128xf32>,
    %c0_8 = arith.constant 0 : index
    %c0_9 = arith.constant 0 : index
    %10 = vector.load %arg3[%c0_8, %c0_9] : memref<32x128xf32, #tpu.memory_space<vmem>>, vector<32x128xf32>
    %c0_10 = arith.constant 0 : index
    %c0_11 = arith.constant 0 : index
    %11 = vector.load %arg6[%c0_10, %c0_11] : memref<32x128xf32, #tpu.memory_space<vmem>>, vector<32x128xf32>
    %c0_12 = arith.constant 0 : index
    %c0_13 = arith.constant 0 : index
    %12 = vector.load %arg5[%c0_12, %c0_13] : memref<32x128xf32, #tpu.memory_space<vmem>>, vector<32x128xf32>
    %c0_14 = arith.constant 0 : index
    %c0_15 = arith.constant 0 : index
    %13 = vector.load %arg7[%c0_14, %c0_15] : memref<1x128xf32, #tpu.memory_space<vmem>>, vector<1x128xf32>
    %c8_i32 = arith.constant 8 : i32
    %14 = arith.muli %arg0, %c8_i32 : i32
    %c0_16 = arith.constant 0 : index
    %c0_17 = arith.constant 0 : index
    %c0_18 = arith.constant 0 : index
    %15 = vector.load %arg12[%c0_16, %c0_17, %c0_18] : memref<2x8x32xf32, #tpu.memory_space<vmem>>, vector<1x8x32xf32>
    %16 = vector.shape_cast %15 : vector<1x8x32xf32> to vector<8x32xf32>
    %c1 = arith.constant 1 : index
    %c0_19 = arith.constant 0 : index
    %c0_20 = arith.constant 0 : index
    %17 = vector.load %arg12[%c1, %c0_19, %c0_20] : memref<2x8x32xf32, #tpu.memory_space<vmem>>, vector<1x8x32xf32>
    %18 = vector.shape_cast %17 : vector<1x8x32xf32> to vector<8x32xf32>
    %c0_21 = arith.constant 0 : index
    %c0_22 = arith.constant 0 : index
    %c0_23 = arith.constant 0 : index
    %19 = vector.load %arg13[%c0_21, %c0_22, %c0_23] : memref<2x8x32xf32, #tpu.memory_space<vmem>>, vector<1x8x32xf32>
    %20 = vector.shape_cast %19 : vector<1x8x32xf32> to vector<8x32xf32>
    %c1_24 = arith.constant 1 : index
    %c0_25 = arith.constant 0 : index
    %c0_26 = arith.constant 0 : index
    %21 = vector.load %arg13[%c1_24, %c0_25, %c0_26] : memref<2x8x32xf32, #tpu.memory_space<vmem>>, vector<1x8x32xf32>
    %22 = vector.shape_cast %21 : vector<1x8x32xf32> to vector<8x32xf32>
    %c0_i32_27 = arith.constant 0 : i32
    %c0_i32_28 = arith.constant 0 : i32
    %23 = arith.subi %c0_i32_27, %c0_i32_28 : i32
    %c7_i32 = arith.constant 7 : i32
    %24 = arith.minsi %23, %c7_i32 : i32
    %c8_i32_29 = arith.constant 8 : i32
    %25 = arith.muli %24, %c8_i32_29 : i32
    %26 = tpu.assume_multiple %25, 8 : i32
    %27 = arith.index_cast %26 : i32 to index
    %c0_30 = arith.constant 0 : index
    %28 = vector.load %arg11[%27, %c0_30] : memref<64x128xf32, #tpu.memory_space<vmem>>, vector<8x128xf32>
    %cst_31 = arith.constant dense<0.000000e+00> : vector<8x128xf32>
    %29 = tpu.matmul %16, %10, %cst_31 {dimension_numbers = #tpu.dot_dimension_numbers<[1], [0], [0], [1], [0, 0, 1, 1], [], []>} : vector<8x32xf32>, vector<32x128xf32>, vector<8x128xf32> -> vector<8x128xf32>
    %30 = arith.addf %28, %29 : vector<8x128xf32>
    %31 = vector.extract_strided_slice %30 {offsets = [0, 0], sizes = [8, 32], strides = [1, 1]} : vector<8x128xf32> to vector<8x32xf32>
    %32 = arith.negf %31 : vector<8x32xf32>
    %33 = math.exp %32 : vector<8x32xf32>
    %cst_32 = arith.constant 1.000000e+00 : f32
    %34 = vector.broadcast %cst_32 : f32 to vector<8x32xf32>
    %35 = arith.addf %34, %33 : vector<8x32xf32>
    %36 = arith.divf %34, %35 : vector<8x32xf32>
    %37 = vector.extract_strided_slice %30 {offsets = [0, 32], sizes = [8, 32], strides = [1, 1]} : vector<8x128xf32> to vector<8x32xf32>
    %38 = arith.negf %37 : vector<8x32xf32>
    %39 = math.exp %38 : vector<8x32xf32>
    %cst_33 = arith.constant 1.000000e+00 : f32
    %40 = vector.broadcast %cst_33 : f32 to vector<8x32xf32>
    %41 = arith.addf %40, %39 : vector<8x32xf32>
    %42 = arith.divf %40, %41 : vector<8x32xf32>
    %43 = vector.extract_strided_slice %30 {offsets = [0, 64], sizes = [8, 32], strides = [1, 1]} : vector<8x128xf32> to vector<8x32xf32>
    %44 = math.tanh %43 : vector<8x32xf32>
    %45 = vector.extract_strided_slice %30 {offsets = [0, 96], sizes = [8, 32], strides = [1, 1]} : vector<8x128xf32> to vector<8x32xf32>
    %46 = arith.negf %45 : vector<8x32xf32>
    %47 = math.exp %46 : vector<8x32xf32>
    %cst_34 = arith.constant 1.000000e+00 : f32
    %48 = vector.broadcast %cst_34 : f32 to vector<8x32xf32>
    %49 = arith.addf %48, %47 : vector<8x32xf32>
    %50 = arith.divf %48, %49 : vector<8x32xf32>
    %51 = arith.mulf %42, %20 : vector<8x32xf32>
    %52 = arith.mulf %36, %44 : vector<8x32xf32>
    %53 = arith.addf %51, %52 : vector<8x32xf32>
    %54 = math.tanh %53 : vector<8x32xf32>
    %55 = arith.mulf %50, %54 : vector<8x32xf32>
    %c0_i32_35 = arith.constant 0 : i32
    %56 = arith.cmpi sge, %23, %c0_i32_35 : i32
    %c8_i32_36 = arith.constant 8 : i32
    %57 = arith.cmpi slt, %23, %c8_i32_36 : i32
    %58 = arith.andi %56, %57 : i1
    %59 = arith.addi %14, %23 : i32
    %c8_i32_37 = arith.constant 8 : i32
    %60 = arith.cmpi slt, %59, %c8_i32_37 : i32
    %61 = arith.andi %58, %60 : i1
    %62 = arith.select %61, %55, %16 : vector<8x32xf32>
    %63 = arith.select %61, %53, %20 : vector<8x32xf32>
    %c1_i32 = arith.constant 1 : i32
    %64 = arith.subi %c0_i32_27, %c1_i32 : i32
    %cst_38 = arith.constant dense<0.000000e+00> : vector<8x128xf32>
    %65 = tpu.matmul %16, %12, %cst_38 {dimension_numbers = #tpu.dot_dimension_numbers<[1], [0], [0], [1], [0, 0, 1, 1], [], []>} : vector<8x32xf32>, vector<32x128xf32>, vector<8x128xf32> -> vector<8x128xf32>
    %cst_39 = arith.constant dense<0.000000e+00> : vector<8x128xf32>
    %66 = tpu.matmul %18, %11, %cst_39 {dimension_numbers = #tpu.dot_dimension_numbers<[1], [0], [0], [1], [0, 0, 1, 1], [], []>} : vector<8x32xf32>, vector<32x128xf32>, vector<8x128xf32> -> vector<8x128xf32>
    %67 = arith.addf %65, %66 : vector<8x128xf32>
    %68 = vector.broadcast %13 : vector<1x128xf32> to vector<8x128xf32>
    %69 = arith.addf %67, %68 : vector<8x128xf32>
    %70 = vector.extract_strided_slice %69 {offsets = [0, 0], sizes = [8, 32], strides = [1, 1]} : vector<8x128xf32> to vector<8x32xf32>
    %71 = arith.negf %70 : vector<8x32xf32>
    %72 = math.exp %71 : vector<8x32xf32>
    %cst_40 = arith.constant 1.000000e+00 : f32
    %73 = vector.broadcast %cst_40 : f32 to vector<8x32xf32>
    %74 = arith.addf %73, %72 : vector<8x32xf32>
    %75 = arith.divf %73, %74 : vector<8x32xf32>
    %76 = vector.extract_strided_slice %69 {offsets = [0, 32], sizes = [8, 32], strides = [1, 1]} : vector<8x128xf32> to vector<8x32xf32>
    %77 = arith.negf %76 : vector<8x32xf32>
    %78 = math.exp %77 : vector<8x32xf32>
    %cst_41 = arith.constant 1.000000e+00 : f32
    %79 = vector.broadcast %cst_41 : f32 to vector<8x32xf32>
    %80 = arith.addf %79, %78 : vector<8x32xf32>
    %81 = arith.divf %79, %80 : vector<8x32xf32>
    %82 = vector.extract_strided_slice %69 {offsets = [0, 64], sizes = [8, 32], strides = [1, 1]} : vector<8x128xf32> to vector<8x32xf32>
    %83 = math.tanh %82 : vector<8x32xf32>
    %84 = vector.extract_strided_slice %69 {offsets = [0, 96], sizes = [8, 32], strides = [1, 1]} : vector<8x128xf32> to vector<8x32xf32>
    %85 = arith.negf %84 : vector<8x32xf32>
    %86 = math.exp %85 : vector<8x32xf32>
    %cst_42 = arith.constant 1.000000e+00 : f32
    %87 = vector.broadcast %cst_42 : f32 to vector<8x32xf32>
    %88 = arith.addf %87, %86 : vector<8x32xf32>
    %89 = arith.divf %87, %88 : vector<8x32xf32>
    %90 = arith.mulf %81, %22 : vector<8x32xf32>
    %91 = arith.mulf %75, %83 : vector<8x32xf32>
    %92 = arith.addf %90, %91 : vector<8x32xf32>
    %93 = math.tanh %92 : vector<8x32xf32>
    %94 = arith.mulf %89, %93 : vector<8x32xf32>
    %c0_i32_43 = arith.constant 0 : i32
    %95 = arith.cmpi sge, %64, %c0_i32_43 : i32
    %c8_i32_44 = arith.constant 8 : i32
    %96 = arith.cmpi slt, %64, %c8_i32_44 : i32
    %97 = arith.andi %95, %96 : i1
    %98 = arith.addi %14, %64 : i32
    %c8_i32_45 = arith.constant 8 : i32
    %99 = arith.cmpi slt, %98, %c8_i32_45 : i32
    %100 = arith.andi %97, %99 : i1
    %101 = arith.select %100, %94, %18 : vector<8x32xf32>
    %102 = arith.select %100, %92, %22 : vector<8x32xf32>
    %c1_i32_46 = arith.constant 1 : i32
    %c0_i32_47 = arith.constant 0 : i32
    %103 = arith.subi %c1_i32_46, %c0_i32_47 : i32
    %c7_i32_48 = arith.constant 7 : i32
    %104 = arith.minsi %103, %c7_i32_48 : i32
    %c8_i32_49 = arith.constant 8 : i32
    %105 = arith.muli %104, %c8_i32_49 : i32
    %106 = tpu.assume_multiple %105, 8 : i32
    %107 = arith.index_cast %106 : i32 to index
    %c0_50 = arith.constant 0 : index
    %108 = vector.load %arg11[%107, %c0_50] : memref<64x128xf32, #tpu.memory_space<vmem>>, vector<8x128xf32>
    %cst_51 = arith.constant dense<0.000000e+00> : vector<8x128xf32>
    %109 = tpu.matmul %62, %10, %cst_51 {dimension_numbers = #tpu.dot_dimension_numbers<[1], [0], [0], [1], [0, 0, 1, 1], [], []>} : vector<8x32xf32>, vector<32x128xf32>, vector<8x128xf32> -> vector<8x128xf32>
    %110 = arith.addf %108, %109 : vector<8x128xf32>
    %111 = vector.extract_strided_slice %110 {offsets = [0, 0], sizes = [8, 32], strides = [1, 1]} : vector<8x128xf32> to vector<8x32xf32>
    %112 = arith.negf %111 : vector<8x32xf32>
    %113 = math.exp %112 : vector<8x32xf32>
    %cst_52 = arith.constant 1.000000e+00 : f32
    %114 = vector.broadcast %cst_52 : f32 to vector<8x32xf32>
    %115 = arith.addf %114, %113 : vector<8x32xf32>
    %116 = arith.divf %114, %115 : vector<8x32xf32>
    %117 = vector.extract_strided_slice %110 {offsets = [0, 32], sizes = [8, 32], strides = [1, 1]} : vector<8x128xf32> to vector<8x32xf32>
    %118 = arith.negf %117 : vector<8x32xf32>
    %119 = math.exp %118 : vector<8x32xf32>
    %cst_53 = arith.constant 1.000000e+00 : f32
    %120 = vector.broadcast %cst_53 : f32 to vector<8x32xf32>
    %121 = arith.addf %120, %119 : vector<8x32xf32>
    %122 = arith.divf %120, %121 : vector<8x32xf32>
    %123 = vector.extract_strided_slice %110 {offsets = [0, 64], sizes = [8, 32], strides = [1, 1]} : vector<8x128xf32> to vector<8x32xf32>
    %124 = math.tanh %123 : vector<8x32xf32>
    %125 = vector.extract_strided_slice %110 {offsets = [0, 96], sizes = [8, 32], strides = [1, 1]} : vector<8x128xf32> to vector<8x32xf32>
    %126 = arith.negf %125 : vector<8x32xf32>
    %127 = math.exp %126 : vector<8x32xf32>
    %cst_54 = arith.constant 1.000000e+00 : f32
    %128 = vector.broadcast %cst_54 : f32 to vector<8x32xf32>
    %129 = arith.addf %128, %127 : vector<8x32xf32>
    %130 = arith.divf %128, %129 : vector<8x32xf32>
    %131 = arith.mulf %122, %63 : vector<8x32xf32>
    %132 = arith.mulf %116, %124 : vector<8x32xf32>
    %133 = arith.addf %131, %132 : vector<8x32xf32>
    %134 = math.tanh %133 : vector<8x32xf32>
    %135 = arith.mulf %130, %134 : vector<8x32xf32>
    %c0_i32_55 = arith.constant 0 : i32
    %136 = arith.cmpi sge, %103, %c0_i32_55 : i32
    %c8_i32_56 = arith.constant 8 : i32
    %137 = arith.cmpi slt, %103, %c8_i32_56 : i32
    %138 = arith.andi %136, %137 : i1
    %139 = arith.addi %14, %103 : i32
    %c8_i32_57 = arith.constant 8 : i32
    %140 = arith.cmpi slt, %139, %c8_i32_57 : i32
    %141 = arith.andi %138, %140 : i1
    %142 = arith.select %141, %135, %62 : vector<8x32xf32>
    %143 = arith.select %141, %133, %63 : vector<8x32xf32>
    %c1_i32_58 = arith.constant 1 : i32
    %144 = arith.subi %c1_i32_46, %c1_i32_58 : i32
    %cst_59 = arith.constant dense<0.000000e+00> : vector<8x128xf32>
    %145 = tpu.matmul %62, %12, %cst_59 {dimension_numbers = #tpu.dot_dimension_numbers<[1], [0], [0], [1], [0, 0, 1, 1], [], []>} : vector<8x32xf32>, vector<32x128xf32>, vector<8x128xf32> -> vector<8x128xf32>
    %cst_60 = arith.constant dense<0.000000e+00> : vector<8x128xf32>
    %146 = tpu.matmul %101, %11, %cst_60 {dimension_numbers = #tpu.dot_dimension_numbers<[1], [0], [0], [1], [0, 0, 1, 1], [], []>} : vector<8x32xf32>, vector<32x128xf32>, vector<8x128xf32> -> vector<8x128xf32>
    %147 = arith.addf %145, %146 : vector<8x128xf32>
    %148 = vector.broadcast %13 : vector<1x128xf32> to vector<8x128xf32>
    %149 = arith.addf %147, %148 : vector<8x128xf32>
    %150 = vector.extract_strided_slice %149 {offsets = [0, 0], sizes = [8, 32], strides = [1, 1]} : vector<8x128xf32> to vector<8x32xf32>
    %151 = arith.negf %150 : vector<8x32xf32>
    %152 = math.exp %151 : vector<8x32xf32>
    %cst_61 = arith.constant 1.000000e+00 : f32
    %153 = vector.broadcast %cst_61 : f32 to vector<8x32xf32>
    %154 = arith.addf %153, %152 : vector<8x32xf32>
    %155 = arith.divf %153, %154 : vector<8x32xf32>
    %156 = vector.extract_strided_slice %149 {offsets = [0, 32], sizes = [8, 32], strides = [1, 1]} : vector<8x128xf32> to vector<8x32xf32>
    %157 = arith.negf %156 : vector<8x32xf32>
    %158 = math.exp %157 : vector<8x32xf32>
    %cst_62 = arith.constant 1.000000e+00 : f32
    %159 = vector.broadcast %cst_62 : f32 to vector<8x32xf32>
    %160 = arith.addf %159, %158 : vector<8x32xf32>
    %161 = arith.divf %159, %160 : vector<8x32xf32>
    %162 = vector.extract_strided_slice %149 {offsets = [0, 64], sizes = [8, 32], strides = [1, 1]} : vector<8x128xf32> to vector<8x32xf32>
    %163 = math.tanh %162 : vector<8x32xf32>
    %164 = vector.extract_strided_slice %149 {offsets = [0, 96], sizes = [8, 32], strides = [1, 1]} : vector<8x128xf32> to vector<8x32xf32>
    %165 = arith.negf %164 : vector<8x32xf32>
    %166 = math.exp %165 : vector<8x32xf32>
    %cst_63 = arith.constant 1.000000e+00 : f32
    %167 = vector.broadcast %cst_63 : f32 to vector<8x32xf32>
    %168 = arith.addf %167, %166 : vector<8x32xf32>
    %169 = arith.divf %167, %168 : vector<8x32xf32>
    %170 = arith.mulf %161, %102 : vector<8x32xf32>
    %171 = arith.mulf %155, %163 : vector<8x32xf32>
    %172 = arith.addf %170, %171 : vector<8x32xf32>
    %173 = math.tanh %172 : vector<8x32xf32>
    %174 = arith.mulf %169, %173 : vector<8x32xf32>
    %c0_i32_64 = arith.constant 0 : i32
    %175 = arith.cmpi sge, %144, %c0_i32_64 : i32
    %c8_i32_65 = arith.constant 8 : i32
    %176 = arith.cmpi slt, %144, %c8_i32_65 : i32
    %177 = arith.andi %175, %176 : i1
    %178 = arith.addi %14, %144 : i32
    %c8_i32_66 = arith.constant 8 : i32
    %179 = arith.cmpi slt, %178, %c8_i32_66 : i32
    %180 = arith.andi %177, %179 : i1
    %181 = arith.select %180, %174, %101 : vector<8x32xf32>
    %182 = arith.select %180, %172, %102 : vector<8x32xf32>
    %c2_i32 = arith.constant 2 : i32
    %c0_i32_67 = arith.constant 0 : i32
    %183 = arith.subi %c2_i32, %c0_i32_67 : i32
    %c7_i32_68 = arith.constant 7 : i32
    %184 = arith.minsi %183, %c7_i32_68 : i32
    %c8_i32_69 = arith.constant 8 : i32
    %185 = arith.muli %184, %c8_i32_69 : i32
    %186 = tpu.assume_multiple %185, 8 : i32
    %187 = arith.index_cast %186 : i32 to index
    %c0_70 = arith.constant 0 : index
    %188 = vector.load %arg11[%187, %c0_70] : memref<64x128xf32, #tpu.memory_space<vmem>>, vector<8x128xf32>
    %cst_71 = arith.constant dense<0.000000e+00> : vector<8x128xf32>
    %189 = tpu.matmul %142, %10, %cst_71 {dimension_numbers = #tpu.dot_dimension_numbers<[1], [0], [0], [1], [0, 0, 1, 1], [], []>} : vector<8x32xf32>, vector<32x128xf32>, vector<8x128xf32> -> vector<8x128xf32>
    %190 = arith.addf %188, %189 : vector<8x128xf32>
    %191 = vector.extract_strided_slice %190 {offsets = [0, 0], sizes = [8, 32], strides = [1, 1]} : vector<8x128xf32> to vector<8x32xf32>
    %192 = arith.negf %191 : vector<8x32xf32>
    %193 = math.exp %192 : vector<8x32xf32>
    %cst_72 = arith.constant 1.000000e+00 : f32
    %194 = vector.broadcast %cst_72 : f32 to vector<8x32xf32>
    %195 = arith.addf %194, %193 : vector<8x32xf32>
    %196 = arith.divf %194, %195 : vector<8x32xf32>
    %197 = vector.extract_strided_slice %190 {offsets = [0, 32], sizes = [8, 32], strides = [1, 1]} : vector<8x128xf32> to vector<8x32xf32>
    %198 = arith.negf %197 : vector<8x32xf32>
    %199 = math.exp %198 : vector<8x32xf32>
    %cst_73 = arith.constant 1.000000e+00 : f32
    %200 = vector.broadcast %cst_73 : f32 to vector<8x32xf32>
    %201 = arith.addf %200, %199 : vector<8x32xf32>
    %202 = arith.divf %200, %201 : vector<8x32xf32>
    %203 = vector.extract_strided_slice %190 {offsets = [0, 64], sizes = [8, 32], strides = [1, 1]} : vector<8x128xf32> to vector<8x32xf32>
    %204 = math.tanh %203 : vector<8x32xf32>
    %205 = vector.extract_strided_slice %190 {offsets = [0, 96], sizes = [8, 32], strides = [1, 1]} : vector<8x128xf32> to vector<8x32xf32>
    %206 = arith.negf %205 : vector<8x32xf32>
    %207 = math.exp %206 : vector<8x32xf32>
    %cst_74 = arith.constant 1.000000e+00 : f32
    %208 = vector.broadcast %cst_74 : f32 to vector<8x32xf32>
    %209 = arith.addf %208, %207 : vector<8x32xf32>
    %210 = arith.divf %208, %209 : vector<8x32xf32>
    %211 = arith.mulf %202, %143 : vector<8x32xf32>
    %212 = arith.mulf %196, %204 : vector<8x32xf32>
    %213 = arith.addf %211, %212 : vector<8x32xf32>
    %214 = math.tanh %213 : vector<8x32xf32>
    %215 = arith.mulf %210, %214 : vector<8x32xf32>
    %c0_i32_75 = arith.constant 0 : i32
    %216 = arith.cmpi sge, %183, %c0_i32_75 : i32
    %c8_i32_76 = arith.constant 8 : i32
    %217 = arith.cmpi slt, %183, %c8_i32_76 : i32
    %218 = arith.andi %216, %217 : i1
    %219 = arith.addi %14, %183 : i32
    %c8_i32_77 = arith.constant 8 : i32
    %220 = arith.cmpi slt, %219, %c8_i32_77 : i32
    %221 = arith.andi %218, %220 : i1
    %222 = arith.select %221, %215, %142 : vector<8x32xf32>
    %223 = arith.select %221, %213, %143 : vector<8x32xf32>
    %c1_i32_78 = arith.constant 1 : i32
    %224 = arith.subi %c2_i32, %c1_i32_78 : i32
    %cst_79 = arith.constant dense<0.000000e+00> : vector<8x128xf32>
    %225 = tpu.matmul %142, %12, %cst_79 {dimension_numbers = #tpu.dot_dimension_numbers<[1], [0], [0], [1], [0, 0, 1, 1], [], []>} : vector<8x32xf32>, vector<32x128xf32>, vector<8x128xf32> -> vector<8x128xf32>
    %cst_80 = arith.constant dense<0.000000e+00> : vector<8x128xf32>
    %226 = tpu.matmul %181, %11, %cst_80 {dimension_numbers = #tpu.dot_dimension_numbers<[1], [0], [0], [1], [0, 0, 1, 1], [], []>} : vector<8x32xf32>, vector<32x128xf32>, vector<8x128xf32> -> vector<8x128xf32>
    %227 = arith.addf %225, %226 : vector<8x128xf32>
    %228 = vector.broadcast %13 : vector<1x128xf32> to vector<8x128xf32>
    %229 = arith.addf %227, %228 : vector<8x128xf32>
    %230 = vector.extract_strided_slice %229 {offsets = [0, 0], sizes = [8, 32], strides = [1, 1]} : vector<8x128xf32> to vector<8x32xf32>
    %231 = arith.negf %230 : vector<8x32xf32>
    %232 = math.exp %231 : vector<8x32xf32>
    %cst_81 = arith.constant 1.000000e+00 : f32
    %233 = vector.broadcast %cst_81 : f32 to vector<8x32xf32>
    %234 = arith.addf %233, %232 : vector<8x32xf32>
    %235 = arith.divf %233, %234 : vector<8x32xf32>
    %236 = vector.extract_strided_slice %229 {offsets = [0, 32], sizes = [8, 32], strides = [1, 1]} : vector<8x128xf32> to vector<8x32xf32>
    %237 = arith.negf %236 : vector<8x32xf32>
    %238 = math.exp %237 : vector<8x32xf32>
    %cst_82 = arith.constant 1.000000e+00 : f32
    %239 = vector.broadcast %cst_82 : f32 to vector<8x32xf32>
    %240 = arith.addf %239, %238 : vector<8x32xf32>
    %241 = arith.divf %239, %240 : vector<8x32xf32>
    %242 = vector.extract_strided_slice %229 {offsets = [0, 64], sizes = [8, 32], strides = [1, 1]} : vector<8x128xf32> to vector<8x32xf32>
    %243 = math.tanh %242 : vector<8x32xf32>
    %244 = vector.extract_strided_slice %229 {offsets = [0, 96], sizes = [8, 32], strides = [1, 1]} : vector<8x128xf32> to vector<8x32xf32>
    %245 = arith.negf %244 : vector<8x32xf32>
    %246 = math.exp %245 : vector<8x32xf32>
    %cst_83 = arith.constant 1.000000e+00 : f32
    %247 = vector.broadcast %cst_83 : f32 to vector<8x32xf32>
    %248 = arith.addf %247, %246 : vector<8x32xf32>
    %249 = arith.divf %247, %248 : vector<8x32xf32>
    %250 = arith.mulf %241, %182 : vector<8x32xf32>
    %251 = arith.mulf %235, %243 : vector<8x32xf32>
    %252 = arith.addf %250, %251 : vector<8x32xf32>
    %253 = math.tanh %252 : vector<8x32xf32>
    %254 = arith.mulf %249, %253 : vector<8x32xf32>
    %c0_i32_84 = arith.constant 0 : i32
    %255 = arith.cmpi sge, %224, %c0_i32_84 : i32
    %c8_i32_85 = arith.constant 8 : i32
    %256 = arith.cmpi slt, %224, %c8_i32_85 : i32
    %257 = arith.andi %255, %256 : i1
    %258 = arith.addi %14, %224 : i32
    %c8_i32_86 = arith.constant 8 : i32
    %259 = arith.cmpi slt, %258, %c8_i32_86 : i32
    %260 = arith.andi %257, %259 : i1
    %261 = arith.select %260, %254, %181 : vector<8x32xf32>
    %262 = arith.select %260, %252, %182 : vector<8x32xf32>
    %c3_i32 = arith.constant 3 : i32
    %c0_i32_87 = arith.constant 0 : i32
    %263 = arith.subi %c3_i32, %c0_i32_87 : i32
    %c7_i32_88 = arith.constant 7 : i32
    %264 = arith.minsi %263, %c7_i32_88 : i32
    %c8_i32_89 = arith.constant 8 : i32
    %265 = arith.muli %264, %c8_i32_89 : i32
    %266 = tpu.assume_multiple %265, 8 : i32
    %267 = arith.index_cast %266 : i32 to index
    %c0_90 = arith.constant 0 : index
    %268 = vector.load %arg11[%267, %c0_90] : memref<64x128xf32, #tpu.memory_space<vmem>>, vector<8x128xf32>
    %cst_91 = arith.constant dense<0.000000e+00> : vector<8x128xf32>
    %269 = tpu.matmul %222, %10, %cst_91 {dimension_numbers = #tpu.dot_dimension_numbers<[1], [0], [0], [1], [0, 0, 1, 1], [], []>} : vector<8x32xf32>, vector<32x128xf32>, vector<8x128xf32> -> vector<8x128xf32>
    %270 = arith.addf %268, %269 : vector<8x128xf32>
    %271 = vector.extract_strided_slice %270 {offsets = [0, 0], sizes = [8, 32], strides = [1, 1]} : vector<8x128xf32> to vector<8x32xf32>
    %272 = arith.negf %271 : vector<8x32xf32>
    %273 = math.exp %272 : vector<8x32xf32>
    %cst_92 = arith.constant 1.000000e+00 : f32
    %274 = vector.broadcast %cst_92 : f32 to vector<8x32xf32>
    %275 = arith.addf %274, %273 : vector<8x32xf32>
    %276 = arith.divf %274, %275 : vector<8x32xf32>
    %277 = vector.extract_strided_slice %270 {offsets = [0, 32], sizes = [8, 32], strides = [1, 1]} : vector<8x128xf32> to vector<8x32xf32>
    %278 = arith.negf %277 : vector<8x32xf32>
    %279 = math.exp %278 : vector<8x32xf32>
    %cst_93 = arith.constant 1.000000e+00 : f32
    %280 = vector.broadcast %cst_93 : f32 to vector<8x32xf32>
    %281 = arith.addf %280, %279 : vector<8x32xf32>
    %282 = arith.divf %280, %281 : vector<8x32xf32>
    %283 = vector.extract_strided_slice %270 {offsets = [0, 64], sizes = [8, 32], strides = [1, 1]} : vector<8x128xf32> to vector<8x32xf32>
    %284 = math.tanh %283 : vector<8x32xf32>
    %285 = vector.extract_strided_slice %270 {offsets = [0, 96], sizes = [8, 32], strides = [1, 1]} : vector<8x128xf32> to vector<8x32xf32>
    %286 = arith.negf %285 : vector<8x32xf32>
    %287 = math.exp %286 : vector<8x32xf32>
    %cst_94 = arith.constant 1.000000e+00 : f32
    %288 = vector.broadcast %cst_94 : f32 to vector<8x32xf32>
    %289 = arith.addf %288, %287 : vector<8x32xf32>
    %290 = arith.divf %288, %289 : vector<8x32xf32>
    %291 = arith.mulf %282, %223 : vector<8x32xf32>
    %292 = arith.mulf %276, %284 : vector<8x32xf32>
    %293 = arith.addf %291, %292 : vector<8x32xf32>
    %294 = math.tanh %293 : vector<8x32xf32>
    %295 = arith.mulf %290, %294 : vector<8x32xf32>
    %c0_i32_95 = arith.constant 0 : i32
    %296 = arith.cmpi sge, %263, %c0_i32_95 : i32
    %c8_i32_96 = arith.constant 8 : i32
    %297 = arith.cmpi slt, %263, %c8_i32_96 : i32
    %298 = arith.andi %296, %297 : i1
    %299 = arith.addi %14, %263 : i32
    %c8_i32_97 = arith.constant 8 : i32
    %300 = arith.cmpi slt, %299, %c8_i32_97 : i32
    %301 = arith.andi %298, %300 : i1
    %302 = arith.select %301, %295, %222 : vector<8x32xf32>
    %303 = arith.select %301, %293, %223 : vector<8x32xf32>
    %c1_i32_98 = arith.constant 1 : i32
    %304 = arith.subi %c3_i32, %c1_i32_98 : i32
    %cst_99 = arith.constant dense<0.000000e+00> : vector<8x128xf32>
    %305 = tpu.matmul %222, %12, %cst_99 {dimension_numbers = #tpu.dot_dimension_numbers<[1], [0], [0], [1], [0, 0, 1, 1], [], []>} : vector<8x32xf32>, vector<32x128xf32>, vector<8x128xf32> -> vector<8x128xf32>
    %cst_100 = arith.constant dense<0.000000e+00> : vector<8x128xf32>
    %306 = tpu.matmul %261, %11, %cst_100 {dimension_numbers = #tpu.dot_dimension_numbers<[1], [0], [0], [1], [0, 0, 1, 1], [], []>} : vector<8x32xf32>, vector<32x128xf32>, vector<8x128xf32> -> vector<8x128xf32>
    %307 = arith.addf %305, %306 : vector<8x128xf32>
    %308 = vector.broadcast %13 : vector<1x128xf32> to vector<8x128xf32>
    %309 = arith.addf %307, %308 : vector<8x128xf32>
    %310 = vector.extract_strided_slice %309 {offsets = [0, 0], sizes = [8, 32], strides = [1, 1]} : vector<8x128xf32> to vector<8x32xf32>
    %311 = arith.negf %310 : vector<8x32xf32>
    %312 = math.exp %311 : vector<8x32xf32>
    %cst_101 = arith.constant 1.000000e+00 : f32
    %313 = vector.broadcast %cst_101 : f32 to vector<8x32xf32>
    %314 = arith.addf %313, %312 : vector<8x32xf32>
    %315 = arith.divf %313, %314 : vector<8x32xf32>
    %316 = vector.extract_strided_slice %309 {offsets = [0, 32], sizes = [8, 32], strides = [1, 1]} : vector<8x128xf32> to vector<8x32xf32>
    %317 = arith.negf %316 : vector<8x32xf32>
    %318 = math.exp %317 : vector<8x32xf32>
    %cst_102 = arith.constant 1.000000e+00 : f32
    %319 = vector.broadcast %cst_102 : f32 to vector<8x32xf32>
    %320 = arith.addf %319, %318 : vector<8x32xf32>
    %321 = arith.divf %319, %320 : vector<8x32xf32>
    %322 = vector.extract_strided_slice %309 {offsets = [0, 64], sizes = [8, 32], strides = [1, 1]} : vector<8x128xf32> to vector<8x32xf32>
    %323 = math.tanh %322 : vector<8x32xf32>
    %324 = vector.extract_strided_slice %309 {offsets = [0, 96], sizes = [8, 32], strides = [1, 1]} : vector<8x128xf32> to vector<8x32xf32>
    %325 = arith.negf %324 : vector<8x32xf32>
    %326 = math.exp %325 : vector<8x32xf32>
    %cst_103 = arith.constant 1.000000e+00 : f32
    %327 = vector.broadcast %cst_103 : f32 to vector<8x32xf32>
    %328 = arith.addf %327, %326 : vector<8x32xf32>
    %329 = arith.divf %327, %328 : vector<8x32xf32>
    %330 = arith.mulf %321, %262 : vector<8x32xf32>
    %331 = arith.mulf %315, %323 : vector<8x32xf32>
    %332 = arith.addf %330, %331 : vector<8x32xf32>
    %333 = math.tanh %332 : vector<8x32xf32>
    %334 = arith.mulf %329, %333 : vector<8x32xf32>
    %c0_i32_104 = arith.constant 0 : i32
    %335 = arith.cmpi sge, %304, %c0_i32_104 : i32
    %c8_i32_105 = arith.constant 8 : i32
    %336 = arith.cmpi slt, %304, %c8_i32_105 : i32
    %337 = arith.andi %335, %336 : i1
    %338 = arith.addi %14, %304 : i32
    %c8_i32_106 = arith.constant 8 : i32
    %339 = arith.cmpi slt, %338, %c8_i32_106 : i32
    %340 = arith.andi %337, %339 : i1
    %341 = arith.select %340, %334, %261 : vector<8x32xf32>
    %342 = arith.select %340, %332, %262 : vector<8x32xf32>
    %c4_i32 = arith.constant 4 : i32
    %c0_i32_107 = arith.constant 0 : i32
    %343 = arith.subi %c4_i32, %c0_i32_107 : i32
    %c7_i32_108 = arith.constant 7 : i32
    %344 = arith.minsi %343, %c7_i32_108 : i32
    %c8_i32_109 = arith.constant 8 : i32
    %345 = arith.muli %344, %c8_i32_109 : i32
    %346 = tpu.assume_multiple %345, 8 : i32
    %347 = arith.index_cast %346 : i32 to index
    %c0_110 = arith.constant 0 : index
    %348 = vector.load %arg11[%347, %c0_110] : memref<64x128xf32, #tpu.memory_space<vmem>>, vector<8x128xf32>
    %cst_111 = arith.constant dense<0.000000e+00> : vector<8x128xf32>
    %349 = tpu.matmul %302, %10, %cst_111 {dimension_numbers = #tpu.dot_dimension_numbers<[1], [0], [0], [1], [0, 0, 1, 1], [], []>} : vector<8x32xf32>, vector<32x128xf32>, vector<8x128xf32> -> vector<8x128xf32>
    %350 = arith.addf %348, %349 : vector<8x128xf32>
    %351 = vector.extract_strided_slice %350 {offsets = [0, 0], sizes = [8, 32], strides = [1, 1]} : vector<8x128xf32> to vector<8x32xf32>
    %352 = arith.negf %351 : vector<8x32xf32>
    %353 = math.exp %352 : vector<8x32xf32>
    %cst_112 = arith.constant 1.000000e+00 : f32
    %354 = vector.broadcast %cst_112 : f32 to vector<8x32xf32>
    %355 = arith.addf %354, %353 : vector<8x32xf32>
    %356 = arith.divf %354, %355 : vector<8x32xf32>
    %357 = vector.extract_strided_slice %350 {offsets = [0, 32], sizes = [8, 32], strides = [1, 1]} : vector<8x128xf32> to vector<8x32xf32>
    %358 = arith.negf %357 : vector<8x32xf32>
    %359 = math.exp %358 : vector<8x32xf32>
    %cst_113 = arith.constant 1.000000e+00 : f32
    %360 = vector.broadcast %cst_113 : f32 to vector<8x32xf32>
    %361 = arith.addf %360, %359 : vector<8x32xf32>
    %362 = arith.divf %360, %361 : vector<8x32xf32>
    %363 = vector.extract_strided_slice %350 {offsets = [0, 64], sizes = [8, 32], strides = [1, 1]} : vector<8x128xf32> to vector<8x32xf32>
    %364 = math.tanh %363 : vector<8x32xf32>
    %365 = vector.extract_strided_slice %350 {offsets = [0, 96], sizes = [8, 32], strides = [1, 1]} : vector<8x128xf32> to vector<8x32xf32>
    %366 = arith.negf %365 : vector<8x32xf32>
    %367 = math.exp %366 : vector<8x32xf32>
    %cst_114 = arith.constant 1.000000e+00 : f32
    %368 = vector.broadcast %cst_114 : f32 to vector<8x32xf32>
    %369 = arith.addf %368, %367 : vector<8x32xf32>
    %370 = arith.divf %368, %369 : vector<8x32xf32>
    %371 = arith.mulf %362, %303 : vector<8x32xf32>
    %372 = arith.mulf %356, %364 : vector<8x32xf32>
    %373 = arith.addf %371, %372 : vector<8x32xf32>
    %374 = math.tanh %373 : vector<8x32xf32>
    %375 = arith.mulf %370, %374 : vector<8x32xf32>
    %c0_i32_115 = arith.constant 0 : i32
    %376 = arith.cmpi sge, %343, %c0_i32_115 : i32
    %c8_i32_116 = arith.constant 8 : i32
    %377 = arith.cmpi slt, %343, %c8_i32_116 : i32
    %378 = arith.andi %376, %377 : i1
    %379 = arith.addi %14, %343 : i32
    %c8_i32_117 = arith.constant 8 : i32
    %380 = arith.cmpi slt, %379, %c8_i32_117 : i32
    %381 = arith.andi %378, %380 : i1
    %382 = arith.select %381, %375, %302 : vector<8x32xf32>
    %383 = arith.select %381, %373, %303 : vector<8x32xf32>
    %c1_i32_118 = arith.constant 1 : i32
    %384 = arith.subi %c4_i32, %c1_i32_118 : i32
    %cst_119 = arith.constant dense<0.000000e+00> : vector<8x128xf32>
    %385 = tpu.matmul %302, %12, %cst_119 {dimension_numbers = #tpu.dot_dimension_numbers<[1], [0], [0], [1], [0, 0, 1, 1], [], []>} : vector<8x32xf32>, vector<32x128xf32>, vector<8x128xf32> -> vector<8x128xf32>
    %cst_120 = arith.constant dense<0.000000e+00> : vector<8x128xf32>
    %386 = tpu.matmul %341, %11, %cst_120 {dimension_numbers = #tpu.dot_dimension_numbers<[1], [0], [0], [1], [0, 0, 1, 1], [], []>} : vector<8x32xf32>, vector<32x128xf32>, vector<8x128xf32> -> vector<8x128xf32>
    %387 = arith.addf %385, %386 : vector<8x128xf32>
    %388 = vector.broadcast %13 : vector<1x128xf32> to vector<8x128xf32>
    %389 = arith.addf %387, %388 : vector<8x128xf32>
    %390 = vector.extract_strided_slice %389 {offsets = [0, 0], sizes = [8, 32], strides = [1, 1]} : vector<8x128xf32> to vector<8x32xf32>
    %391 = arith.negf %390 : vector<8x32xf32>
    %392 = math.exp %391 : vector<8x32xf32>
    %cst_121 = arith.constant 1.000000e+00 : f32
    %393 = vector.broadcast %cst_121 : f32 to vector<8x32xf32>
    %394 = arith.addf %393, %392 : vector<8x32xf32>
    %395 = arith.divf %393, %394 : vector<8x32xf32>
    %396 = vector.extract_strided_slice %389 {offsets = [0, 32], sizes = [8, 32], strides = [1, 1]} : vector<8x128xf32> to vector<8x32xf32>
    %397 = arith.negf %396 : vector<8x32xf32>
    %398 = math.exp %397 : vector<8x32xf32>
    %cst_122 = arith.constant 1.000000e+00 : f32
    %399 = vector.broadcast %cst_122 : f32 to vector<8x32xf32>
    %400 = arith.addf %399, %398 : vector<8x32xf32>
    %401 = arith.divf %399, %400 : vector<8x32xf32>
    %402 = vector.extract_strided_slice %389 {offsets = [0, 64], sizes = [8, 32], strides = [1, 1]} : vector<8x128xf32> to vector<8x32xf32>
    %403 = math.tanh %402 : vector<8x32xf32>
    %404 = vector.extract_strided_slice %389 {offsets = [0, 96], sizes = [8, 32], strides = [1, 1]} : vector<8x128xf32> to vector<8x32xf32>
    %405 = arith.negf %404 : vector<8x32xf32>
    %406 = math.exp %405 : vector<8x32xf32>
    %cst_123 = arith.constant 1.000000e+00 : f32
    %407 = vector.broadcast %cst_123 : f32 to vector<8x32xf32>
    %408 = arith.addf %407, %406 : vector<8x32xf32>
    %409 = arith.divf %407, %408 : vector<8x32xf32>
    %410 = arith.mulf %401, %342 : vector<8x32xf32>
    %411 = arith.mulf %395, %403 : vector<8x32xf32>
    %412 = arith.addf %410, %411 : vector<8x32xf32>
    %413 = math.tanh %412 : vector<8x32xf32>
    %414 = arith.mulf %409, %413 : vector<8x32xf32>
    %c0_i32_124 = arith.constant 0 : i32
    %415 = arith.cmpi sge, %384, %c0_i32_124 : i32
    %c8_i32_125 = arith.constant 8 : i32
    %416 = arith.cmpi slt, %384, %c8_i32_125 : i32
    %417 = arith.andi %415, %416 : i1
    %418 = arith.addi %14, %384 : i32
    %c8_i32_126 = arith.constant 8 : i32
    %419 = arith.cmpi slt, %418, %c8_i32_126 : i32
    %420 = arith.andi %417, %419 : i1
    %421 = arith.select %420, %414, %341 : vector<8x32xf32>
    %422 = arith.select %420, %412, %342 : vector<8x32xf32>
    %c5_i32 = arith.constant 5 : i32
    %c0_i32_127 = arith.constant 0 : i32
    %423 = arith.subi %c5_i32, %c0_i32_127 : i32
    %c7_i32_128 = arith.constant 7 : i32
    %424 = arith.minsi %423, %c7_i32_128 : i32
    %c8_i32_129 = arith.constant 8 : i32
    %425 = arith.muli %424, %c8_i32_129 : i32
    %426 = tpu.assume_multiple %425, 8 : i32
    %427 = arith.index_cast %426 : i32 to index
    %c0_130 = arith.constant 0 : index
    %428 = vector.load %arg11[%427, %c0_130] : memref<64x128xf32, #tpu.memory_space<vmem>>, vector<8x128xf32>
    %cst_131 = arith.constant dense<0.000000e+00> : vector<8x128xf32>
    %429 = tpu.matmul %382, %10, %cst_131 {dimension_numbers = #tpu.dot_dimension_numbers<[1], [0], [0], [1], [0, 0, 1, 1], [], []>} : vector<8x32xf32>, vector<32x128xf32>, vector<8x128xf32> -> vector<8x128xf32>
    %430 = arith.addf %428, %429 : vector<8x128xf32>
    %431 = vector.extract_strided_slice %430 {offsets = [0, 0], sizes = [8, 32], strides = [1, 1]} : vector<8x128xf32> to vector<8x32xf32>
    %432 = arith.negf %431 : vector<8x32xf32>
    %433 = math.exp %432 : vector<8x32xf32>
    %cst_132 = arith.constant 1.000000e+00 : f32
    %434 = vector.broadcast %cst_132 : f32 to vector<8x32xf32>
    %435 = arith.addf %434, %433 : vector<8x32xf32>
    %436 = arith.divf %434, %435 : vector<8x32xf32>
    %437 = vector.extract_strided_slice %430 {offsets = [0, 32], sizes = [8, 32], strides = [1, 1]} : vector<8x128xf32> to vector<8x32xf32>
    %438 = arith.negf %437 : vector<8x32xf32>
    %439 = math.exp %438 : vector<8x32xf32>
    %cst_133 = arith.constant 1.000000e+00 : f32
    %440 = vector.broadcast %cst_133 : f32 to vector<8x32xf32>
    %441 = arith.addf %440, %439 : vector<8x32xf32>
    %442 = arith.divf %440, %441 : vector<8x32xf32>
    %443 = vector.extract_strided_slice %430 {offsets = [0, 64], sizes = [8, 32], strides = [1, 1]} : vector<8x128xf32> to vector<8x32xf32>
    %444 = math.tanh %443 : vector<8x32xf32>
    %445 = vector.extract_strided_slice %430 {offsets = [0, 96], sizes = [8, 32], strides = [1, 1]} : vector<8x128xf32> to vector<8x32xf32>
    %446 = arith.negf %445 : vector<8x32xf32>
    %447 = math.exp %446 : vector<8x32xf32>
    %cst_134 = arith.constant 1.000000e+00 : f32
    %448 = vector.broadcast %cst_134 : f32 to vector<8x32xf32>
    %449 = arith.addf %448, %447 : vector<8x32xf32>
    %450 = arith.divf %448, %449 : vector<8x32xf32>
    %451 = arith.mulf %442, %383 : vector<8x32xf32>
    %452 = arith.mulf %436, %444 : vector<8x32xf32>
    %453 = arith.addf %451, %452 : vector<8x32xf32>
    %454 = math.tanh %453 : vector<8x32xf32>
    %455 = arith.mulf %450, %454 : vector<8x32xf32>
    %c0_i32_135 = arith.constant 0 : i32
    %456 = arith.cmpi sge, %423, %c0_i32_135 : i32
    %c8_i32_136 = arith.constant 8 : i32
    %457 = arith.cmpi slt, %423, %c8_i32_136 : i32
    %458 = arith.andi %456, %457 : i1
    %459 = arith.addi %14, %423 : i32
    %c8_i32_137 = arith.constant 8 : i32
    %460 = arith.cmpi slt, %459, %c8_i32_137 : i32
    %461 = arith.andi %458, %460 : i1
    %462 = arith.select %461, %455, %382 : vector<8x32xf32>
    %463 = arith.select %461, %453, %383 : vector<8x32xf32>
    %c1_i32_138 = arith.constant 1 : i32
    %464 = arith.subi %c5_i32, %c1_i32_138 : i32
    %cst_139 = arith.constant dense<0.000000e+00> : vector<8x128xf32>
    %465 = tpu.matmul %382, %12, %cst_139 {dimension_numbers = #tpu.dot_dimension_numbers<[1], [0], [0], [1], [0, 0, 1, 1], [], []>} : vector<8x32xf32>, vector<32x128xf32>, vector<8x128xf32> -> vector<8x128xf32>
    %cst_140 = arith.constant dense<0.000000e+00> : vector<8x128xf32>
    %466 = tpu.matmul %421, %11, %cst_140 {dimension_numbers = #tpu.dot_dimension_numbers<[1], [0], [0], [1], [0, 0, 1, 1], [], []>} : vector<8x32xf32>, vector<32x128xf32>, vector<8x128xf32> -> vector<8x128xf32>
    %467 = arith.addf %465, %466 : vector<8x128xf32>
    %468 = vector.broadcast %13 : vector<1x128xf32> to vector<8x128xf32>
    %469 = arith.addf %467, %468 : vector<8x128xf32>
    %470 = vector.extract_strided_slice %469 {offsets = [0, 0], sizes = [8, 32], strides = [1, 1]} : vector<8x128xf32> to vector<8x32xf32>
    %471 = arith.negf %470 : vector<8x32xf32>
    %472 = math.exp %471 : vector<8x32xf32>
    %cst_141 = arith.constant 1.000000e+00 : f32
    %473 = vector.broadcast %cst_141 : f32 to vector<8x32xf32>
    %474 = arith.addf %473, %472 : vector<8x32xf32>
    %475 = arith.divf %473, %474 : vector<8x32xf32>
    %476 = vector.extract_strided_slice %469 {offsets = [0, 32], sizes = [8, 32], strides = [1, 1]} : vector<8x128xf32> to vector<8x32xf32>
    %477 = arith.negf %476 : vector<8x32xf32>
    %478 = math.exp %477 : vector<8x32xf32>
    %cst_142 = arith.constant 1.000000e+00 : f32
    %479 = vector.broadcast %cst_142 : f32 to vector<8x32xf32>
    %480 = arith.addf %479, %478 : vector<8x32xf32>
    %481 = arith.divf %479, %480 : vector<8x32xf32>
    %482 = vector.extract_strided_slice %469 {offsets = [0, 64], sizes = [8, 32], strides = [1, 1]} : vector<8x128xf32> to vector<8x32xf32>
    %483 = math.tanh %482 : vector<8x32xf32>
    %484 = vector.extract_strided_slice %469 {offsets = [0, 96], sizes = [8, 32], strides = [1, 1]} : vector<8x128xf32> to vector<8x32xf32>
    %485 = arith.negf %484 : vector<8x32xf32>
    %486 = math.exp %485 : vector<8x32xf32>
    %cst_143 = arith.constant 1.000000e+00 : f32
    %487 = vector.broadcast %cst_143 : f32 to vector<8x32xf32>
    %488 = arith.addf %487, %486 : vector<8x32xf32>
    %489 = arith.divf %487, %488 : vector<8x32xf32>
    %490 = arith.mulf %481, %422 : vector<8x32xf32>
    %491 = arith.mulf %475, %483 : vector<8x32xf32>
    %492 = arith.addf %490, %491 : vector<8x32xf32>
    %493 = math.tanh %492 : vector<8x32xf32>
    %494 = arith.mulf %489, %493 : vector<8x32xf32>
    %c0_i32_144 = arith.constant 0 : i32
    %495 = arith.cmpi sge, %464, %c0_i32_144 : i32
    %c8_i32_145 = arith.constant 8 : i32
    %496 = arith.cmpi slt, %464, %c8_i32_145 : i32
    %497 = arith.andi %495, %496 : i1
    %498 = arith.addi %14, %464 : i32
    %c8_i32_146 = arith.constant 8 : i32
    %499 = arith.cmpi slt, %498, %c8_i32_146 : i32
    %500 = arith.andi %497, %499 : i1
    %501 = arith.select %500, %494, %421 : vector<8x32xf32>
    %502 = arith.select %500, %492, %422 : vector<8x32xf32>
    %c6_i32 = arith.constant 6 : i32
    %c0_i32_147 = arith.constant 0 : i32
    %503 = arith.subi %c6_i32, %c0_i32_147 : i32
    %c7_i32_148 = arith.constant 7 : i32
    %504 = arith.minsi %503, %c7_i32_148 : i32
    %c8_i32_149 = arith.constant 8 : i32
    %505 = arith.muli %504, %c8_i32_149 : i32
    %506 = tpu.assume_multiple %505, 8 : i32
    %507 = arith.index_cast %506 : i32 to index
    %c0_150 = arith.constant 0 : index
    %508 = vector.load %arg11[%507, %c0_150] : memref<64x128xf32, #tpu.memory_space<vmem>>, vector<8x128xf32>
    %cst_151 = arith.constant dense<0.000000e+00> : vector<8x128xf32>
    %509 = tpu.matmul %462, %10, %cst_151 {dimension_numbers = #tpu.dot_dimension_numbers<[1], [0], [0], [1], [0, 0, 1, 1], [], []>} : vector<8x32xf32>, vector<32x128xf32>, vector<8x128xf32> -> vector<8x128xf32>
    %510 = arith.addf %508, %509 : vector<8x128xf32>
    %511 = vector.extract_strided_slice %510 {offsets = [0, 0], sizes = [8, 32], strides = [1, 1]} : vector<8x128xf32> to vector<8x32xf32>
    %512 = arith.negf %511 : vector<8x32xf32>
    %513 = math.exp %512 : vector<8x32xf32>
    %cst_152 = arith.constant 1.000000e+00 : f32
    %514 = vector.broadcast %cst_152 : f32 to vector<8x32xf32>
    %515 = arith.addf %514, %513 : vector<8x32xf32>
    %516 = arith.divf %514, %515 : vector<8x32xf32>
    %517 = vector.extract_strided_slice %510 {offsets = [0, 32], sizes = [8, 32], strides = [1, 1]} : vector<8x128xf32> to vector<8x32xf32>
    %518 = arith.negf %517 : vector<8x32xf32>
    %519 = math.exp %518 : vector<8x32xf32>
    %cst_153 = arith.constant 1.000000e+00 : f32
    %520 = vector.broadcast %cst_153 : f32 to vector<8x32xf32>
    %521 = arith.addf %520, %519 : vector<8x32xf32>
    %522 = arith.divf %520, %521 : vector<8x32xf32>
    %523 = vector.extract_strided_slice %510 {offsets = [0, 64], sizes = [8, 32], strides = [1, 1]} : vector<8x128xf32> to vector<8x32xf32>
    %524 = math.tanh %523 : vector<8x32xf32>
    %525 = vector.extract_strided_slice %510 {offsets = [0, 96], sizes = [8, 32], strides = [1, 1]} : vector<8x128xf32> to vector<8x32xf32>
    %526 = arith.negf %525 : vector<8x32xf32>
    %527 = math.exp %526 : vector<8x32xf32>
    %cst_154 = arith.constant 1.000000e+00 : f32
    %528 = vector.broadcast %cst_154 : f32 to vector<8x32xf32>
    %529 = arith.addf %528, %527 : vector<8x32xf32>
    %530 = arith.divf %528, %529 : vector<8x32xf32>
    %531 = arith.mulf %522, %463 : vector<8x32xf32>
    %532 = arith.mulf %516, %524 : vector<8x32xf32>
    %533 = arith.addf %531, %532 : vector<8x32xf32>
    %534 = math.tanh %533 : vector<8x32xf32>
    %535 = arith.mulf %530, %534 : vector<8x32xf32>
    %c0_i32_155 = arith.constant 0 : i32
    %536 = arith.cmpi sge, %503, %c0_i32_155 : i32
    %c8_i32_156 = arith.constant 8 : i32
    %537 = arith.cmpi slt, %503, %c8_i32_156 : i32
    %538 = arith.andi %536, %537 : i1
    %539 = arith.addi %14, %503 : i32
    %c8_i32_157 = arith.constant 8 : i32
    %540 = arith.cmpi slt, %539, %c8_i32_157 : i32
    %541 = arith.andi %538, %540 : i1
    %542 = arith.select %541, %535, %462 : vector<8x32xf32>
    %543 = arith.select %541, %533, %463 : vector<8x32xf32>
    %c1_i32_158 = arith.constant 1 : i32
    %544 = arith.subi %c6_i32, %c1_i32_158 : i32
    %cst_159 = arith.constant dense<0.000000e+00> : vector<8x128xf32>
    %545 = tpu.matmul %462, %12, %cst_159 {dimension_numbers = #tpu.dot_dimension_numbers<[1], [0], [0], [1], [0, 0, 1, 1], [], []>} : vector<8x32xf32>, vector<32x128xf32>, vector<8x128xf32> -> vector<8x128xf32>
    %cst_160 = arith.constant dense<0.000000e+00> : vector<8x128xf32>
    %546 = tpu.matmul %501, %11, %cst_160 {dimension_numbers = #tpu.dot_dimension_numbers<[1], [0], [0], [1], [0, 0, 1, 1], [], []>} : vector<8x32xf32>, vector<32x128xf32>, vector<8x128xf32> -> vector<8x128xf32>
    %547 = arith.addf %545, %546 : vector<8x128xf32>
    %548 = vector.broadcast %13 : vector<1x128xf32> to vector<8x128xf32>
    %549 = arith.addf %547, %548 : vector<8x128xf32>
    %550 = vector.extract_strided_slice %549 {offsets = [0, 0], sizes = [8, 32], strides = [1, 1]} : vector<8x128xf32> to vector<8x32xf32>
    %551 = arith.negf %550 : vector<8x32xf32>
    %552 = math.exp %551 : vector<8x32xf32>
    %cst_161 = arith.constant 1.000000e+00 : f32
    %553 = vector.broadcast %cst_161 : f32 to vector<8x32xf32>
    %554 = arith.addf %553, %552 : vector<8x32xf32>
    %555 = arith.divf %553, %554 : vector<8x32xf32>
    %556 = vector.extract_strided_slice %549 {offsets = [0, 32], sizes = [8, 32], strides = [1, 1]} : vector<8x128xf32> to vector<8x32xf32>
    %557 = arith.negf %556 : vector<8x32xf32>
    %558 = math.exp %557 : vector<8x32xf32>
    %cst_162 = arith.constant 1.000000e+00 : f32
    %559 = vector.broadcast %cst_162 : f32 to vector<8x32xf32>
    %560 = arith.addf %559, %558 : vector<8x32xf32>
    %561 = arith.divf %559, %560 : vector<8x32xf32>
    %562 = vector.extract_strided_slice %549 {offsets = [0, 64], sizes = [8, 32], strides = [1, 1]} : vector<8x128xf32> to vector<8x32xf32>
    %563 = math.tanh %562 : vector<8x32xf32>
    %564 = vector.extract_strided_slice %549 {offsets = [0, 96], sizes = [8, 32], strides = [1, 1]} : vector<8x128xf32> to vector<8x32xf32>
    %565 = arith.negf %564 : vector<8x32xf32>
    %566 = math.exp %565 : vector<8x32xf32>
    %cst_163 = arith.constant 1.000000e+00 : f32
    %567 = vector.broadcast %cst_163 : f32 to vector<8x32xf32>
    %568 = arith.addf %567, %566 : vector<8x32xf32>
    %569 = arith.divf %567, %568 : vector<8x32xf32>
    %570 = arith.mulf %561, %502 : vector<8x32xf32>
    %571 = arith.mulf %555, %563 : vector<8x32xf32>
    %572 = arith.addf %570, %571 : vector<8x32xf32>
    %573 = math.tanh %572 : vector<8x32xf32>
    %574 = arith.mulf %569, %573 : vector<8x32xf32>
    %c0_i32_164 = arith.constant 0 : i32
    %575 = arith.cmpi sge, %544, %c0_i32_164 : i32
    %c8_i32_165 = arith.constant 8 : i32
    %576 = arith.cmpi slt, %544, %c8_i32_165 : i32
    %577 = arith.andi %575, %576 : i1
    %578 = arith.addi %14, %544 : i32
    %c8_i32_166 = arith.constant 8 : i32
    %579 = arith.cmpi slt, %578, %c8_i32_166 : i32
    %580 = arith.andi %577, %579 : i1
    %581 = arith.select %580, %574, %501 : vector<8x32xf32>
    %582 = arith.select %580, %572, %502 : vector<8x32xf32>
    %c7_i32_167 = arith.constant 7 : i32
    %c0_i32_168 = arith.constant 0 : i32
    %583 = arith.subi %c7_i32_167, %c0_i32_168 : i32
    %c7_i32_169 = arith.constant 7 : i32
    %584 = arith.minsi %583, %c7_i32_169 : i32
    %c8_i32_170 = arith.constant 8 : i32
    %585 = arith.muli %584, %c8_i32_170 : i32
    %586 = tpu.assume_multiple %585, 8 : i32
    %587 = arith.index_cast %586 : i32 to index
    %c0_171 = arith.constant 0 : index
    %588 = vector.load %arg11[%587, %c0_171] : memref<64x128xf32, #tpu.memory_space<vmem>>, vector<8x128xf32>
    %cst_172 = arith.constant dense<0.000000e+00> : vector<8x128xf32>
    %589 = tpu.matmul %542, %10, %cst_172 {dimension_numbers = #tpu.dot_dimension_numbers<[1], [0], [0], [1], [0, 0, 1, 1], [], []>} : vector<8x32xf32>, vector<32x128xf32>, vector<8x128xf32> -> vector<8x128xf32>
    %590 = arith.addf %588, %589 : vector<8x128xf32>
    %591 = vector.extract_strided_slice %590 {offsets = [0, 0], sizes = [8, 32], strides = [1, 1]} : vector<8x128xf32> to vector<8x32xf32>
    %592 = arith.negf %591 : vector<8x32xf32>
    %593 = math.exp %592 : vector<8x32xf32>
    %cst_173 = arith.constant 1.000000e+00 : f32
    %594 = vector.broadcast %cst_173 : f32 to vector<8x32xf32>
    %595 = arith.addf %594, %593 : vector<8x32xf32>
    %596 = arith.divf %594, %595 : vector<8x32xf32>
    %597 = vector.extract_strided_slice %590 {offsets = [0, 32], sizes = [8, 32], strides = [1, 1]} : vector<8x128xf32> to vector<8x32xf32>
    %598 = arith.negf %597 : vector<8x32xf32>
    %599 = math.exp %598 : vector<8x32xf32>
    %cst_174 = arith.constant 1.000000e+00 : f32
    %600 = vector.broadcast %cst_174 : f32 to vector<8x32xf32>
    %601 = arith.addf %600, %599 : vector<8x32xf32>
    %602 = arith.divf %600, %601 : vector<8x32xf32>
    %603 = vector.extract_strided_slice %590 {offsets = [0, 64], sizes = [8, 32], strides = [1, 1]} : vector<8x128xf32> to vector<8x32xf32>
    %604 = math.tanh %603 : vector<8x32xf32>
    %605 = vector.extract_strided_slice %590 {offsets = [0, 96], sizes = [8, 32], strides = [1, 1]} : vector<8x128xf32> to vector<8x32xf32>
    %606 = arith.negf %605 : vector<8x32xf32>
    %607 = math.exp %606 : vector<8x32xf32>
    %cst_175 = arith.constant 1.000000e+00 : f32
    %608 = vector.broadcast %cst_175 : f32 to vector<8x32xf32>
    %609 = arith.addf %608, %607 : vector<8x32xf32>
    %610 = arith.divf %608, %609 : vector<8x32xf32>
    %611 = arith.mulf %602, %543 : vector<8x32xf32>
    %612 = arith.mulf %596, %604 : vector<8x32xf32>
    %613 = arith.addf %611, %612 : vector<8x32xf32>
    %614 = math.tanh %613 : vector<8x32xf32>
    %615 = arith.mulf %610, %614 : vector<8x32xf32>
    %c0_i32_176 = arith.constant 0 : i32
    %616 = arith.cmpi sge, %583, %c0_i32_176 : i32
    %c8_i32_177 = arith.constant 8 : i32
    %617 = arith.cmpi slt, %583, %c8_i32_177 : i32
    %618 = arith.andi %616, %617 : i1
    %619 = arith.addi %14, %583 : i32
    %c8_i32_178 = arith.constant 8 : i32
    %620 = arith.cmpi slt, %619, %c8_i32_178 : i32
    %621 = arith.andi %618, %620 : i1
    %622 = arith.select %621, %615, %542 : vector<8x32xf32>
    %623 = arith.select %621, %613, %543 : vector<8x32xf32>
    %c1_i32_179 = arith.constant 1 : i32
    %624 = arith.subi %c7_i32_167, %c1_i32_179 : i32
    %cst_180 = arith.constant dense<0.000000e+00> : vector<8x128xf32>
    %625 = tpu.matmul %542, %12, %cst_180 {dimension_numbers = #tpu.dot_dimension_numbers<[1], [0], [0], [1], [0, 0, 1, 1], [], []>} : vector<8x32xf32>, vector<32x128xf32>, vector<8x128xf32> -> vector<8x128xf32>
    %cst_181 = arith.constant dense<0.000000e+00> : vector<8x128xf32>
    %626 = tpu.matmul %581, %11, %cst_181 {dimension_numbers = #tpu.dot_dimension_numbers<[1], [0], [0], [1], [0, 0, 1, 1], [], []>} : vector<8x32xf32>, vector<32x128xf32>, vector<8x128xf32> -> vector<8x128xf32>
    %627 = arith.addf %625, %626 : vector<8x128xf32>
    %628 = vector.broadcast %13 : vector<1x128xf32> to vector<8x128xf32>
    %629 = arith.addf %627, %628 : vector<8x128xf32>
    %630 = vector.extract_strided_slice %629 {offsets = [0, 0], sizes = [8, 32], strides = [1, 1]} : vector<8x128xf32> to vector<8x32xf32>
    %631 = arith.negf %630 : vector<8x32xf32>
    %632 = math.exp %631 : vector<8x32xf32>
    %cst_182 = arith.constant 1.000000e+00 : f32
    %633 = vector.broadcast %cst_182 : f32 to vector<8x32xf32>
    %634 = arith.addf %633, %632 : vector<8x32xf32>
    %635 = arith.divf %633, %634 : vector<8x32xf32>
    %636 = vector.extract_strided_slice %629 {offsets = [0, 32], sizes = [8, 32], strides = [1, 1]} : vector<8x128xf32> to vector<8x32xf32>
    %637 = arith.negf %636 : vector<8x32xf32>
    %638 = math.exp %637 : vector<8x32xf32>
    %cst_183 = arith.constant 1.000000e+00 : f32
    %639 = vector.broadcast %cst_183 : f32 to vector<8x32xf32>
    %640 = arith.addf %639, %638 : vector<8x32xf32>
    %641 = arith.divf %639, %640 : vector<8x32xf32>
    %642 = vector.extract_strided_slice %629 {offsets = [0, 64], sizes = [8, 32], strides = [1, 1]} : vector<8x128xf32> to vector<8x32xf32>
    %643 = math.tanh %642 : vector<8x32xf32>
    %644 = vector.extract_strided_slice %629 {offsets = [0, 96], sizes = [8, 32], strides = [1, 1]} : vector<8x128xf32> to vector<8x32xf32>
    %645 = arith.negf %644 : vector<8x32xf32>
    %646 = math.exp %645 : vector<8x32xf32>
    %cst_184 = arith.constant 1.000000e+00 : f32
    %647 = vector.broadcast %cst_184 : f32 to vector<8x32xf32>
    %648 = arith.addf %647, %646 : vector<8x32xf32>
    %649 = arith.divf %647, %648 : vector<8x32xf32>
    %650 = arith.mulf %641, %582 : vector<8x32xf32>
    %651 = arith.mulf %635, %643 : vector<8x32xf32>
    %652 = arith.addf %650, %651 : vector<8x32xf32>
    %653 = math.tanh %652 : vector<8x32xf32>
    %654 = arith.mulf %649, %653 : vector<8x32xf32>
    %c0_i32_185 = arith.constant 0 : i32
    %655 = arith.cmpi sge, %624, %c0_i32_185 : i32
    %c8_i32_186 = arith.constant 8 : i32
    %656 = arith.cmpi slt, %624, %c8_i32_186 : i32
    %657 = arith.andi %655, %656 : i1
    %658 = arith.addi %14, %624 : i32
    %c8_i32_187 = arith.constant 8 : i32
    %659 = arith.cmpi slt, %658, %c8_i32_187 : i32
    %660 = arith.andi %657, %659 : i1
    %661 = arith.select %660, %654, %581 : vector<8x32xf32>
    %662 = arith.select %660, %652, %582 : vector<8x32xf32>
    %c8_i32_188 = arith.constant 8 : i32
    %c0_i32_189 = arith.constant 0 : i32
    %663 = arith.subi %c8_i32_188, %c0_i32_189 : i32
    %c7_i32_190 = arith.constant 7 : i32
    %664 = arith.minsi %663, %c7_i32_190 : i32
    %c8_i32_191 = arith.constant 8 : i32
    %665 = arith.muli %664, %c8_i32_191 : i32
    %666 = tpu.assume_multiple %665, 8 : i32
    %667 = arith.index_cast %666 : i32 to index
    %c0_192 = arith.constant 0 : index
    %668 = vector.load %arg11[%667, %c0_192] : memref<64x128xf32, #tpu.memory_space<vmem>>, vector<8x128xf32>
    %cst_193 = arith.constant dense<0.000000e+00> : vector<8x128xf32>
    %669 = tpu.matmul %622, %10, %cst_193 {dimension_numbers = #tpu.dot_dimension_numbers<[1], [0], [0], [1], [0, 0, 1, 1], [], []>} : vector<8x32xf32>, vector<32x128xf32>, vector<8x128xf32> -> vector<8x128xf32>
    %670 = arith.addf %668, %669 : vector<8x128xf32>
    %671 = vector.extract_strided_slice %670 {offsets = [0, 0], sizes = [8, 32], strides = [1, 1]} : vector<8x128xf32> to vector<8x32xf32>
    %672 = arith.negf %671 : vector<8x32xf32>
    %673 = math.exp %672 : vector<8x32xf32>
    %cst_194 = arith.constant 1.000000e+00 : f32
    %674 = vector.broadcast %cst_194 : f32 to vector<8x32xf32>
    %675 = arith.addf %674, %673 : vector<8x32xf32>
    %676 = arith.divf %674, %675 : vector<8x32xf32>
    %677 = vector.extract_strided_slice %670 {offsets = [0, 32], sizes = [8, 32], strides = [1, 1]} : vector<8x128xf32> to vector<8x32xf32>
    %678 = arith.negf %677 : vector<8x32xf32>
    %679 = math.exp %678 : vector<8x32xf32>
    %cst_195 = arith.constant 1.000000e+00 : f32
    %680 = vector.broadcast %cst_195 : f32 to vector<8x32xf32>
    %681 = arith.addf %680, %679 : vector<8x32xf32>
    %682 = arith.divf %680, %681 : vector<8x32xf32>
    %683 = vector.extract_strided_slice %670 {offsets = [0, 64], sizes = [8, 32], strides = [1, 1]} : vector<8x128xf32> to vector<8x32xf32>
    %684 = math.tanh %683 : vector<8x32xf32>
    %685 = vector.extract_strided_slice %670 {offsets = [0, 96], sizes = [8, 32], strides = [1, 1]} : vector<8x128xf32> to vector<8x32xf32>
    %686 = arith.negf %685 : vector<8x32xf32>
    %687 = math.exp %686 : vector<8x32xf32>
    %cst_196 = arith.constant 1.000000e+00 : f32
    %688 = vector.broadcast %cst_196 : f32 to vector<8x32xf32>
    %689 = arith.addf %688, %687 : vector<8x32xf32>
    %690 = arith.divf %688, %689 : vector<8x32xf32>
    %691 = arith.mulf %682, %623 : vector<8x32xf32>
    %692 = arith.mulf %676, %684 : vector<8x32xf32>
    %693 = arith.addf %691, %692 : vector<8x32xf32>
    %694 = math.tanh %693 : vector<8x32xf32>
    %695 = arith.mulf %690, %694 : vector<8x32xf32>
    %c0_i32_197 = arith.constant 0 : i32
    %696 = arith.cmpi sge, %663, %c0_i32_197 : i32
    %c8_i32_198 = arith.constant 8 : i32
    %697 = arith.cmpi slt, %663, %c8_i32_198 : i32
    %698 = arith.andi %696, %697 : i1
    %699 = arith.addi %14, %663 : i32
    %c8_i32_199 = arith.constant 8 : i32
    %700 = arith.cmpi slt, %699, %c8_i32_199 : i32
    %701 = arith.andi %698, %700 : i1
    %702 = arith.select %701, %695, %622 : vector<8x32xf32>
    %703 = arith.select %701, %693, %623 : vector<8x32xf32>
    %c1_i32_200 = arith.constant 1 : i32
    %704 = arith.subi %c8_i32_188, %c1_i32_200 : i32
    %cst_201 = arith.constant dense<0.000000e+00> : vector<8x128xf32>
    %705 = tpu.matmul %622, %12, %cst_201 {dimension_numbers = #tpu.dot_dimension_numbers<[1], [0], [0], [1], [0, 0, 1, 1], [], []>} : vector<8x32xf32>, vector<32x128xf32>, vector<8x128xf32> -> vector<8x128xf32>
    %cst_202 = arith.constant dense<0.000000e+00> : vector<8x128xf32>
    %706 = tpu.matmul %661, %11, %cst_202 {dimension_numbers = #tpu.dot_dimension_numbers<[1], [0], [0], [1], [0, 0, 1, 1], [], []>} : vector<8x32xf32>, vector<32x128xf32>, vector<8x128xf32> -> vector<8x128xf32>
    %707 = arith.addf %705, %706 : vector<8x128xf32>
    %708 = vector.broadcast %13 : vector<1x128xf32> to vector<8x128xf32>
    %709 = arith.addf %707, %708 : vector<8x128xf32>
    %710 = vector.extract_strided_slice %709 {offsets = [0, 0], sizes = [8, 32], strides = [1, 1]} : vector<8x128xf32> to vector<8x32xf32>
    %711 = arith.negf %710 : vector<8x32xf32>
    %712 = math.exp %711 : vector<8x32xf32>
    %cst_203 = arith.constant 1.000000e+00 : f32
    %713 = vector.broadcast %cst_203 : f32 to vector<8x32xf32>
    %714 = arith.addf %713, %712 : vector<8x32xf32>
    %715 = arith.divf %713, %714 : vector<8x32xf32>
    %716 = vector.extract_strided_slice %709 {offsets = [0, 32], sizes = [8, 32], strides = [1, 1]} : vector<8x128xf32> to vector<8x32xf32>
    %717 = arith.negf %716 : vector<8x32xf32>
    %718 = math.exp %717 : vector<8x32xf32>
    %cst_204 = arith.constant 1.000000e+00 : f32
    %719 = vector.broadcast %cst_204 : f32 to vector<8x32xf32>
    %720 = arith.addf %719, %718 : vector<8x32xf32>
    %721 = arith.divf %719, %720 : vector<8x32xf32>
    %722 = vector.extract_strided_slice %709 {offsets = [0, 64], sizes = [8, 32], strides = [1, 1]} : vector<8x128xf32> to vector<8x32xf32>
    %723 = math.tanh %722 : vector<8x32xf32>
    %724 = vector.extract_strided_slice %709 {offsets = [0, 96], sizes = [8, 32], strides = [1, 1]} : vector<8x128xf32> to vector<8x32xf32>
    %725 = arith.negf %724 : vector<8x32xf32>
    %726 = math.exp %725 : vector<8x32xf32>
    %cst_205 = arith.constant 1.000000e+00 : f32
    %727 = vector.broadcast %cst_205 : f32 to vector<8x32xf32>
    %728 = arith.addf %727, %726 : vector<8x32xf32>
    %729 = arith.divf %727, %728 : vector<8x32xf32>
    %730 = arith.mulf %721, %662 : vector<8x32xf32>
    %731 = arith.mulf %715, %723 : vector<8x32xf32>
    %732 = arith.addf %730, %731 : vector<8x32xf32>
    %733 = math.tanh %732 : vector<8x32xf32>
    %734 = arith.mulf %729, %733 : vector<8x32xf32>
    %c0_i32_206 = arith.constant 0 : i32
    %735 = arith.cmpi sge, %704, %c0_i32_206 : i32
    %c8_i32_207 = arith.constant 8 : i32
    %736 = arith.cmpi slt, %704, %c8_i32_207 : i32
    %737 = arith.andi %735, %736 : i1
    %738 = arith.addi %14, %704 : i32
    %c8_i32_208 = arith.constant 8 : i32
    %739 = arith.cmpi slt, %738, %c8_i32_208 : i32
    %740 = arith.andi %737, %739 : i1
    %741 = arith.select %740, %734, %661 : vector<8x32xf32>
    %742 = arith.select %740, %732, %662 : vector<8x32xf32>
    %c9_i32 = arith.constant 9 : i32
    %c0_209 = arith.constant 0 : index
    %c0_210 = arith.constant 0 : index
    %c0_211 = arith.constant 0 : index
    %743 = vector.load %arg12[%c0_209, %c0_210, %c0_211] : memref<2x8x32xf32, #tpu.memory_space<vmem>>, vector<1x8x32xf32>
    %744 = vector.shape_cast %743 : vector<1x8x32xf32> to vector<8x32xf32>
    %745 = vector.shape_cast %702 : vector<8x32xf32> to vector<1x8x32xf32>
    tpu.vector_store %arg12[%c0_209, %c0_210, %c0_211], %745 {strides = array<i32>} : memref<2x8x32xf32, #tpu.memory_space<vmem>>, vector<1x8x32xf32>,
    %c0_212 = arith.constant 0 : index
    %c0_213 = arith.constant 0 : index
    %c0_214 = arith.constant 0 : index
    %746 = vector.load %arg13[%c0_212, %c0_213, %c0_214] : memref<2x8x32xf32, #tpu.memory_space<vmem>>, vector<1x8x32xf32>
    %747 = vector.shape_cast %746 : vector<1x8x32xf32> to vector<8x32xf32>
    %748 = vector.shape_cast %703 : vector<8x32xf32> to vector<1x8x32xf32>
    tpu.vector_store %arg13[%c0_212, %c0_213, %c0_214], %748 {strides = array<i32>} : memref<2x8x32xf32, #tpu.memory_space<vmem>>, vector<1x8x32xf32>,
    %c1_215 = arith.constant 1 : index
    %c0_216 = arith.constant 0 : index
    %c0_217 = arith.constant 0 : index
    %749 = vector.load %arg12[%c1_215, %c0_216, %c0_217] : memref<2x8x32xf32, #tpu.memory_space<vmem>>, vector<1x8x32xf32>
    %750 = vector.shape_cast %749 : vector<1x8x32xf32> to vector<8x32xf32>
    %751 = vector.shape_cast %741 : vector<8x32xf32> to vector<1x8x32xf32>
    tpu.vector_store %arg12[%c1_215, %c0_216, %c0_217], %751 {strides = array<i32>} : memref<2x8x32xf32, #tpu.memory_space<vmem>>, vector<1x8x32xf32>,
    %c1_218 = arith.constant 1 : index
    %c0_219 = arith.constant 0 : index
    %c0_220 = arith.constant 0 : index
    %752 = vector.load %arg13[%c1_218, %c0_219, %c0_220] : memref<2x8x32xf32, #tpu.memory_space<vmem>>, vector<1x8x32xf32>
    %753 = vector.shape_cast %752 : vector<1x8x32xf32> to vector<8x32xf32>
    %754 = vector.shape_cast %742 : vector<8x32xf32> to vector<1x8x32xf32>
    tpu.vector_store %arg13[%c1_218, %c0_219, %c0_220], %754 {strides = array<i32>} : memref<2x8x32xf32, #tpu.memory_space<vmem>>, vector<1x8x32xf32>,
    %c0_i32_221 = arith.constant 0 : i32
    %755 = arith.cmpi eq, %arg0, %c0_i32_221 : i32
    %756 = arith.extui %755 : i1 to i32
    %c0_i32_222 = arith.constant 0 : i32
    %757 = arith.cmpi ne, %756, %c0_i32_222 : i32
    scf.if %757 {
      %c0_223 = arith.constant 0 : index
      %c0_224 = arith.constant 0 : index
      %758 = vector.load %arg8[%c0_223, %c0_224] : memref<1x32xf32, #tpu.memory_space<vmem>>, vector<1x32xf32>
      %759 = vector.broadcast %758 : vector<1x32xf32> to vector<8x32xf32>
      %760 = arith.mulf %741, %759 : vector<8x32xf32>
      %cst_225 = arith.constant dense<0.000000e+00> : vector<8xf32>
      %761 = vector.multi_reduction <add>, %760, %cst_225 [1] : vector<8x32xf32> to vector<8xf32>
      %762 = vector.shape_cast %761 : vector<8xf32> to vector<8x1xf32>
      %c0_226 = arith.constant 0 : index
      %c0_227 = arith.constant 0 : index
      %763 = vector.load %arg9[%c0_226, %c0_227] : memref<1x1xf32, #tpu.memory_space<vmem>>, vector<1x1xf32>
      %764 = vector.broadcast %763 : vector<1x1xf32> to vector<8x1xf32>
      %765 = arith.addf %762, %764 : vector<8x1xf32>
      %cst_228 = arith.constant 0.000000e+00 : f32
      %766 = vector.broadcast %cst_228 : f32 to vector<8x1xf32>
      %767 = arith.maximumf %765, %766 : vector<8x1xf32>
      %c0_229 = arith.constant 0 : index
      %c0_230 = arith.constant 0 : index
      %768 = vector.load %arg10[%c0_229, %c0_230] : memref<8x1xf32, #tpu.memory_space<vmem>>, vector<8x1xf32>
      tpu.vector_store %arg10[%c0_229, %c0_230], %767 {strides = array<i32>} : memref<8x1xf32, #tpu.memory_space<vmem>>, vector<8x1xf32>,
    } else {
    }
    return
  }
  func.func @transform_0(%arg0: i32) -> (i32, i32) {
    %c0_i32 = arith.constant 0 : i32
    %c0_i32_0 = arith.constant 0 : i32
    return %arg0, %c0_i32 : i32, i32
  }
  func.func @transform_1(%arg0: i32) -> (i32, i32) {
    %c0_i32 = arith.constant 0 : i32
    %c0_i32_0 = arith.constant 0 : i32
    %c0_i32_1 = arith.constant 0 : i32
    return %c0_i32, %c0_i32_0 : i32, i32
  }
  func.func @transform_2(%arg0: i32) -> (i32, i32) {
    %c0_i32 = arith.constant 0 : i32
    %c0_i32_0 = arith.constant 0 : i32
    %c0_i32_1 = arith.constant 0 : i32
    return %c0_i32, %c0_i32_0 : i32, i32
  }
  func.func @transform_3(%arg0: i32) -> (i32, i32) {
    %c0_i32 = arith.constant 0 : i32
    %c0_i32_0 = arith.constant 0 : i32
    %c0_i32_1 = arith.constant 0 : i32
    return %c0_i32, %c0_i32_0 : i32, i32
  }
  func.func @transform_4(%arg0: i32) -> (i32, i32) {
    %c0_i32 = arith.constant 0 : i32
    %c0_i32_0 = arith.constant 0 : i32
    %c0_i32_1 = arith.constant 0 : i32
    return %c0_i32, %c0_i32_0 : i32, i32
  }
  func.func @transform_5(%arg0: i32) -> (i32, i32) {
    %c0_i32 = arith.constant 0 : i32
    %c0_i32_0 = arith.constant 0 : i32
    %c0_i32_1 = arith.constant 0 : i32
    return %c0_i32, %c0_i32_0 : i32, i32
  }
  func.func @transform_6(%arg0: i32) -> (i32, i32) {
    %c0_i32 = arith.constant 0 : i32
    %c0_i32_0 = arith.constant 0 : i32
    %c0_i32_1 = arith.constant 0 : i32
    return %c0_i32, %c0_i32_0 : i32, i32
  }
  func.func @transform_7(%arg0: i32) -> (i32, i32) {
    %c0_i32 = arith.constant 0 : i32
    %c0_i32_0 = arith.constant 0 : i32
    %c0_i32_1 = arith.constant 0 : i32
    return %c0_i32, %c0_i32_0 : i32, i32
  }
  func.func @transform_8(%arg0: i32) -> (i32, i32) {
    %c0_i32 = arith.constant 0 : i32
    %c0_i32_0 = arith.constant 0 : i32
    %c0_i32_1 = arith.constant 0 : i32
    return %c0_i32, %c0_i32_0 : i32, i32
  }
  func.func @transform_9(%arg0: i32) -> (i32, i32) {
    %c0_i32 = arith.constant 0 : i32
    %c0_i32_0 = arith.constant 0 : i32
    %c0_i32_1 = arith.constant 0 : i32
    return %c0_i32, %c0_i32_0 : i32, i32
  }
}

</mosaic_0001>

<llo_original>
// kernel: lstm1_forward_impl.1
$region0: #{lstm1_forward_impl.1}
  #allocation0 [shape = 'u32[]', space=smem, size = 0x4, offset = 0x4, fixed_abs, tag = 'smem constant byte address 0x4 - core index']
  #allocation1 [shape = 'u32[144,128]{1,0:T(1,128)}', space=vmem, size = 0x12000, scoped, tag = 'internal scratch']
  #allocation2 [shape = 'f32[64,128]{1,0:T(8,128)}', space=vmem, size = 0x8000, scoped, tag = 'scratch operand']
  #allocation3 [shape = 'f32[2,8,32]{2,1,0:T(8,128)}', space=vmem, size = 0x2000, scoped, tag = 'scratch operand']
  #allocation4 [shape = 'f32[2,8,32]{2,1,0:T(8,128)}', space=vmem, size = 0x2000, scoped, tag = 'scratch operand']
  #allocation5 [shape = 'f32[1,1]{1,0:T(1,128)S(1)}', space=vmem, size = 0x200, scoped, tag = 'scoped memory for lstm1_forward_impl.1']
  %s0 = inlined_call_operand.vmem [shape: f32[64,4], index: 0, kind: input, shape index: {}]
  %s1 = inlined_call_operand.vmem [shape: f32[4,128], index: 1, kind: input, shape index: {}]
  %s2 = inlined_call_operand.vmem [shape: f32[32,128], index: 2, kind: input, shape index: {}]
  %s3 = inlined_call_operand.vmem [shape: f32[1,128], index: 3, kind: input, shape index: {}]
  %s4 = inlined_call_operand.vmem [shape: f32[32,128], index: 4, kind: input, shape index: {}]
  %s5 = inlined_call_operand.vmem [shape: f32[32,128], index: 5, kind: input, shape index: {}]
  %s6 = inlined_call_operand.vmem [shape: f32[1,128], index: 6, kind: input, shape index: {}]
  %s7 = inlined_call_operand.vmem [shape: f32[1,32], index: 7, kind: input, shape index: {}]
  %s8 = inlined_call_operand.<no memory space> [shape: f32[1,1], index: 8, kind: input, shape index: {}]
  %s9 = inlined_call_operand.vmem [shape: f32[8,1], index: 9, kind: output, shape index: {}]
  %s10 = sld [smem:[#allocation0]]
  $region54: #{lstm1_forward_impl.1} parent=0
    _
  %s12 = ssub.s32 1, %s10
  %s13 = scalar_select 0, %s12, %s10
  %v14 = vstv %s8
  %15 = vst [vmem:[#allocation5] sm:$0x1] %v14
  // Predicated region
  $region2: #{lstm1_forward_impl.1} parent=0 // pred_check
    _
  $region3: #{lstm1_forward_impl.1} parent=0 // pred_check_branch
    %17 = sbr.rel (0) target = $region5
  $region4: #{lstm1_forward_impl.1} parent=0 // pred_region
    _
  $region5: #{lstm1_forward_impl.1} parent=0 // pred_fallthru
    _
  // Predicated region
  $region6: #{lstm1_forward_impl.1} parent=0 // pred_check
    _
  $region7: #{lstm1_forward_impl.1} parent=0 // pred_check_branch
    %19 = sbr.rel (0) target = $region9
  $region8: #{lstm1_forward_impl.1} parent=0 // pred_region
    _
  $region9: #{lstm1_forward_impl.1} parent=0 // pred_fallthru
    _
  // Predicated region
  $region10: #{lstm1_forward_impl.1} parent=0 // pred_check
    _
  $region11: #{lstm1_forward_impl.1} parent=0 // pred_check_branch
    %21 = sbr.rel (0) target = $region13
  $region12: #{lstm1_forward_impl.1} parent=0 // pred_region
    _
  $region13: #{lstm1_forward_impl.1} parent=0 // pred_fallthru
    _
  // Predicated region
  $region14: #{lstm1_forward_impl.1} parent=0 // pred_check
    _
  $region15: #{lstm1_forward_impl.1} parent=0 // pred_check_branch
    %23 = sbr.rel (0) target = $region17
  $region16: #{lstm1_forward_impl.1} parent=0 // pred_region
    _
  $region17: #{lstm1_forward_impl.1} parent=0 // pred_fallthru
    _
  // Predicated region
  $region18: #{lstm1_forward_impl.1} parent=0 // pred_check
    _
  $region19: #{lstm1_forward_impl.1} parent=0 // pred_check_branch
    %25 = sbr.rel (0) target = $region21
  $region20: #{lstm1_forward_impl.1} parent=0 // pred_region
    _
  $region21: #{lstm1_forward_impl.1} parent=0 // pred_fallthru
    _
  // Predicated region
  $region22: #{lstm1_forward_impl.1} parent=0 // pred_check
    _
  $region23: #{lstm1_forward_impl.1} parent=0 // pred_check_branch
    %27 = sbr.rel (0) target = $region25
  $region24: #{lstm1_forward_impl.1} parent=0 // pred_region
    _
  $region25: #{lstm1_forward_impl.1} parent=0 // pred_fallthru
    _
  // Predicated region
  $region26: #{lstm1_forward_impl.1} parent=0 // pred_check
    _
  $region27: #{lstm1_forward_impl.1} parent=0 // pred_check_branch
    %29 = sbr.rel (0) target = $region29
  $region28: #{lstm1_forward_impl.1} parent=0 // pred_region
    _
  $region29: #{lstm1_forward_impl.1} parent=0 // pred_fallthru
    _
  // Predicated region
  $region30: #{lstm1_forward_impl.1} parent=0 // pred_check
    _
  $region31: #{lstm1_forward_impl.1} parent=0 // pred_check_branch
    %31 = sbr.rel (0) target = $region33
  $region32: #{lstm1_forward_impl.1} parent=0 // pred_region
    _
  $region33: #{lstm1_forward_impl.1} parent=0 // pred_fallthru
    _
  // Predicated region
  $region34: #{lstm1_forward_impl.1} parent=0 // pred_check
    _
  $region35: #{lstm1_forward_impl.1} parent=0 // pred_check_branch
    %33 = sbr.rel (0) target = $region37
  $region36: #{lstm1_forward_impl.1} parent=0 // pred_region
    _
  $region37: #{lstm1_forward_impl.1} parent=0 // pred_fallthru
    _
  %p34 = scmp.eq.s32.totalorder 0, 0
  // Predicated region
  $region38: #{lstm1_forward_impl.1} parent=0 // pred_check
    %p35 = pneg %p34
  $region39: #{lstm1_forward_impl.1} parent=0 // pred_check_branch
    %37 = sbr.rel (%p35) target = $region41
  $region40: #{lstm1_forward_impl.1} parent=0 // pred_region
    %vm38 = vcmask 261120
    %39 = vst.msk [vmem:[#allocation3] sm:$0xff] %vm38, 0.0
    %40 = vst.msk [vmem:[#allocation3 + $0x8] sm:$0xff] %vm38, 0.0
    %41 = vst.msk [vmem:[#allocation4] sm:$0xff] %vm38, 0.0
    %42 = vst.msk [vmem:[#allocation4 + $0x8] sm:$0xff] %vm38, 0.0
  $region41: #{lstm1_forward_impl.1} parent=0 // pred_fallthru
    _
  %v43 = vld [vmem:[%s0] sm:$0xff]
  %v44 = vld [vmem:[%s0 + $0x8] sm:$0xff]
  %v45 = vld [vmem:[%s0 + $0x10] sm:$0xff]
  %v46 = vld [vmem:[%s0 + $0x18] sm:$0xff]
  %v47 = vld [vmem:[%s0 + $0x20] sm:$0xff]
  %v48 = vld [vmem:[%s0 + $0x28] sm:$0xff]
  %v49 = vld [vmem:[%s0 + $0x30] sm:$0xff]
  %v50 = vld [vmem:[%s0 + $0x38] sm:$0xff]
  %v51 = vld [vmem:[%s1] sm:$0xf]
  %v52 = vld [vmem:[%s3] sm:$0x1]
  %v54 = vlaneseq
  %v55 = vshrl.u32 %v54, 7
  %v56 = vsub.s32 0, %v55
  %v57 = vrot.slane %v52, %v56
  %vm59 = vcmask 31744
  %v61 = vsel %vm59, %v43, 0
  %v64 = vsel %vm59, %v44, 0
  %v67 = vsel %vm59, %v45, 0
  %v70 = vsel %vm59, %v46, 0
  %v73 = vsel %vm59, %v47, 0
  %v76 = vsel %vm59, %v48, 0
  %v79 = vsel %vm59, %v49, 0
  %v82 = vsel %vm59, %v50, 0
  %vm84 = vcmask 1043456
  %v86 = vsel %vm84, %v51, 0
  %88 = vmatprep.subr.mxu0 0.0
  %89 = vmatpush1.msra.mxu0 0.0
  %90 = vmatprep.subr.mxu0 0.0
  %91 = vmatpush1.msra.mxu0 0.0
  %92 = vmatprep.subr.mxu0 0.0
  %93 = vmatpush1.msra.mxu0 0.0
  %94 = vmatprep.subr.mxu0 0.0
  %95 = vmatpush1.msra.mxu0 0.0
  %96 = vmatprep.subr.mxu0 0.0
  %97 = vmatpush1.msra.mxu0 0.0
  %98 = vmatprep.subr.mxu0 0.0
  %99 = vmatpush1.msra.mxu0 0.0
  %100 = vmatprep.subr.mxu0 0.0
  %101 = vmatpush1.msra.mxu0 0.0
  %102 = vmatprep.subr.mxu0 0.0
  %103 = vmatpush1.msra.mxu0 0.0
  %104 = vmatprep.subr.mxu0 0.0
  %105 = vmatpush1.msra.mxu0 0.0
  %106 = vmatprep.subr.mxu0 0.0
  %107 = vmatpush1.msra.mxu0 0.0
  %108 = vmatprep.subr.mxu0 0.0
  %109 = vmatpush1.msra.mxu0 0.0
  %110 = vmatprep.subr.mxu0 0.0
  %111 = vmatpush1.msra.mxu0 0.0
  %112 = vmatprep.subr.mxu0 0.0
  %113 = vmatpush1.msra.mxu0 0.0
  %114 = vmatprep.subr.mxu0 0.0
  %115 = vmatpush1.msra.mxu0 0.0
  %116 = vmatprep.subr.mxu0 0.0
  %117 = vmatpush1.msra.mxu0 0.0
  %118 = vmatprep.subr.mxu0 0.0
  %119 = vmatpush1.msra.mxu0 %v86
  %120 = vmatprep.subr.mxu0 0.0
  %121 = vmatpush2.msra.mxu0 0.0
  %122 = vmatprep.subr.mxu0 0.0
  %123 = vmatpush2.msra.mxu0 0.0
  %124 = vmatprep.subr.mxu0 0.0
  %125 = vmatpush2.msra.mxu0 0.0
  %126 = vmatprep.subr.mxu0 0.0
  %127 = vmatpush2.msra.mxu0 0.0
  %128 = vmatprep.subr.mxu0 0.0
  %129 = vmatpush2.msra.mxu0 0.0
  %130 = vmatprep.subr.mxu0 0.0
  %131 = vmatpush2.msra.mxu0 0.0
  %132 = vmatprep.subr.mxu0 0.0
  %133 = vmatpush2.msra.mxu0 0.0
  %134 = vmatprep.subr.mxu0 0.0
  %135 = vmatpush2.msra.mxu0 0.0
  %136 = vmatprep.subr.mxu0 0.0
  %137 = vmatpush2.msra.mxu0 0.0
  %138 = vmatprep.subr.mxu0 0.0
  %139 = vmatpush2.msra.mxu0 0.0
  %140 = vmatprep.subr.mxu0 0.0
  %141 = vmatpush2.msra.mxu0 0.0
  %142 = vmatprep.subr.mxu0 0.0
  %143 = vmatpush2.msra.mxu0 0.0
  %144 = vmatprep.subr.mxu0 0.0
  %145 = vmatpush2.msra.mxu0 0.0
  %146 = vmatprep.subr.mxu0 0.0
  %147 = vmatpush2.msra.mxu0 0.0
  %148 = vmatprep.subr.mxu0 0.0
  %149 = vmatpush2.msra.mxu0 0.0
  %150 = vmatprep.subr.mxu0 0.0
  %151 = vmatpush2.msra.mxu0 0.0
  %152 = vmatprep.mubr.f32.mxu0 0.0
  %153 = vmatmul.mubr.f32.gmra.mxu0 %v61
  %v154 = vpop.f32.mrf.mxu0
  %v155 = vadd.f32 %v57, %v154
  %v156 = vpop.f32.mrf.mxu0
  %157 = vmatprep.mubr.f32.mxu0 0.0
  %158 = vmatmul.mubr.f32.gmra.mxu0 %v64
  %v159 = vpop.f32.mrf.mxu0
  %v160 = vadd.f32 %v57, %v159
  %v161 = vpop.f32.mrf.mxu0
  %162 = vmatprep.mubr.f32.mxu0 0.0
  %163 = vmatmul.mubr.f32.gmra.mxu0 %v67
  %v164 = vpop.f32.mrf.mxu0
  %v165 = vadd.f32 %v57, %v164
  %v166 = vpop.f32.mrf.mxu0
  %167 = vmatprep.mubr.f32.mxu0 0.0
  %168 = vmatmul.mubr.f32.gmra.mxu0 %v70
  %v169 = vpop.f32.mrf.mxu0
  %v170 = vadd.f32 %v57, %v169
  %v171 = vpop.f32.mrf.mxu0
  %172 = vmatprep.mubr.f32.mxu0 0.0
  %173 = vmatmul.mubr.f32.gmra.mxu0 %v73
  %v174 = vpop.f32.mrf.mxu0
  %v175 = vadd.f32 %v57, %v174
  %v176 = vpop.f32.mrf.mxu0
  %177 = vmatprep.mubr.f32.mxu0 0.0
  %178 = vmatmul.mubr.f32.gmra.mxu0 %v76
  %v179 = vpop.f32.mrf.mxu0
  %v180 = vadd.f32 %v57, %v179
  %v181 = vpop.f32.mrf.mxu0
  %182 = vmatprep.mubr.f32.mxu0 0.0
  %183 = vmatmul.mubr.f32.gmra.mxu0 %v79
  %v184 = vpop.f32.mrf.mxu0
  %v185 = vadd.f32 %v57, %v184
  %v186 = vpop.f32.mrf.mxu0
  %187 = vmatprep.mubr.f32.mxu0 0.0
  %188 = vmatmul.mubr.f32.gmra.mxu0 %v82
  %v189 = vpop.f32.mrf.mxu0
  %v190 = vadd.f32 %v57, %v189
  %v191 = vpop.f32.mrf.mxu0
  %192 = vdwg.mxu0
  %193 = vst [vmem:[#allocation2] sm:$0xff] %v155
  %194 = vst [vmem:[#allocation2 + $0x8] sm:$0xff] %v160
  %195 = vst [vmem:[#allocation2 + $0x10] sm:$0xff] %v165
  %196 = vst [vmem:[#allocation2 + $0x18] sm:$0xff] %v170
  %197 = vst [vmem:[#allocation2 + $0x20] sm:$0xff] %v175
  %198 = vst [vmem:[#allocation2 + $0x28] sm:$0xff] %v180
  %199 = vst [vmem:[#allocation2 + $0x30] sm:$0xff] %v185
  %200 = vst [vmem:[#allocation2 + $0x38] sm:$0xff] %v190
  %v201 = vld [vmem:[%s2] sm:$0xff]
  %v202 = vld [vmem:[%s2 + $0x8] sm:$0xff]
  %v203 = vld [vmem:[%s2 + $0x10] sm:$0xff]
  %v204 = vld [vmem:[%s2 + $0x18] sm:$0xff]
  %v205 = vld [vmem:[%s5] sm:$0xff]
  %v206 = vld [vmem:[%s5 + $0x8] sm:$0xff]
  %v207 = vld [vmem:[%s5 + $0x10] sm:$0xff]
  %v208 = vld [vmem:[%s5 + $0x18] sm:$0xff]
  %v209 = vld [vmem:[%s4] sm:$0xff]
  %v210 = vld [vmem:[%s4 + $0x8] sm:$0xff]
  %v211 = vld [vmem:[%s4 + $0x10] sm:$0xff]
  %v212 = vld [vmem:[%s4 + $0x18] sm:$0xff]
  %v213 = vld [vmem:[%s6] sm:$0x1]
  %s214 = smul.u32 0, 8
  %v215 = vld [vmem:[#allocation3] sm:$0xff]
  %s216 = scalar_lea.vmem [#allocation3], 8
  %v217 = vld [vmem:[%s216] sm:$0xff]
  %v218 = vld [vmem:[#allocation4] sm:$0xff]
  %s219 = scalar_lea.vmem [#allocation4], 8
  %v220 = vld [vmem:[%s219] sm:$0xff]
  %v221 = vld [vmem:[#allocation2] sm:$0xff]
  %vm222 = vcmask 261120
  %v224 = vsel %vm222, %v215, 0
  %226 = vmatprep.subr.mxu0 0.0
  %227 = vmatpush1.msra.mxu0 0.0
  %228 = vmatprep.subr.mxu0 0.0
  %229 = vmatpush1.msra.mxu0 0.0
  %230 = vmatprep.subr.mxu0 0.0
  %231 = vmatpush1.msra.mxu0 0.0
  %232 = vmatprep.subr.mxu0 0.0
  %233 = vmatpush1.msra.mxu0 0.0
  %234 = vmatprep.subr.mxu0 0.0
  %235 = vmatpush1.msra.mxu0 0.0
  %236 = vmatprep.subr.mxu0 0.0
  %237 = vmatpush1.msra.mxu0 0.0
  %238 = vmatprep.subr.mxu0 0.0
  %239 = vmatpush1.msra.mxu0 0.0
  %240 = vmatprep.subr.mxu0 0.0
  %241 = vmatpush1.msra.mxu0 0.0
  %242 = vmatprep.subr.mxu0 0.0
  %243 = vmatpush1.msra.mxu0 0.0
  %244 = vmatprep.subr.mxu0 0.0
  %245 = vmatpush1.msra.mxu0 0.0
  %246 = vmatprep.subr.mxu0 0.0
  %247 = vmatpush1.msra.mxu0 0.0
  %248 = vmatprep.subr.mxu0 0.0
  %249 = vmatpush1.msra.mxu0 0.0
  %250 = vmatprep.subr.mxu0 0.0
  %251 = vmatpush1.msra.mxu0 %v204
  %252 = vmatprep.subr.mxu0 0.0
  %253 = vmatpush1.msra.mxu0 %v203
  %254 = vmatprep.subr.mxu0 0.0
  %255 = vmatpush1.msra.mxu0 %v202
  %256 = vmatprep.subr.mxu0 0.0
  %257 = vmatpush1.msra.mxu0 %v201
  %258 = vmatprep.subr.mxu0 0.0
  %259 = vmatpush2.msra.mxu0 0.0
  %260 = vmatprep.subr.mxu0 0.0
  %261 = vmatpush2.msra.mxu0 0.0
  %262 = vmatprep.subr.mxu0 0.0
  %263 = vmatpush2.msra.mxu0 0.0
  %264 = vmatprep.subr.mxu0 0.0
  %265 = vmatpush2.msra.mxu0 0.0
  %266 = vmatprep.subr.mxu0 0.0
  %267 = vmatpush2.msra.mxu0 0.0
  %268 = vmatprep.subr.mxu0 0.0
  %269 = vmatpush2.msra.mxu0 0.0
  %270 = vmatprep.subr.mxu0 0.0
  %271 = vmatpush2.msra.mxu0 0.0
  %272 = vmatprep.subr.mxu0 0.0
  %273 = vmatpush2.msra.mxu0 0.0
  %274 = vmatprep.subr.mxu0 0.0
  %275 = vmatpush2.msra.mxu0 0.0
  %276 = vmatprep.subr.mxu0 0.0
  %277 = vmatpush2.msra.mxu0 0.0
  %278 = vmatprep.subr.mxu0 0.0
  %279 = vmatpush2.msra.mxu0 0.0
  %280 = vmatprep.subr.mxu0 0.0
  %281 = vmatpush2.msra.mxu0 0.0
  %282 = vmatprep.subr.mxu0 0.0
  %283 = vmatpush2.msra.mxu0 0.0
  %284 = vmatprep.subr.mxu0 0.0
  %285 = vmatpush2.msra.mxu0 0.0
  %286 = vmatprep.subr.mxu0 0.0
  %287 = vmatpush2.msra.mxu0 0.0
  %288 = vmatprep.subr.mxu0 0.0
  %289 = vmatpush2.msra.mxu0 0.0
  %290 = vmatprep.mubr.f32.mxu0 0.0
  %291 = vmatmul.mubr.f32.gmra.mxu0 %v224
  %v292 = vpop.f32.mrf.mxu0
  %v293 = vadd.f32 0.0, %v292
  %v294 = vpop.f32.mrf.mxu0
  %295 = vdwg.mxu0
  %v296 = vadd.f32 %v221, %v293
  %v297 = vxor.u32 %v296, 2147483648
  %v298 = vmul.f32 %v297, 1.442695
  %v299 = vpow.pop %v298
  %v300 = vadd.f32 %v299, 1.0
  %v301 = vrcp.pop %v300
  %v302 = vmul.f32 1.0, %v301
  %v303 = vtanh.pop %v296
  %305 = vrot.lane.b32.xlu0 %v218, 32
  %v306 = vpop.permute.xlu0 %305
  %v308 = vmul.f32 %v302, %v306
  %310 = vrot.lane.b32.xlu0 %v303, 64
  %v311 = vpop.permute.xlu0 %310
  %v313 = vmul.f32 %v302, %v311
  %315 = vrot.lane.b32.xlu0 %v313, 32
  %v316 = vpop.permute.xlu0 %315
  %v318 = vadd.f32 %v308, %v316
  %v319 = vtanh.pop %v318
  %321 = vrot.lane.b32.xlu0 %v319, 64
  %v322 = vpop.permute.xlu0 %321
  %v324 = vmul.f32 %v302, %v322
  %p325 = scmp.lt.s32.totalorder %s214, 8
  %s326 = scalar_select %p325, 1, 0
  %v327 = vstv %s326
  %vm328 = vcmp.eq.s32.totalorder %v327, 1
  %329 = vrot.lane.b32.xlu0 %v215, 96
  %v330 = vpop.permute.xlu0 %329
  %v332 = vsel %vm328, %v324, %v330
  %v333 = vsel %vm328, %v318, %v306
  %s334 = scalar_lea.vmem [#allocation2], 8
  %v335 = vld [vmem:[%s334] sm:$0xff]
  %337 = vrot.lane.b32.xlu0 %v332, 32
  %v338 = vpop.permute.xlu0 %337
  %v339 = vsel %vm222, %v338, 0
  %341 = vmatprep.subr.mxu0 0.0
  %342 = vmatpush1.msra.mxu0 0.0
  %343 = vmatprep.subr.mxu0 0.0
  %344 = vmatpush1.msra.mxu0 0.0
  %345 = vmatprep.subr.mxu0 0.0
  %346 = vmatpush1.msra.mxu0 0.0
  %347 = vmatprep.subr.mxu0 0.0
  %348 = vmatpush1.msra.mxu0 0.0
  %349 = vmatprep.subr.mxu0 0.0
  %350 = vmatpush1.msra.mxu0 0.0
  %351 = vmatprep.subr.mxu0 0.0
  %352 = vmatpush1.msra.mxu0 0.0
  %353 = vmatprep.subr.mxu0 0.0
  %354 = vmatpush1.msra.mxu0 0.0
  %355 = vmatprep.subr.mxu0 0.0
  %356 = vmatpush1.msra.mxu0 0.0
  %357 = vmatprep.subr.mxu0 0.0
  %358 = vmatpush1.msra.mxu0 0.0
  %359 = vmatprep.subr.mxu0 0.0
  %360 = vmatpush1.msra.mxu0 0.0
  %361 = vmatprep.subr.mxu0 0.0
  %362 = vmatpush1.msra.mxu0 0.0
  %363 = vmatprep.subr.mxu0 0.0
  %364 = vmatpush1.msra.mxu0 0.0
  %365 = vmatprep.subr.mxu0 0.0
  %366 = vmatpush1.msra.mxu0 %v204
  %367 = vmatprep.subr.mxu0 0.0
  %368 = vmatpush1.msra.mxu0 %v203
  %369 = vmatprep.subr.mxu0 0.0
  %370 = vmatpush1.msra.mxu0 %v202
  %371 = vmatprep.subr.mxu0 0.0
  %372 = vmatpush1.msra.mxu0 %v201
  %373 = vmatprep.subr.mxu0 0.0
  %374 = vmatpush2.msra.mxu0 0.0
  %375 = vmatprep.subr.mxu0 0.0
  %376 = vmatpush2.msra.mxu0 0.0
  %377 = vmatprep.subr.mxu0 0.0
  %378 = vmatpush2.msra.mxu0 0.0
  %379 = vmatprep.subr.mxu0 0.0
  %380 = vmatpush2.msra.mxu0 0.0
  %381 = vmatprep.subr.mxu0 0.0
  %382 = vmatpush2.msra.mxu0 0.0
  %383 = vmatprep.subr.mxu0 0.0
  %384 = vmatpush2.msra.mxu0 0.0
  %385 = vmatprep.subr.mxu0 0.0
  %386 = vmatpush2.msra.mxu0 0.0
  %387 = vmatprep.subr.mxu0 0.0
  %388 = vmatpush2.msra.mxu0 0.0
  %389 = vmatprep.subr.mxu0 0.0
  %390 = vmatpush2.msra.mxu0 0.0
  %391 = vmatprep.subr.mxu0 0.0
  %392 = vmatpush2.msra.mxu0 0.0
  %393 = vmatprep.subr.mxu0 0.0
  %394 = vmatpush2.msra.mxu0 0.0
  %395 = vmatprep.subr.mxu0 0.0
  %396 = vmatpush2.msra.mxu0 0.0
  %397 = vmatprep.subr.mxu0 0.0
  %398 = vmatpush2.msra.mxu0 0.0
  %399 = vmatprep.subr.mxu0 0.0
  %400 = vmatpush2.msra.mxu0 0.0
  %401 = vmatprep.subr.mxu0 0.0
  %402 = vmatpush2.msra.mxu0 0.0
  %403 = vmatprep.subr.mxu0 0.0
  %404 = vmatpush2.msra.mxu0 0.0
  %405 = vmatprep.mubr.f32.mxu0 0.0
  %406 = vmatmul.mubr.f32.gmra.mxu0 %v339
  %v407 = vpop.f32.mrf.mxu0
  %v408 = vadd.f32 0.0, %v407
  %v409 = vpop.f32.mrf.mxu0
  %410 = vdwg.mxu0
  %v411 = vadd.f32 %v335, %v408
  %v412 = vxor.u32 %v411, 2147483648
  %v413 = vmul.f32 %v412, 1.442695
  %v414 = vpow.pop %v413
  %v415 = vadd.f32 %v414, 1.0
  %v416 = vrcp.pop %v415
  %v417 = vmul.f32 1.0, %v416
  %v418 = vtanh.pop %v411
  %v419 = vmul.f32 %v417, %v333
  %421 = vrot.lane.b32.xlu0 %v418, 64
  %v422 = vpop.permute.xlu0 %421
  %v424 = vmul.f32 %v417, %v422
  %426 = vrot.lane.b32.xlu0 %v424, 32
  %v427 = vpop.permute.xlu0 %426
  %v429 = vadd.f32 %v419, %v427
  %v430 = vtanh.pop %v429
  %432 = vrot.lane.b32.xlu0 %v430, 64
  %v433 = vpop.permute.xlu0 %432
  %v435 = vmul.f32 %v417, %v433
  %s436 = sadd.s32 %s214, 1
  %p437 = scmp.lt.s32.totalorder %s436, 8
  %s438 = scalar_select %p437, 1, 0
  %v439 = vstv %s438
  %vm440 = vcmp.eq.s32.totalorder %v439, 1
  %v441 = vsel %vm440, %v435, %v332
  %v442 = vsel %vm440, %v429, %v333
  %v444 = vsel %vm222, %v217, 0
  %446 = vmatprep.subr.mxu0 0.0
  %447 = vmatpush1.msra.mxu0 0.0
  %448 = vmatprep.subr.mxu0 0.0
  %449 = vmatpush1.msra.mxu0 0.0
  %450 = vmatprep.subr.mxu0 0.0
  %451 = vmatpush1.msra.mxu0 0.0
  %452 = vmatprep.subr.mxu0 0.0
  %453 = vmatpush1.msra.mxu0 0.0
  %454 = vmatprep.subr.mxu0 0.0
  %455 = vmatpush1.msra.mxu0 0.0
  %456 = vmatprep.subr.mxu0 0.0
  %457 = vmatpush1.msra.mxu0 0.0
  %458 = vmatprep.subr.mxu0 0.0
  %459 = vmatpush1.msra.mxu0 0.0
  %460 = vmatprep.subr.mxu0 0.0
  %461 = vmatpush1.msra.mxu0 0.0
  %462 = vmatprep.subr.mxu0 0.0
  %463 = vmatpush1.msra.mxu0 0.0
  %464 = vmatprep.subr.mxu0 0.0
  %465 = vmatpush1.msra.mxu0 0.0
  %466 = vmatprep.subr.mxu0 0.0
  %467 = vmatpush1.msra.mxu0 0.0
  %468 = vmatprep.subr.mxu0 0.0
  %469 = vmatpush1.msra.mxu0 0.0
  %470 = vmatprep.subr.mxu0 0.0
  %471 = vmatpush1.msra.mxu0 %v208
  %472 = vmatprep.subr.mxu0 0.0
  %473 = vmatpush1.msra.mxu0 %v207
  %474 = vmatprep.subr.mxu0 0.0
  %475 = vmatpush1.msra.mxu0 %v206
  %476 = vmatprep.subr.mxu0 0.0
  %477 = vmatpush1.msra.mxu0 %v205
  %478 = vmatprep.subr.mxu0 0.0
  %479 = vmatpush2.msra.mxu0 0.0
  %480 = vmatprep.subr.mxu0 0.0
  %481 = vmatpush2.msra.mxu0 0.0
  %482 = vmatprep.subr.mxu0 0.0
  %483 = vmatpush2.msra.mxu0 0.0
  %484 = vmatprep.subr.mxu0 0.0
  %485 = vmatpush2.msra.mxu0 0.0
  %486 = vmatprep.subr.mxu0 0.0
  %487 = vmatpush2.msra.mxu0 0.0
  %488 = vmatprep.subr.mxu0 0.0
  %489 = vmatpush2.msra.mxu0 0.0
  %490 = vmatprep.subr.mxu0 0.0
  %491 = vmatpush2.msra.mxu0 0.0
  %492 = vmatprep.subr.mxu0 0.0
  %493 = vmatpush2.msra.mxu0 0.0
  %494 = vmatprep.subr.mxu0 0.0
  %495 = vmatpush2.msra.mxu0 0.0
  %496 = vmatprep.subr.mxu0 0.0
  %497 = vmatpush2.msra.mxu0 0.0
  %498 = vmatprep.subr.mxu0 0.0
  %499 = vmatpush2.msra.mxu0 0.0
  %500 = vmatprep.subr.mxu0 0.0
  %501 = vmatpush2.msra.mxu0 0.0
  %502 = vmatprep.subr.mxu0 0.0
  %503 = vmatpush2.msra.mxu0 0.0
  %504 = vmatprep.subr.mxu0 0.0
  %505 = vmatpush2.msra.mxu0 0.0
  %506 = vmatprep.subr.mxu0 0.0
  %507 = vmatpush2.msra.mxu0 0.0
  %508 = vmatprep.subr.mxu0 0.0
  %509 = vmatpush2.msra.mxu0 0.0
  %510 = vmatprep.mubr.f32.mxu0 0.0
  %511 = vmatmul.mubr.f32.gmra.mxu0 %v444
  %v512 = vpop.f32.mrf.mxu0
  %v513 = vadd.f32 0.0, %v512
  %v514 = vpop.f32.mrf.mxu0
  %515 = vdwg.mxu0
  %516 = vmatprep.subr.mxu0 0.0
  %517 = vmatpush1.msra.mxu0 0.0
  %518 = vmatprep.subr.mxu0 0.0
  %519 = vmatpush1.msra.mxu0 0.0
  %520 = vmatprep.subr.mxu0 0.0
  %521 = vmatpush1.msra.mxu0 0.0
  %522 = vmatprep.subr.mxu0 0.0
  %523 = vmatpush1.msra.mxu0 0.0
  %524 = vmatprep.subr.mxu0 0.0
  %525 = vmatpush1.msra.mxu0 0.0
  %526 = vmatprep.subr.mxu0 0.0
  %527 = vmatpush1.msra.mxu0 0.0
  %528 = vmatprep.subr.mxu0 0.0
  %529 = vmatpush1.msra.mxu0 0.0
  %530 = vmatprep.subr.mxu0 0.0
  %531 = vmatpush1.msra.mxu0 0.0
  %532 = vmatprep.subr.mxu0 0.0
  %533 = vmatpush1.msra.mxu0 0.0
  %534 = vmatprep.subr.mxu0 0.0
  %535 = vmatpush1.msra.mxu0 0.0
  %536 = vmatprep.subr.mxu0 0.0
  %537 = vmatpush1.msra.mxu0 0.0
  %538 = vmatprep.subr.mxu0 0.0
  %539 = vmatpush1.msra.mxu0 0.0
  %540 = vmatprep.subr.mxu0 0.0
  %541 = vmatpush1.msra.mxu0 %v212
  %542 = vmatprep.subr.mxu0 0.0
  %543 = vmatpush1.msra.mxu0 %v211
  %544 = vmatprep.subr.mxu0 0.0
  %545 = vmatpush1.msra.mxu0 %v210
  %546 = vmatprep.subr.mxu0 0.0
  %547 = vmatpush1.msra.mxu0 %v209
  %548 = vmatprep.subr.mxu0 0.0
  %549 = vmatpush2.msra.mxu0 0.0
  %550 = vmatprep.subr.mxu0 0.0
  %551 = vmatpush2.msra.mxu0 0.0
  %552 = vmatprep.subr.mxu0 0.0
  %553 = vmatpush2.msra.mxu0 0.0
  %554 = vmatprep.subr.mxu0 0.0
  %555 = vmatpush2.msra.mxu0 0.0
  %556 = vmatprep.subr.mxu0 0.0
  %557 = vmatpush2.msra.mxu0 0.0
  %558 = vmatprep.subr.mxu0 0.0
  %559 = vmatpush2.msra.mxu0 0.0
  %560 = vmatprep.subr.mxu0 0.0
  %561 = vmatpush2.msra.mxu0 0.0
  %562 = vmatprep.subr.mxu0 0.0
  %563 = vmatpush2.msra.mxu0 0.0
  %564 = vmatprep.subr.mxu0 0.0
  %565 = vmatpush2.msra.mxu0 0.0
  %566 = vmatprep.subr.mxu0 0.0
  %567 = vmatpush2.msra.mxu0 0.0
  %568 = vmatprep.subr.mxu0 0.0
  %569 = vmatpush2.msra.mxu0 0.0
  %570 = vmatprep.subr.mxu0 0.0
  %571 = vmatpush2.msra.mxu0 0.0
  %572 = vmatprep.subr.mxu0 0.0
  %573 = vmatpush2.msra.mxu0 0.0
  %574 = vmatprep.subr.mxu0 0.0
  %575 = vmatpush2.msra.mxu0 0.0
  %576 = vmatprep.subr.mxu0 0.0
  %577 = vmatpush2.msra.mxu0 0.0
  %578 = vmatprep.subr.mxu0 0.0
  %579 = vmatpush2.msra.mxu0 0.0
  %580 = vmatprep.mubr.f32.mxu0 0.0
  %581 = vmatmul.mubr.f32.gmra.mxu0 %v339
  %v582 = vpop.f32.mrf.mxu0
  %v583 = vadd.f32 %v513, %v582
  %v584 = vpop.f32.mrf.mxu0
  %585 = vdwg.mxu0
  %v587 = vlaneseq
  %v588 = vshrl.u32 %v587, 7
  %v589 = vsub.s32 0, %v588
  %v590 = vrot.slane %v213, %v589
  %v592 = vadd.f32 %v583, %v590
  %v593 = vxor.u32 %v592, 2147483648
  %v594 = vmul.f32 %v593, 1.442695
  %v595 = vpow.pop %v594
  %v596 = vadd.f32 %v595, 1.0
  %v597 = vrcp.pop %v596
  %v598 = vmul.f32 1.0, %v597
  %v599 = vtanh.pop %v592
  %601 = vrot.lane.b32.xlu0 %v220, 32
  %v602 = vpop.permute.xlu0 %601
  %v604 = vmul.f32 %v598, %v602
  %606 = vrot.lane.b32.xlu0 %v599, 64
  %v607 = vpop.permute.xlu0 %606
  %v609 = vmul.f32 %v598, %v607
  %611 = vrot.lane.b32.xlu0 %v609, 32
  %v612 = vpop.permute.xlu0 %611
  %v614 = vadd.f32 %v604, %v612
  %v615 = vtanh.pop %v614
  %617 = vrot.lane.b32.xlu0 %v615, 64
  %v618 = vpop.permute.xlu0 %617
  %v620 = vmul.f32 %v598, %v618
  %621 = vrot.lane.b32.xlu0 %v217, 96
  %v622 = vpop.permute.xlu0 %621
  %v624 = vsel %vm328, %v620, %v622
  %v625 = vsel %vm328, %v614, %v602
  %s626 = scalar_lea.vmem [#allocation2], 16
  %v627 = vld [vmem:[%s626] sm:$0xff]
  %629 = vrot.lane.b32.xlu0 %v441, 32
  %v630 = vpop.permute.xlu0 %629
  %v631 = vsel %vm222, %v630, 0
  %633 = vmatprep.subr.mxu0 0.0
  %634 = vmatpush1.msra.mxu0 0.0
  %635 = vmatprep.subr.mxu0 0.0
  %636 = vmatpush1.msra.mxu0 0.0
  %637 = vmatprep.subr.mxu0 0.0
  %638 = vmatpush1.msra.mxu0 0.0
  %639 = vmatprep.subr.mxu0 0.0
  %640 = vmatpush1.msra.mxu0 0.0
  %641 = vmatprep.subr.mxu0 0.0
  %642 = vmatpush1.msra.mxu0 0.0
  %643 = vmatprep.subr.mxu0 0.0
  %644 = vmatpush1.msra.mxu0 0.0
  %645 = vmatprep.subr.mxu0 0.0
  %646 = vmatpush1.msra.mxu0 0.0
  %647 = vmatprep.subr.mxu0 0.0
  %648 = vmatpush1.msra.mxu0 0.0
  %649 = vmatprep.subr.mxu0 0.0
  %650 = vmatpush1.msra.mxu0 0.0
  %651 = vmatprep.subr.mxu0 0.0
  %652 = vmatpush1.msra.mxu0 0.0
  %653 = vmatprep.subr.mxu0 0.0
  %654 = vmatpush1.msra.mxu0 0.0
  %655 = vmatprep.subr.mxu0 0.0
  %656 = vmatpush1.msra.mxu0 0.0
  %657 = vmatprep.subr.mxu0 0.0
  %658 = vmatpush1.msra.mxu0 %v204
  %659 = vmatprep.subr.mxu0 0.0
  %660 = vmatpush1.msra.mxu0 %v203
  %661 = vmatprep.subr.mxu0 0.0
  %662 = vmatpush1.msra.mxu0 %v202
  %663 = vmatprep.subr.mxu0 0.0
  %664 = vmatpush1.msra.mxu0 %v201
  %665 = vmatprep.subr.mxu0 0.0
  %666 = vmatpush2.msra.mxu0 0.0
  %667 = vmatprep.subr.mxu0 0.0
  %668 = vmatpush2.msra.mxu0 0.0
  %669 = vmatprep.subr.mxu0 0.0
  %670 = vmatpush2.msra.mxu0 0.0
  %671 = vmatprep.subr.mxu0 0.0
  %672 = vmatpush2.msra.mxu0 0.0
  %673 = vmatprep.subr.mxu0 0.0
  %674 = vmatpush2.msra.mxu0 0.0
  %675 = vmatprep.subr.mxu0 0.0
  %676 = vmatpush2.msra.mxu0 0.0
  %677 = vmatprep.subr.mxu0 0.0
  %678 = vmatpush2.msra.mxu0 0.0
  %679 = vmatprep.subr.mxu0 0.0
  %680 = vmatpush2.msra.mxu0 0.0
  %681 = vmatprep.subr.mxu0 0.0
  %682 = vmatpush2.msra.mxu0 0.0
  %683 = vmatprep.subr.mxu0 0.0
  %684 = vmatpush2.msra.mxu0 0.0
  %685 = vmatprep.subr.mxu0 0.0
  %686 = vmatpush2.msra.mxu0 0.0
  %687 = vmatprep.subr.mxu0 0.0
  %688 = vmatpush2.msra.mxu0 0.0
  %689 = vmatprep.subr.mxu0 0.0
  %690 = vmatpush2.msra.mxu0 0.0
  %691 = vmatprep.subr.mxu0 0.0
  %692 = vmatpush2.msra.mxu0 0.0
  %693 = vmatprep.subr.mxu0 0.0
  %694 = vmatpush2.msra.mxu0 0.0
  %695 = vmatprep.subr.mxu0 0.0
  %696 = vmatpush2.msra.mxu0 0.0
  %697 = vmatprep.mubr.f32.mxu0 0.0
  %698 = vmatmul.mubr.f32.gmra.mxu0 %v631
  %v699 = vpop.f32.mrf.mxu0
  %v700 = vadd.f32 0.0, %v699
  %v701 = vpop.f32.mrf.mxu0
  %702 = vdwg.mxu0
  %v703 = vadd.f32 %v627, %v700
  %v704 = vxor.u32 %v703, 2147483648
  %v705 = vmul.f32 %v704, 1.442695
  %v706 = vpow.pop %v705
  %v707 = vadd.f32 %v706, 1.0
  %v708 = vrcp.pop %v707
  %v709 = vmul.f32 1.0, %v708
  %v710 = vtanh.pop %v703
  %v711 = vmul.f32 %v709, %v442
  %713 = vrot.lane.b32.xlu0 %v710, 64
  %v714 = vpop.permute.xlu0 %713
  %v716 = vmul.f32 %v709, %v714
  %718 = vrot.lane.b32.xlu0 %v716, 32
  %v719 = vpop.permute.xlu0 %718
  %v721 = vadd.f32 %v711, %v719
  %v722 = vtanh.pop %v721
  %724 = vrot.lane.b32.xlu0 %v722, 64
  %v725 = vpop.permute.xlu0 %724
  %v727 = vmul.f32 %v709, %v725
  %s728 = sadd.s32 %s214, 2
  %p729 = scmp.lt.s32.totalorder %s728, 8
  %s730 = scalar_select %p729, 1, 0
  %v731 = vstv %s730
  %vm732 = vcmp.eq.s32.totalorder %v731, 1
  %v733 = vsel %vm732, %v727, %v441
  %v734 = vsel %vm732, %v721, %v442
  %736 = vrot.lane.b32.xlu0 %v624, 32
  %v737 = vpop.permute.xlu0 %736
  %v738 = vsel %vm222, %v737, 0
  %740 = vmatprep.subr.mxu0 0.0
  %741 = vmatpush1.msra.mxu0 0.0
  %742 = vmatprep.subr.mxu0 0.0
  %743 = vmatpush1.msra.mxu0 0.0
  %744 = vmatprep.subr.mxu0 0.0
  %745 = vmatpush1.msra.mxu0 0.0
  %746 = vmatprep.subr.mxu0 0.0
  %747 = vmatpush1.msra.mxu0 0.0
  %748 = vmatprep.subr.mxu0 0.0
  %749 = vmatpush1.msra.mxu0 0.0
  %750 = vmatprep.subr.mxu0 0.0
  %751 = vmatpush1.msra.mxu0 0.0
  %752 = vmatprep.subr.mxu0 0.0
  %753 = vmatpush1.msra.mxu0 0.0
  %754 = vmatprep.subr.mxu0 0.0
  %755 = vmatpush1.msra.mxu0 0.0
  %756 = vmatprep.subr.mxu0 0.0
  %757 = vmatpush1.msra.mxu0 0.0
  %758 = vmatprep.subr.mxu0 0.0
  %759 = vmatpush1.msra.mxu0 0.0
  %760 = vmatprep.subr.mxu0 0.0
  %761 = vmatpush1.msra.mxu0 0.0
  %762 = vmatprep.subr.mxu0 0.0
  %763 = vmatpush1.msra.mxu0 0.0
  %764 = vmatprep.subr.mxu0 0.0
  %765 = vmatpush1.msra.mxu0 %v208
  %766 = vmatprep.subr.mxu0 0.0
  %767 = vmatpush1.msra.mxu0 %v207
  %768 = vmatprep.subr.mxu0 0.0
  %769 = vmatpush1.msra.mxu0 %v206
  %770 = vmatprep.subr.mxu0 0.0
  %771 = vmatpush1.msra.mxu0 %v205
  %772 = vmatprep.subr.mxu0 0.0
  %773 = vmatpush2.msra.mxu0 0.0
  %774 = vmatprep.subr.mxu0 0.0
  %775 = vmatpush2.msra.mxu0 0.0
  %776 = vmatprep.subr.mxu0 0.0
  %777 = vmatpush2.msra.mxu0 0.0
  %778 = vmatprep.subr.mxu0 0.0
  %779 = vmatpush2.msra.mxu0 0.0
  %780 = vmatprep.subr.mxu0 0.0
  %781 = vmatpush2.msra.mxu0 0.0
  %782 = vmatprep.subr.mxu0 0.0
  %783 = vmatpush2.msra.mxu0 0.0
  %784 = vmatprep.subr.mxu0 0.0
  %785 = vmatpush2.msra.mxu0 0.0
  %786 = vmatprep.subr.mxu0 0.0
  %787 = vmatpush2.msra.mxu0 0.0
  %788 = vmatprep.subr.mxu0 0.0
  %789 = vmatpush2.msra.mxu0 0.0
  %790 = vmatprep.subr.mxu0 0.0
  %791 = vmatpush2.msra.mxu0 0.0
  %792 = vmatprep.subr.mxu0 0.0
  %793 = vmatpush2.msra.mxu0 0.0
  %794 = vmatprep.subr.mxu0 0.0
  %795 = vmatpush2.msra.mxu0 0.0
  %796 = vmatprep.subr.mxu0 0.0
  %797 = vmatpush2.msra.mxu0 0.0
  %798 = vmatprep.subr.mxu0 0.0
  %799 = vmatpush2.msra.mxu0 0.0
  %800 = vmatprep.subr.mxu0 0.0
  %801 = vmatpush2.msra.mxu0 0.0
  %802 = vmatprep.subr.mxu0 0.0
  %803 = vmatpush2.msra.mxu0 0.0
  %804 = vmatprep.mubr.f32.mxu0 0.0
  %805 = vmatmul.mubr.f32.gmra.mxu0 %v738
  %v806 = vpop.f32.mrf.mxu0
  %v807 = vadd.f32 0.0, %v806
  %v808 = vpop.f32.mrf.mxu0
  %809 = vdwg.mxu0
  %810 = vmatprep.subr.mxu0 0.0
  %811 = vmatpush1.msra.mxu0 0.0
  %812 = vmatprep.subr.mxu0 0.0
  %813 = vmatpush1.msra.mxu0 0.0
  %814 = vmatprep.subr.mxu0 0.0
  %815 = vmatpush1.msra.mxu0 0.0
  %816 = vmatprep.subr.mxu0 0.0
  %817 = vmatpush1.msra.mxu0 0.0
  %818 = vmatprep.subr.mxu0 0.0
  %819 = vmatpush1.msra.mxu0 0.0
  %820 = vmatprep.subr.mxu0 0.0
  %821 = vmatpush1.msra.mxu0 0.0
  %822 = vmatprep.subr.mxu0 0.0
  %823 = vmatpush1.msra.mxu0 0.0
  %824 = vmatprep.subr.mxu0 0.0
  %825 = vmatpush1.msra.mxu0 0.0
  %826 = vmatprep.subr.mxu0 0.0
  %827 = vmatpush1.msra.mxu0 0.0
  %828 = vmatprep.subr.mxu0 0.0
  %829 = vmatpush1.msra.mxu0 0.0
  %830 = vmatprep.subr.mxu0 0.0
  %831 = vmatpush1.msra.mxu0 0.0
  %832 = vmatprep.subr.mxu0 0.0
  %833 = vmatpush1.msra.mxu0 0.0
  %834 = vmatprep.subr.mxu0 0.0
  %835 = vmatpush1.msra.mxu0 %v212
  %836 = vmatprep.subr.mxu0 0.0
  %837 = vmatpush1.msra.mxu0 %v211
  %838 = vmatprep.subr.mxu0 0.0
  %839 = vmatpush1.msra.mxu0 %v210
  %840 = vmatprep.subr.mxu0 0.0
  %841 = vmatpush1.msra.mxu0 %v209
  %842 = vmatprep.subr.mxu0 0.0
  %843 = vmatpush2.msra.mxu0 0.0
  %844 = vmatprep.subr.mxu0 0.0
  %845 = vmatpush2.msra.mxu0 0.0
  %846 = vmatprep.subr.mxu0 0.0
  %847 = vmatpush2.msra.mxu0 0.0
  %848 = vmatprep.subr.mxu0 0.0
  %849 = vmatpush2.msra.mxu0 0.0
  %850 = vmatprep.subr.mxu0 0.0
  %851 = vmatpush2.msra.mxu0 0.0
  %852 = vmatprep.subr.mxu0 0.0
  %853 = vmatpush2.msra.mxu0 0.0
  %854 = vmatprep.subr.mxu0 0.0
  %855 = vmatpush2.msra.mxu0 0.0
  %856 = vmatprep.subr.mxu0 0.0
  %857 = vmatpush2.msra.mxu0 0.0
  %858 = vmatprep.subr.mxu0 0.0
  %859 = vmatpush2.msra.mxu0 0.0
  %860 = vmatprep.subr.mxu0 0.0
  %861 = vmatpush2.msra.mxu0 0.0
  %862 = vmatprep.subr.mxu0 0.0
  %863 = vmatpush2.msra.mxu0 0.0
  %864 = vmatprep.subr.mxu0 0.0
  %865 = vmatpush2.msra.mxu0 0.0
  %866 = vmatprep.subr.mxu0 0.0
  %867 = vmatpush2.msra.mxu0 0.0
  %868 = vmatprep.subr.mxu0 0.0
  %869 = vmatpush2.msra.mxu0 0.0
  %870 = vmatprep.subr.mxu0 0.0
  %871 = vmatpush2.msra.mxu0 0.0
  %872 = vmatprep.subr.mxu0 0.0
  %873 = vmatpush2.msra.mxu0 0.0
  %874 = vmatprep.mubr.f32.mxu0 0.0
  %875 = vmatmul.mubr.f32.gmra.mxu0 %v631
  %v876 = vpop.f32.mrf.mxu0
  %v877 = vadd.f32 %v807, %v876
  %v878 = vpop.f32.mrf.mxu0
  %879 = vdwg.mxu0
  %v880 = vadd.f32 %v877, %v590
  %v881 = vxor.u32 %v880, 2147483648
  %v882 = vmul.f32 %v881, 1.442695
  %v883 = vpow.pop %v882
  %v884 = vadd.f32 %v883, 1.0
  %v885 = vrcp.pop %v884
  %v886 = vmul.f32 1.0, %v885
  %v887 = vtanh.pop %v880
  %v888 = vmul.f32 %v886, %v625
  %890 = vrot.lane.b32.xlu0 %v887, 64
  %v891 = vpop.permute.xlu0 %890
  %v893 = vmul.f32 %v886, %v891
  %895 = vrot.lane.b32.xlu0 %v893, 32
  %v896 = vpop.permute.xlu0 %895
  %v898 = vadd.f32 %v888, %v896
  %v899 = vtanh.pop %v898
  %901 = vrot.lane.b32.xlu0 %v899, 64
  %v902 = vpop.permute.xlu0 %901
  %v904 = vmul.f32 %v886, %v902
  %v905 = vsel %vm440, %v904, %v624
  %v906 = vsel %vm440, %v898, %v625
  %s907 = scalar_lea.vmem [#allocation2], 24
  %v908 = vld [vmem:[%s907] sm:$0xff]
  %910 = vrot.lane.b32.xlu0 %v733, 32
  %v911 = vpop.permute.xlu0 %910
  %v912 = vsel %vm222, %v911, 0
  %914 = vmatprep.subr.mxu0 0.0
  %915 = vmatpush1.msra.mxu0 0.0
  %916 = vmatprep.subr.mxu0 0.0
  %917 = vmatpush1.msra.mxu0 0.0
  %918 = vmatprep.subr.mxu0 0.0
  %919 = vmatpush1.msra.mxu0 0.0
  %920 = vmatprep.subr.mxu0 0.0
  %921 = vmatpush1.msra.mxu0 0.0
  %922 = vmatprep.subr.mxu0 0.0
  %923 = vmatpush1.msra.mxu0 0.0
  %924 = vmatprep.subr.mxu0 0.0
  %925 = vmatpush1.msra.mxu0 0.0
  %926 = vmatprep.subr.mxu0 0.0
  %927 = vmatpush1.msra.mxu0 0.0
  %928 = vmatprep.subr.mxu0 0.0
  %929 = vmatpush1.msra.mxu0 0.0
  %930 = vmatprep.subr.mxu0 0.0
  %931 = vmatpush1.msra.mxu0 0.0
  %932 = vmatprep.subr.mxu0 0.0
  %933 = vmatpush1.msra.mxu0 0.0
  %934 = vmatprep.subr.mxu0 0.0
  %935 = vmatpush1.msra.mxu0 0.0
  %936 = vmatprep.subr.mxu0 0.0
  %937 = vmatpush1.msra.mxu0 0.0
  %938 = vmatprep.subr.mxu0 0.0
  %939 = vmatpush1.msra.mxu0 %v204
  %940 = vmatprep.subr.mxu0 0.0
  %941 = vmatpush1.msra.mxu0 %v203
  %942 = vmatprep.subr.mxu0 0.0
  %943 = vmatpush1.msra.mxu0 %v202
  %944 = vmatprep.subr.mxu0 0.0
  %945 = vmatpush1.msra.mxu0 %v201
  %946 = vmatprep.subr.mxu0 0.0
  %947 = vmatpush2.msra.mxu0 0.0
  %948 = vmatprep.subr.mxu0 0.0
  %949 = vmatpush2.msra.mxu0 0.0
  %950 = vmatprep.subr.mxu0 0.0
  %951 = vmatpush2.msra.mxu0 0.0
  %952 = vmatprep.subr.mxu0 0.0
  %953 = vmatpush2.msra.mxu0 0.0
  %954 = vmatprep.subr.mxu0 0.0
  %955 = vmatpush2.msra.mxu0 0.0
  %956 = vmatprep.subr.mxu0 0.0
  %957 = vmatpush2.msra.mxu0 0.0
  %958 = vmatprep.subr.mxu0 0.0
  %959 = vmatpush2.msra.mxu0 0.0
  %960 = vmatprep.subr.mxu0 0.0
  %961 = vmatpush2.msra.mxu0 0.0
  %962 = vmatprep.subr.mxu0 0.0
  %963 = vmatpush2.msra.mxu0 0.0
  %964 = vmatprep.subr.mxu0 0.0
  %965 = vmatpush2.msra.mxu0 0.0
  %966 = vmatprep.subr.mxu0 0.0
  %967 = vmatpush2.msra.mxu0 0.0
  %968 = vmatprep.subr.mxu0 0.0
  %969 = vmatpush2.msra.mxu0 0.0
  %970 = vmatprep.subr.mxu0 0.0
  %971 = vmatpush2.msra.mxu0 0.0
  %972 = vmatprep.subr.mxu0 0.0
  %973 = vmatpush2.msra.mxu0 0.0
  %974 = vmatprep.subr.mxu0 0.0
  %975 = vmatpush2.msra.mxu0 0.0
  %976 = vmatprep.subr.mxu0 0.0
  %977 = vmatpush2.msra.mxu0 0.0
  %978 = vmatprep.mubr.f32.mxu0 0.0
  %979 = vmatmul.mubr.f32.gmra.mxu0 %v912
  %v980 = vpop.f32.mrf.mxu0
  %v981 = vadd.f32 0.0, %v980
  %v982 = vpop.f32.mrf.mxu0
  %983 = vdwg.mxu0
  %v984 = vadd.f32 %v908, %v981
  %v985 = vxor.u32 %v984, 2147483648
  %v986 = vmul.f32 %v985, 1.442695
  %v987 = vpow.pop %v986
  %v988 = vadd.f32 %v987, 1.0
  %v989 = vrcp.pop %v988
  %v990 = vmul.f32 1.0, %v989
  %v991 = vtanh.pop %v984
  %v992 = vmul.f32 %v990, %v734
  %994 = vrot.lane.b32.xlu0 %v991, 64
  %v995 = vpop.permute.xlu0 %994
  %v997 = vmul.f32 %v990, %v995
  %999 = vrot.lane.b32.xlu0 %v997, 32
  %v1000 = vpop.permute.xlu0 %999
  %v1002 = vadd.f32 %v992, %v1000
  %v1003 = vtanh.pop %v1002
  %1005 = vrot.lane.b32.xlu0 %v1003, 64
  %v1006 = vpop.permute.xlu0 %1005
  %v1008 = vmul.f32 %v990, %v1006
  %s1009 = sadd.s32 %s214, 3
  %p1010 = scmp.lt.s32.totalorder %s1009, 8
  %s1011 = scalar_select %p1010, 1, 0
  %v1012 = vstv %s1011
  %vm1013 = vcmp.eq.s32.totalorder %v1012, 1
  %v1014 = vsel %vm1013, %v1008, %v733
  %v1015 = vsel %vm1013, %v1002, %v734
  %1017 = vrot.lane.b32.xlu0 %v905, 32
  %v1018 = vpop.permute.xlu0 %1017
  %v1019 = vsel %vm222, %v1018, 0
  %1021 = vmatprep.subr.mxu0 0.0
  %1022 = vmatpush1.msra.mxu0 0.0
  %1023 = vmatprep.subr.mxu0 0.0
  %1024 = vmatpush1.msra.mxu0 0.0
  %1025 = vmatprep.subr.mxu0 0.0
  %1026 = vmatpush1.msra.mxu0 0.0
  %1027 = vmatprep.subr.mxu0 0.0
  %1028 = vmatpush1.msra.mxu0 0.0
  %1029 = vmatprep.subr.mxu0 0.0
  %1030 = vmatpush1.msra.mxu0 0.0
  %1031 = vmatprep.subr.mxu0 0.0
  %1032 = vmatpush1.msra.mxu0 0.0
  %1033 = vmatprep.subr.mxu0 0.0
  %1034 = vmatpush1.msra.mxu0 0.0
  %1035 = vmatprep.subr.mxu0 0.0
  %1036 = vmatpush1.msra.mxu0 0.0
  %1037 = vmatprep.subr.mxu0 0.0
  %1038 = vmatpush1.msra.mxu0 0.0
  %1039 = vmatprep.subr.mxu0 0.0
  %1040 = vmatpush1.msra.mxu0 0.0
  %1041 = vmatprep.subr.mxu0 0.0
  %1042 = vmatpush1.msra.mxu0 0.0
  %1043 = vmatprep.subr.mxu0 0.0
  %1044 = vmatpush1.msra.mxu0 0.0
  %1045 = vmatprep.subr.mxu0 0.0
  %1046 = vmatpush1.msra.mxu0 %v208
  %1047 = vmatprep.subr.mxu0 0.0
  %1048 = vmatpush1.msra.mxu0 %v207
  %1049 = vmatprep.subr.mxu0 0.0
  %1050 = vmatpush1.msra.mxu0 %v206
  %1051 = vmatprep.subr.mxu0 0.0
  %1052 = vmatpush1.msra.mxu0 %v205
  %1053 = vmatprep.subr.mxu0 0.0
  %1054 = vmatpush2.msra.mxu0 0.0
  %1055 = vmatprep.subr.mxu0 0.0
  %1056 = vmatpush2.msra.mxu0 0.0
  %1057 = vmatprep.subr.mxu0 0.0
  %1058 = vmatpush2.msra.mxu0 0.0
  %1059 = vmatprep.subr.mxu0 0.0
  %1060 = vmatpush2.msra.mxu0 0.0
  %1061 = vmatprep.subr.mxu0 0.0
  %1062 = vmatpush2.msra.mxu0 0.0
  %1063 = vmatprep.subr.mxu0 0.0
  %1064 = vmatpush2.msra.mxu0 0.0
  %1065 = vmatprep.subr.mxu0 0.0
  %1066 = vmatpush2.msra.mxu0 0.0
  %1067 = vmatprep.subr.mxu0 0.0
  %1068 = vmatpush2.msra.mxu0 0.0
  %1069 = vmatprep.subr.mxu0 0.0
  %1070 = vmatpush2.msra.mxu0 0.0
  %1071 = vmatprep.subr.mxu0 0.0
  %1072 = vmatpush2.msra.mxu0 0.0
  %1073 = vmatprep.subr.mxu0 0.0
  %1074 = vmatpush2.msra.mxu0 0.0
  %1075 = vmatprep.subr.mxu0 0.0
  %1076 = vmatpush2.msra.mxu0 0.0
  %1077 = vmatprep.subr.mxu0 0.0
  %1078 = vmatpush2.msra.mxu0 0.0
  %1079 = vmatprep.subr.mxu0 0.0
  %1080 = vmatpush2.msra.mxu0 0.0
  %1081 = vmatprep.subr.mxu0 0.0
  %1082 = vmatpush2.msra.mxu0 0.0
  %1083 = vmatprep.subr.mxu0 0.0
  %1084 = vmatpush2.msra.mxu0 0.0
  %1085 = vmatprep.mubr.f32.mxu0 0.0
  %1086 = vmatmul.mubr.f32.gmra.mxu0 %v1019
  %v1087 = vpop.f32.mrf.mxu0
  %v1088 = vadd.f32 0.0, %v1087
  %v1089 = vpop.f32.mrf.mxu0
  %1090 = vdwg.mxu0
  %1091 = vmatprep.subr.mxu0 0.0
  %1092 = vmatpush1.msra.mxu0 0.0
  %1093 = vmatprep.subr.mxu0 0.0
  %1094 = vmatpush1.msra.mxu0 0.0
  %1095 = vmatprep.subr.mxu0 0.0
  %1096 = vmatpush1.msra.mxu0 0.0
  %1097 = vmatprep.subr.mxu0 0.0
  %1098 = vmatpush1.msra.mxu0 0.0
  %1099 = vmatprep.subr.mxu0 0.0
  %1100 = vmatpush1.msra.mxu0 0.0
  %1101 = vmatprep.subr.mxu0 0.0
  %1102 = vmatpush1.msra.mxu0 0.0
  %1103 = vmatprep.subr.mxu0 0.0
  %1104 = vmatpush1.msra.mxu0 0.0
  %1105 = vmatprep.subr.mxu0 0.0
  %1106 = vmatpush1.msra.mxu0 0.0
  %1107 = vmatprep.subr.mxu0 0.0
  %1108 = vmatpush1.msra.mxu0 0.0
  %1109 = vmatprep.subr.mxu0 0.0
  %1110 = vmatpush1.msra.mxu0 0.0
  %1111 = vmatprep.subr.mxu0 0.0
  %1112 = vmatpush1.msra.mxu0 0.0
  %1113 = vmatprep.subr.mxu0 0.0
  %1114 = vmatpush1.msra.mxu0 0.0
  %1115 = vmatprep.subr.mxu0 0.0
  %1116 = vmatpush1.msra.mxu0 %v212
  %1117 = vmatprep.subr.mxu0 0.0
  %1118 = vmatpush1.msra.mxu0 %v211
  %1119 = vmatprep.subr.mxu0 0.0
  %1120 = vmatpush1.msra.mxu0 %v210
  %1121 = vmatprep.subr.mxu0 0.0
  %1122 = vmatpush1.msra.mxu0 %v209
  %1123 = vmatprep.subr.mxu0 0.0
  %1124 = vmatpush2.msra.mxu0 0.0
  %1125 = vmatprep.subr.mxu0 0.0
  %1126 = vmatpush2.msra.mxu0 0.0
  %1127 = vmatprep.subr.mxu0 0.0
  %1128 = vmatpush2.msra.mxu0 0.0
  %1129 = vmatprep.subr.mxu0 0.0
  %1130 = vmatpush2.msra.mxu0 0.0
  %1131 = vmatprep.subr.mxu0 0.0
  %1132 = vmatpush2.msra.mxu0 0.0
  %1133 = vmatprep.subr.mxu0 0.0
  %1134 = vmatpush2.msra.mxu0 0.0
  %1135 = vmatprep.subr.mxu0 0.0
  %1136 = vmatpush2.msra.mxu0 0.0
  %1137 = vmatprep.subr.mxu0 0.0
  %1138 = vmatpush2.msra.mxu0 0.0
  %1139 = vmatprep.subr.mxu0 0.0
  %1140 = vmatpush2.msra.mxu0 0.0
  %1141 = vmatprep.subr.mxu0 0.0
  %1142 = vmatpush2.msra.mxu0 0.0
  %1143 = vmatprep.subr.mxu0 0.0
  %1144 = vmatpush2.msra.mxu0 0.0
  %1145 = vmatprep.subr.mxu0 0.0
  %1146 = vmatpush2.msra.mxu0 0.0
  %1147 = vmatprep.subr.mxu0 0.0
  %1148 = vmatpush2.msra.mxu0 0.0
  %1149 = vmatprep.subr.mxu0 0.0
  %1150 = vmatpush2.msra.mxu0 0.0
  %1151 = vmatprep.subr.mxu0 0.0
  %1152 = vmatpush2.msra.mxu0 0.0
  %1153 = vmatprep.subr.mxu0 0.0
  %1154 = vmatpush2.msra.mxu0 0.0
  %1155 = vmatprep.mubr.f32.mxu0 0.0
  %1156 = vmatmul.mubr.f32.gmra.mxu0 %v912
  %v1157 = vpop.f32.mrf.mxu0
  %v1158 = vadd.f32 %v1088, %v1157
  %v1159 = vpop.f32.mrf.mxu0
  %1160 = vdwg.mxu0
  %v1161 = vadd.f32 %v1158, %v590
  %v1162 = vxor.u32 %v1161, 2147483648
  %v1163 = vmul.f32 %v1162, 1.442695
  %v1164 = vpow.pop %v1163
  %v1165 = vadd.f32 %v1164, 1.0
  %v1166 = vrcp.pop %v1165
  %v1167 = vmul.f32 1.0, %v1166
  %v1168 = vtanh.pop %v1161
  %v1169 = vmul.f32 %v1167, %v906
  %1171 = vrot.lane.b32.xlu0 %v1168, 64
  %v1172 = vpop.permute.xlu0 %1171
  %v1174 = vmul.f32 %v1167, %v1172
  %1176 = vrot.lane.b32.xlu0 %v1174, 32
  %v1177 = vpop.permute.xlu0 %1176
  %v1179 = vadd.f32 %v1169, %v1177
  %v1180 = vtanh.pop %v1179
  %1182 = vrot.lane.b32.xlu0 %v1180, 64
  %v1183 = vpop.permute.xlu0 %1182
  %v1185 = vmul.f32 %v1167, %v1183
  %v1186 = vsel %vm732, %v1185, %v905
  %v1187 = vsel %vm732, %v1179, %v906
  %s1188 = scalar_lea.vmem [#allocation2], 32
  %v1189 = vld [vmem:[%s1188] sm:$0xff]
  %1191 = vrot.lane.b32.xlu0 %v1014, 32
  %v1192 = vpop.permute.xlu0 %1191
  %v1193 = vsel %vm222, %v1192, 0
  %1195 = vmatprep.subr.mxu0 0.0
  %1196 = vmatpush1.msra.mxu0 0.0
  %1197 = vmatprep.subr.mxu0 0.0
  %1198 = vmatpush1.msra.mxu0 0.0
  %1199 = vmatprep.subr.mxu0 0.0
  %1200 = vmatpush1.msra.mxu0 0.0
  %1201 = vmatprep.subr.mxu0 0.0
  %1202 = vmatpush1.msra.mxu0 0.0
  %1203 = vmatprep.subr.mxu0 0.0
  %1204 = vmatpush1.msra.mxu0 0.0
  %1205 = vmatprep.subr.mxu0 0.0
  %1206 = vmatpush1.msra.mxu0 0.0
  %1207 = vmatprep.subr.mxu0 0.0
  %1208 = vmatpush1.msra.mxu0 0.0
  %1209 = vmatprep.subr.mxu0 0.0
  %1210 = vmatpush1.msra.mxu0 0.0
  %1211 = vmatprep.subr.mxu0 0.0
  %1212 = vmatpush1.msra.mxu0 0.0
  %1213 = vmatprep.subr.mxu0 0.0
  %1214 = vmatpush1.msra.mxu0 0.0
  %1215 = vmatprep.subr.mxu0 0.0
  %1216 = vmatpush1.msra.mxu0 0.0
  %1217 = vmatprep.subr.mxu0 0.0
  %1218 = vmatpush1.msra.mxu0 0.0
  %1219 = vmatprep.subr.mxu0 0.0
  %1220 = vmatpush1.msra.mxu0 %v204
  %1221 = vmatprep.subr.mxu0 0.0
  %1222 = vmatpush1.msra.mxu0 %v203
  %1223 = vmatprep.subr.mxu0 0.0
  %1224 = vmatpush1.msra.mxu0 %v202
  %1225 = vmatprep.subr.mxu0 0.0
  %1226 = vmatpush1.msra.mxu0 %v201
  %1227 = vmatprep.subr.mxu0 0.0
  %1228 = vmatpush2.msra.mxu0 0.0
  %1229 = vmatprep.subr.mxu0 0.0
  %1230 = vmatpush2.msra.mxu0 0.0
  %1231 = vmatprep.subr.mxu0 0.0
  %1232 = vmatpush2.msra.mxu0 0.0
  %1233 = vmatprep.subr.mxu0 0.0
  %1234 = vmatpush2.msra.mxu0 0.0
  %1235 = vmatprep.subr.mxu0 0.0
  %1236 = vmatpush2.msra.mxu0 0.0
  %1237 = vmatprep.subr.mxu0 0.0
  %1238 = vmatpush2.msra.mxu0 0.0
  %1239 = vmatprep.subr.mxu0 0.0
  %1240 = vmatpush2.msra.mxu0 0.0
  %1241 = vmatprep.subr.mxu0 0.0
  %1242 = vmatpush2.msra.mxu0 0.0
  %1243 = vmatprep.subr.mxu0 0.0
  %1244 = vmatpush2.msra.mxu0 0.0
  %1245 = vmatprep.subr.mxu0 0.0
  %1246 = vmatpush2.msra.mxu0 0.0
  %1247 = vmatprep.subr.mxu0 0.0
  %1248 = vmatpush2.msra.mxu0 0.0
  %1249 = vmatprep.subr.mxu0 0.0
  %1250 = vmatpush2.msra.mxu0 0.0
  %1251 = vmatprep.subr.mxu0 0.0
  %1252 = vmatpush2.msra.mxu0 0.0
  %1253 = vmatprep.subr.mxu0 0.0
  %1254 = vmatpush2.msra.mxu0 0.0
  %1255 = vmatprep.subr.mxu0 0.0
  %1256 = vmatpush2.msra.mxu0 0.0
  %1257 = vmatprep.subr.mxu0 0.0
  %1258 = vmatpush2.msra.mxu0 0.0
  %1259 = vmatprep.mubr.f32.mxu0 0.0
  %1260 = vmatmul.mubr.f32.gmra.mxu0 %v1193
  %v1261 = vpop.f32.mrf.mxu0
  %v1262 = vadd.f32 0.0, %v1261
  %v1263 = vpop.f32.mrf.mxu0
  %1264 = vdwg.mxu0
  %v1265 = vadd.f32 %v1189, %v1262
  %v1266 = vxor.u32 %v1265, 2147483648
  %v1267 = vmul.f32 %v1266, 1.442695
  %v1268 = vpow.pop %v1267
  %v1269 = vadd.f32 %v1268, 1.0
  %v1270 = vrcp.pop %v1269
  %v1271 = vmul.f32 1.0, %v1270
  %v1272 = vtanh.pop %v1265
  %v1273 = vmul.f32 %v1271, %v1015
  %1275 = vrot.lane.b32.xlu0 %v1272, 64
  %v1276 = vpop.permute.xlu0 %1275
  %v1278 = vmul.f32 %v1271, %v1276
  %1280 = vrot.lane.b32.xlu0 %v1278, 32
  %v1281 = vpop.permute.xlu0 %1280
  %v1283 = vadd.f32 %v1273, %v1281
  %v1284 = vtanh.pop %v1283
  %1286 = vrot.lane.b32.xlu0 %v1284, 64
  %v1287 = vpop.permute.xlu0 %1286
  %v1289 = vmul.f32 %v1271, %v1287
  %s1290 = sadd.s32 %s214, 4
  %p1291 = scmp.lt.s32.totalorder %s1290, 8
  %s1292 = scalar_select %p1291, 1, 0
  %v1293 = vstv %s1292
  %vm1294 = vcmp.eq.s32.totalorder %v1293, 1
  %v1295 = vsel %vm1294, %v1289, %v1014
  %v1296 = vsel %vm1294, %v1283, %v1015
  %1298 = vrot.lane.b32.xlu0 %v1186, 32
  %v1299 = vpop.permute.xlu0 %1298
  %v1300 = vsel %vm222, %v1299, 0
  %1302 = vmatprep.subr.mxu0 0.0
  %1303 = vmatpush1.msra.mxu0 0.0
  %1304 = vmatprep.subr.mxu0 0.0
  %1305 = vmatpush1.msra.mxu0 0.0
  %1306 = vmatprep.subr.mxu0 0.0
  %1307 = vmatpush1.msra.mxu0 0.0
  %1308 = vmatprep.subr.mxu0 0.0
  %1309 = vmatpush1.msra.mxu0 0.0
  %1310 = vmatprep.subr.mxu0 0.0
  %1311 = vmatpush1.msra.mxu0 0.0
  %1312 = vmatprep.subr.mxu0 0.0
  %1313 = vmatpush1.msra.mxu0 0.0
  %1314 = vmatprep.subr.mxu0 0.0
  %1315 = vmatpush1.msra.mxu0 0.0
  %1316 = vmatprep.subr.mxu0 0.0
  %1317 = vmatpush1.msra.mxu0 0.0
  %1318 = vmatprep.subr.mxu0 0.0
  %1319 = vmatpush1.msra.mxu0 0.0
  %1320 = vmatprep.subr.mxu0 0.0
  %1321 = vmatpush1.msra.mxu0 0.0
  %1322 = vmatprep.subr.mxu0 0.0
  %1323 = vmatpush1.msra.mxu0 0.0
  %1324 = vmatprep.subr.mxu0 0.0
  %1325 = vmatpush1.msra.mxu0 0.0
  %1326 = vmatprep.subr.mxu0 0.0
  %1327 = vmatpush1.msra.mxu0 %v208
  %1328 = vmatprep.subr.mxu0 0.0
  %1329 = vmatpush1.msra.mxu0 %v207
  %1330 = vmatprep.subr.mxu0 0.0
  %1331 = vmatpush1.msra.mxu0 %v206
  %1332 = vmatprep.subr.mxu0 0.0
  %1333 = vmatpush1.msra.mxu0 %v205
  %1334 = vmatprep.subr.mxu0 0.0
  %1335 = vmatpush2.msra.mxu0 0.0
  %1336 = vmatprep.subr.mxu0 0.0
  %1337 = vmatpush2.msra.mxu0 0.0
  %1338 = vmatprep.subr.mxu0 0.0
  %1339 = vmatpush2.msra.mxu0 0.0
  %1340 = vmatprep.subr.mxu0 0.0
  %1341 = vmatpush2.msra.mxu0 0.0
  %1342 = vmatprep.subr.mxu0 0.0
  %1343 = vmatpush2.msra.mxu0 0.0
  %1344 = vmatprep.subr.mxu0 0.0
  %1345 = vmatpush2.msra.mxu0 0.0
  %1346 = vmatprep.subr.mxu0 0.0
  %1347 = vmatpush2.msra.mxu0 0.0
  %1348 = vmatprep.subr.mxu0 0.0
  %1349 = vmatpush2.msra.mxu0 0.0
  %1350 = vmatprep.subr.mxu0 0.0
  %1351 = vmatpush2.msra.mxu0 0.0
  %1352 = vmatprep.subr.mxu0 0.0
  %1353 = vmatpush2.msra.mxu0 0.0
  %1354 = vmatprep.subr.mxu0 0.0
  %1355 = vmatpush2.msra.mxu0 0.0
  %1356 = vmatprep.subr.mxu0 0.0
  %1357 = vmatpush2.msra.mxu0 0.0
  %1358 = vmatprep.subr.mxu0 0.0
  %1359 = vmatpush2.msra.mxu0 0.0
  %1360 = vmatprep.subr.mxu0 0.0
  %1361 = vmatpush2.msra.mxu0 0.0
  %1362 = vmatprep.subr.mxu0 0.0
  %1363 = vmatpush2.msra.mxu0 0.0
  %1364 = vmatprep.subr.mxu0 0.0
  %1365 = vmatpush2.msra.mxu0 0.0
  %1366 = vmatprep.mubr.f32.mxu0 0.0
  %1367 = vmatmul.mubr.f32.gmra.mxu0 %v1300
  %v1368 = vpop.f32.mrf.mxu0
  %v1369 = vadd.f32 0.0, %v1368
  %v1370 = vpop.f32.mrf.mxu0
  %1371 = vdwg.mxu0
  %1372 = vmatprep.subr.mxu0 0.0
  %1373 = vmatpush1.msra.mxu0 0.0
  %1374 = vmatprep.subr.mxu0 0.0
  %1375 = vmatpush1.msra.mxu0 0.0
  %1376 = vmatprep.subr.mxu0 0.0
  %1377 = vmatpush1.msra.mxu0 0.0
  %1378 = vmatprep.subr.mxu0 0.0
  %1379 = vmatpush1.msra.mxu0 0.0
  %1380 = vmatprep.subr.mxu0 0.0
  %1381 = vmatpush1.msra.mxu0 0.0
  %1382 = vmatprep.subr.mxu0 0.0
  %1383 = vmatpush1.msra.mxu0 0.0
  %1384 = vmatprep.subr.mxu0 0.0
  %1385 = vmatpush1.msra.mxu0 0.0
  %1386 = vmatprep.subr.mxu0 0.0
  %1387 = vmatpush1.msra.mxu0 0.0
  %1388 = vmatprep.subr.mxu0 0.0
  %1389 = vmatpush1.msra.mxu0 0.0
  %1390 = vmatprep.subr.mxu0 0.0
  %1391 = vmatpush1.msra.mxu0 0.0
  %1392 = vmatprep.subr.mxu0 0.0
  %1393 = vmatpush1.msra.mxu0 0.0
  %1394 = vmatprep.subr.mxu0 0.0
  %1395 = vmatpush1.msra.mxu0 0.0
  %1396 = vmatprep.subr.mxu0 0.0
  %1397 = vmatpush1.msra.mxu0 %v212
  %1398 = vmatprep.subr.mxu0 0.0
  %1399 = vmatpush1.msra.mxu0 %v211
  %1400 = vmatprep.subr.mxu0 0.0
  %1401 = vmatpush1.msra.mxu0 %v210
  %1402 = vmatprep.subr.mxu0 0.0
  %1403 = vmatpush1.msra.mxu0 %v209
  %1404 = vmatprep.subr.mxu0 0.0
  %1405 = vmatpush2.msra.mxu0 0.0
  %1406 = vmatprep.subr.mxu0 0.0
  %1407 = vmatpush2.msra.mxu0 0.0
  %1408 = vmatprep.subr.mxu0 0.0
  %1409 = vmatpush2.msra.mxu0 0.0
  %1410 = vmatprep.subr.mxu0 0.0
  %1411 = vmatpush2.msra.mxu0 0.0
  %1412 = vmatprep.subr.mxu0 0.0
  %1413 = vmatpush2.msra.mxu0 0.0
  %1414 = vmatprep.subr.mxu0 0.0
  %1415 = vmatpush2.msra.mxu0 0.0
  %1416 = vmatprep.subr.mxu0 0.0
  %1417 = vmatpush2.msra.mxu0 0.0
  %1418 = vmatprep.subr.mxu0 0.0
  %1419 = vmatpush2.msra.mxu0 0.0
  %1420 = vmatprep.subr.mxu0 0.0
  %1421 = vmatpush2.msra.mxu0 0.0
  %1422 = vmatprep.subr.mxu0 0.0
  %1423 = vmatpush2.msra.mxu0 0.0
  %1424 = vmatprep.subr.mxu0 0.0
  %1425 = vmatpush2.msra.mxu0 0.0
  %1426 = vmatprep.subr.mxu0 0.0
  %1427 = vmatpush2.msra.mxu0 0.0
  %1428 = vmatprep.subr.mxu0 0.0
  %1429 = vmatpush2.msra.mxu0 0.0
  %1430 = vmatprep.subr.mxu0 0.0
  %1431 = vmatpush2.msra.mxu0 0.0
  %1432 = vmatprep.subr.mxu0 0.0
  %1433 = vmatpush2.msra.mxu0 0.0
  %1434 = vmatprep.subr.mxu0 0.0
  %1435 = vmatpush2.msra.mxu0 0.0
  %1436 = vmatprep.mubr.f32.mxu0 0.0
  %1437 = vmatmul.mubr.f32.gmra.mxu0 %v1193
  %v1438 = vpop.f32.mrf.mxu0
  %v1439 = vadd.f32 %v1369, %v1438
  %v1440 = vpop.f32.mrf.mxu0
  %1441 = vdwg.mxu0
  %v1442 = vadd.f32 %v1439, %v590
  %v1443 = vxor.u32 %v1442, 2147483648
  %v1444 = vmul.f32 %v1443, 1.442695
  %v1445 = vpow.pop %v1444
  %v1446 = vadd.f32 %v1445, 1.0
  %v1447 = vrcp.pop %v1446
  %v1448 = vmul.f32 1.0, %v1447
  %v1449 = vtanh.pop %v1442
  %v1450 = vmul.f32 %v1448, %v1187
  %1452 = vrot.lane.b32.xlu0 %v1449, 64
  %v1453 = vpop.permute.xlu0 %1452
  %v1455 = vmul.f32 %v1448, %v1453
  %1457 = vrot.lane.b32.xlu0 %v1455, 32
  %v1458 = vpop.permute.xlu0 %1457
  %v1460 = vadd.f32 %v1450, %v1458
  %v1461 = vtanh.pop %v1460
  %1463 = vrot.lane.b32.xlu0 %v1461, 64
  %v1464 = vpop.permute.xlu0 %1463
  %v1466 = vmul.f32 %v1448, %v1464
  %v1467 = vsel %vm1013, %v1466, %v1186
  %v1468 = vsel %vm1013, %v1460, %v1187
  %s1469 = scalar_lea.vmem [#allocation2], 40
  %v1470 = vld [vmem:[%s1469] sm:$0xff]
  %1472 = vrot.lane.b32.xlu0 %v1295, 32
  %v1473 = vpop.permute.xlu0 %1472
  %v1474 = vsel %vm222, %v1473, 0
  %1476 = vmatprep.subr.mxu0 0.0
  %1477 = vmatpush1.msra.mxu0 0.0
  %1478 = vmatprep.subr.mxu0 0.0
  %1479 = vmatpush1.msra.mxu0 0.0
  %1480 = vmatprep.subr.mxu0 0.0
  %1481 = vmatpush1.msra.mxu0 0.0
  %1482 = vmatprep.subr.mxu0 0.0
  %1483 = vmatpush1.msra.mxu0 0.0
  %1484 = vmatprep.subr.mxu0 0.0
  %1485 = vmatpush1.msra.mxu0 0.0
  %1486 = vmatprep.subr.mxu0 0.0
  %1487 = vmatpush1.msra.mxu0 0.0
  %1488 = vmatprep.subr.mxu0 0.0
  %1489 = vmatpush1.msra.mxu0 0.0
  %1490 = vmatprep.subr.mxu0 0.0
  %1491 = vmatpush1.msra.mxu0 0.0
  %1492 = vmatprep.subr.mxu0 0.0
  %1493 = vmatpush1.msra.mxu0 0.0
  %1494 = vmatprep.subr.mxu0 0.0
  %1495 = vmatpush1.msra.mxu0 0.0
  %1496 = vmatprep.subr.mxu0 0.0
  %1497 = vmatpush1.msra.mxu0 0.0
  %1498 = vmatprep.subr.mxu0 0.0
  %1499 = vmatpush1.msra.mxu0 0.0
  %1500 = vmatprep.subr.mxu0 0.0
  %1501 = vmatpush1.msra.mxu0 %v204
  %1502 = vmatprep.subr.mxu0 0.0
  %1503 = vmatpush1.msra.mxu0 %v203
  %1504 = vmatprep.subr.mxu0 0.0
  %1505 = vmatpush1.msra.mxu0 %v202
  %1506 = vmatprep.subr.mxu0 0.0
  %1507 = vmatpush1.msra.mxu0 %v201
  %1508 = vmatprep.subr.mxu0 0.0
  %1509 = vmatpush2.msra.mxu0 0.0
  %1510 = vmatprep.subr.mxu0 0.0
  %1511 = vmatpush2.msra.mxu0 0.0
  %1512 = vmatprep.subr.mxu0 0.0
  %1513 = vmatpush2.msra.mxu0 0.0
  %1514 = vmatprep.subr.mxu0 0.0
  %1515 = vmatpush2.msra.mxu0 0.0
  %1516 = vmatprep.subr.mxu0 0.0
  %1517 = vmatpush2.msra.mxu0 0.0
  %1518 = vmatprep.subr.mxu0 0.0
  %1519 = vmatpush2.msra.mxu0 0.0
  %1520 = vmatprep.subr.mxu0 0.0
  %1521 = vmatpush2.msra.mxu0 0.0
  %1522 = vmatprep.subr.mxu0 0.0
  %1523 = vmatpush2.msra.mxu0 0.0
  %1524 = vmatprep.subr.mxu0 0.0
  %1525 = vmatpush2.msra.mxu0 0.0
  %1526 = vmatprep.subr.mxu0 0.0
  %1527 = vmatpush2.msra.mxu0 0.0
  %1528 = vmatprep.subr.mxu0 0.0
  %1529 = vmatpush2.msra.mxu0 0.0
  %1530 = vmatprep.subr.mxu0 0.0
  %1531 = vmatpush2.msra.mxu0 0.0
  %1532 = vmatprep.subr.mxu0 0.0
  %1533 = vmatpush2.msra.mxu0 0.0
  %1534 = vmatprep.subr.mxu0 0.0
  %1535 = vmatpush2.msra.mxu0 0.0
  %1536 = vmatprep.subr.mxu0 0.0
  %1537 = vmatpush2.msra.mxu0 0.0
  %1538 = vmatprep.subr.mxu0 0.0
  %1539 = vmatpush2.msra.mxu0 0.0
  %1540 = vmatprep.mubr.f32.mxu0 0.0
  %1541 = vmatmul.mubr.f32.gmra.mxu0 %v1474
  %v1542 = vpop.f32.mrf.mxu0
  %v1543 = vadd.f32 0.0, %v1542
  %v1544 = vpop.f32.mrf.mxu0
  %1545 = vdwg.mxu0
  %v1546 = vadd.f32 %v1470, %v1543
  %v1547 = vxor.u32 %v1546, 2147483648
  %v1548 = vmul.f32 %v1547, 1.442695
  %v1549 = vpow.pop %v1548
  %v1550 = vadd.f32 %v1549, 1.0
  %v1551 = vrcp.pop %v1550
  %v1552 = vmul.f32 1.0, %v1551
  %v1553 = vtanh.pop %v1546
  %v1554 = vmul.f32 %v1552, %v1296
  %1556 = vrot.lane.b32.xlu0 %v1553, 64
  %v1557 = vpop.permute.xlu0 %1556
  %v1559 = vmul.f32 %v1552, %v1557
  %1561 = vrot.lane.b32.xlu0 %v1559, 32
  %v1562 = vpop.permute.xlu0 %1561
  %v1564 = vadd.f32 %v1554, %v1562
  %v1565 = vtanh.pop %v1564
  %1567 = vrot.lane.b32.xlu0 %v1565, 64
  %v1568 = vpop.permute.xlu0 %1567
  %v1570 = vmul.f32 %v1552, %v1568
  %s1571 = sadd.s32 %s214, 5
  %p1572 = scmp.lt.s32.totalorder %s1571, 8
  %s1573 = scalar_select %p1572, 1, 0
  %v1574 = vstv %s1573
  %vm1575 = vcmp.eq.s32.totalorder %v1574, 1
  %v1576 = vsel %vm1575, %v1570, %v1295
  %v1577 = vsel %vm1575, %v1564, %v1296
  %1579 = vrot.lane.b32.xlu0 %v1467, 32
  %v1580 = vpop.permute.xlu0 %1579
  %v1581 = vsel %vm222, %v1580, 0
  %1583 = vmatprep.subr.mxu0 0.0
  %1584 = vmatpush1.msra.mxu0 0.0
  %1585 = vmatprep.subr.mxu0 0.0
  %1586 = vmatpush1.msra.mxu0 0.0
  %1587 = vmatprep.subr.mxu0 0.0
  %1588 = vmatpush1.msra.mxu0 0.0
  %1589 = vmatprep.subr.mxu0 0.0
  %1590 = vmatpush1.msra.mxu0 0.0
  %1591 = vmatprep.subr.mxu0 0.0
  %1592 = vmatpush1.msra.mxu0 0.0
  %1593 = vmatprep.subr.mxu0 0.0
  %1594 = vmatpush1.msra.mxu0 0.0
  %1595 = vmatprep.subr.mxu0 0.0
  %1596 = vmatpush1.msra.mxu0 0.0
  %1597 = vmatprep.subr.mxu0 0.0
  %1598 = vmatpush1.msra.mxu0 0.0
  %1599 = vmatprep.subr.mxu0 0.0
  %1600 = vmatpush1.msra.mxu0 0.0
  %1601 = vmatprep.subr.mxu0 0.0
  %1602 = vmatpush1.msra.mxu0 0.0
  %1603 = vmatprep.subr.mxu0 0.0
  %1604 = vmatpush1.msra.mxu0 0.0
  %1605 = vmatprep.subr.mxu0 0.0
  %1606 = vmatpush1.msra.mxu0 0.0
  %1607 = vmatprep.subr.mxu0 0.0
  %1608 = vmatpush1.msra.mxu0 %v208
  %1609 = vmatprep.subr.mxu0 0.0
  %1610 = vmatpush1.msra.mxu0 %v207
  %1611 = vmatprep.subr.mxu0 0.0
  %1612 = vmatpush1.msra.mxu0 %v206
  %1613 = vmatprep.subr.mxu0 0.0
  %1614 = vmatpush1.msra.mxu0 %v205
  %1615 = vmatprep.subr.mxu0 0.0
  %1616 = vmatpush2.msra.mxu0 0.0
  %1617 = vmatprep.subr.mxu0 0.0
  %1618 = vmatpush2.msra.mxu0 0.0
  %1619 = vmatprep.subr.mxu0 0.0
  %1620 = vmatpush2.msra.mxu0 0.0
  %1621 = vmatprep.subr.mxu0 0.0
  %1622 = vmatpush2.msra.mxu0 0.0
  %1623 = vmatprep.subr.mxu0 0.0
  %1624 = vmatpush2.msra.mxu0 0.0
  %1625 = vmatprep.subr.mxu0 0.0
  %1626 = vmatpush2.msra.mxu0 0.0
  %1627 = vmatprep.subr.mxu0 0.0
  %1628 = vmatpush2.msra.mxu0 0.0
  %1629 = vmatprep.subr.mxu0 0.0
  %1630 = vmatpush2.msra.mxu0 0.0
  %1631 = vmatprep.subr.mxu0 0.0
  %1632 = vmatpush2.msra.mxu0 0.0
  %1633 = vmatprep.subr.mxu0 0.0
  %1634 = vmatpush2.msra.mxu0 0.0
  %1635 = vmatprep.subr.mxu0 0.0
  %1636 = vmatpush2.msra.mxu0 0.0
  %1637 = vmatprep.subr.mxu0 0.0
  %1638 = vmatpush2.msra.mxu0 0.0
  %1639 = vmatprep.subr.mxu0 0.0
  %1640 = vmatpush2.msra.mxu0 0.0
  %1641 = vmatprep.subr.mxu0 0.0
  %1642 = vmatpush2.msra.mxu0 0.0
  %1643 = vmatprep.subr.mxu0 0.0
  %1644 = vmatpush2.msra.mxu0 0.0
  %1645 = vmatprep.subr.mxu0 0.0
  %1646 = vmatpush2.msra.mxu0 0.0
  %1647 = vmatprep.mubr.f32.mxu0 0.0
  %1648 = vmatmul.mubr.f32.gmra.mxu0 %v1581
  %v1649 = vpop.f32.mrf.mxu0
  %v1650 = vadd.f32 0.0, %v1649
  %v1651 = vpop.f32.mrf.mxu0
  %1652 = vdwg.mxu0
  %1653 = vmatprep.subr.mxu0 0.0
  %1654 = vmatpush1.msra.mxu0 0.0
  %1655 = vmatprep.subr.mxu0 0.0
  %1656 = vmatpush1.msra.mxu0 0.0
  %1657 = vmatprep.subr.mxu0 0.0
  %1658 = vmatpush1.msra.mxu0 0.0
  %1659 = vmatprep.subr.mxu0 0.0
  %1660 = vmatpush1.msra.mxu0 0.0
  %1661 = vmatprep.subr.mxu0 0.0
  %1662 = vmatpush1.msra.mxu0 0.0
  %1663 = vmatprep.subr.mxu0 0.0
  %1664 = vmatpush1.msra.mxu0 0.0
  %1665 = vmatprep.subr.mxu0 0.0
  %1666 = vmatpush1.msra.mxu0 0.0
  %1667 = vmatprep.subr.mxu0 0.0
  %1668 = vmatpush1.msra.mxu0 0.0
  %1669 = vmatprep.subr.mxu0 0.0
  %1670 = vmatpush1.msra.mxu0 0.0
  %1671 = vmatprep.subr.mxu0 0.0
  %1672 = vmatpush1.msra.mxu0 0.0
  %1673 = vmatprep.subr.mxu0 0.0
  %1674 = vmatpush1.msra.mxu0 0.0
  %1675 = vmatprep.subr.mxu0 0.0
  %1676 = vmatpush1.msra.mxu0 0.0
  %1677 = vmatprep.subr.mxu0 0.0
  %1678 = vmatpush1.msra.mxu0 %v212
  %1679 = vmatprep.subr.mxu0 0.0
  %1680 = vmatpush1.msra.mxu0 %v211
  %1681 = vmatprep.subr.mxu0 0.0
  %1682 = vmatpush1.msra.mxu0 %v210
  %1683 = vmatprep.subr.mxu0 0.0
  %1684 = vmatpush1.msra.mxu0 %v209
  %1685 = vmatprep.subr.mxu0 0.0
  %1686 = vmatpush2.msra.mxu0 0.0
  %1687 = vmatprep.subr.mxu0 0.0
  %1688 = vmatpush2.msra.mxu0 0.0
  %1689 = vmatprep.subr.mxu0 0.0
  %1690 = vmatpush2.msra.mxu0 0.0
  %1691 = vmatprep.subr.mxu0 0.0
  %1692 = vmatpush2.msra.mxu0 0.0
  %1693 = vmatprep.subr.mxu0 0.0
  %1694 = vmatpush2.msra.mxu0 0.0
  %1695 = vmatprep.subr.mxu0 0.0
  %1696 = vmatpush2.msra.mxu0 0.0
  %1697 = vmatprep.subr.mxu0 0.0
  %1698 = vmatpush2.msra.mxu0 0.0
  %1699 = vmatprep.subr.mxu0 0.0
  %1700 = vmatpush2.msra.mxu0 0.0
  %1701 = vmatprep.subr.mxu0 0.0
  %1702 = vmatpush2.msra.mxu0 0.0
  %1703 = vmatprep.subr.mxu0 0.0
  %1704 = vmatpush2.msra.mxu0 0.0
  %1705 = vmatprep.subr.mxu0 0.0
  %1706 = vmatpush2.msra.mxu0 0.0
  %1707 = vmatprep.subr.mxu0 0.0
  %1708 = vmatpush2.msra.mxu0 0.0
  %1709 = vmatprep.subr.mxu0 0.0
  %1710 = vmatpush2.msra.mxu0 0.0
  %1711 = vmatprep.subr.mxu0 0.0
  %1712 = vmatpush2.msra.mxu0 0.0
  %1713 = vmatprep.subr.mxu0 0.0
  %1714 = vmatpush2.msra.mxu0 0.0
  %1715 = vmatprep.subr.mxu0 0.0
  %1716 = vmatpush2.msra.mxu0 0.0
  %1717 = vmatprep.mubr.f32.mxu0 0.0
  %1718 = vmatmul.mubr.f32.gmra.mxu0 %v1474
  %v1719 = vpop.f32.mrf.mxu0
  %v1720 = vadd.f32 %v1650, %v1719
  %v1721 = vpop.f32.mrf.mxu0
  %1722 = vdwg.mxu0
  %v1723 = vadd.f32 %v1720, %v590
  %v1724 = vxor.u32 %v1723, 2147483648
  %v1725 = vmul.f32 %v1724, 1.442695
  %v1726 = vpow.pop %v1725
  %v1727 = vadd.f32 %v1726, 1.0
  %v1728 = vrcp.pop %v1727
  %v1729 = vmul.f32 1.0, %v1728
  %v1730 = vtanh.pop %v1723
  %v1731 = vmul.f32 %v1729, %v1468
  %1733 = vrot.lane.b32.xlu0 %v1730, 64
  %v1734 = vpop.permute.xlu0 %1733
  %v1736 = vmul.f32 %v1729, %v1734
  %1738 = vrot.lane.b32.xlu0 %v1736, 32
  %v1739 = vpop.permute.xlu0 %1738
  %v1741 = vadd.f32 %v1731, %v1739
  %v1742 = vtanh.pop %v1741
  %1744 = vrot.lane.b32.xlu0 %v1742, 64
  %v1745 = vpop.permute.xlu0 %1744
  %v1747 = vmul.f32 %v1729, %v1745
  %v1748 = vsel %vm1294, %v1747, %v1467
  %v1749 = vsel %vm1294, %v1741, %v1468
  %s1750 = scalar_lea.vmem [#allocation2], 48
  %v1751 = vld [vmem:[%s1750] sm:$0xff]
  %1753 = vrot.lane.b32.xlu0 %v1576, 32
  %v1754 = vpop.permute.xlu0 %1753
  %v1755 = vsel %vm222, %v1754, 0
  %1757 = vmatprep.subr.mxu0 0.0
  %1758 = vmatpush1.msra.mxu0 0.0
  %1759 = vmatprep.subr.mxu0 0.0
  %1760 = vmatpush1.msra.mxu0 0.0
  %1761 = vmatprep.subr.mxu0 0.0
  %1762 = vmatpush1.msra.mxu0 0.0
  %1763 = vmatprep.subr.mxu0 0.0
  %1764 = vmatpush1.msra.mxu0 0.0
  %1765 = vmatprep.subr.mxu0 0.0
  %1766 = vmatpush1.msra.mxu0 0.0
  %1767 = vmatprep.subr.mxu0 0.0
  %1768 = vmatpush1.msra.mxu0 0.0
  %1769 = vmatprep.subr.mxu0 0.0
  %1770 = vmatpush1.msra.mxu0 0.0
  %1771 = vmatprep.subr.mxu0 0.0
  %1772 = vmatpush1.msra.mxu0 0.0
  %1773 = vmatprep.subr.mxu0 0.0
  %1774 = vmatpush1.msra.mxu0 0.0
  %1775 = vmatprep.subr.mxu0 0.0
  %1776 = vmatpush1.msra.mxu0 0.0
  %1777 = vmatprep.subr.mxu0 0.0
  %1778 = vmatpush1.msra.mxu0 0.0
  %1779 = vmatprep.subr.mxu0 0.0
  %1780 = vmatpush1.msra.mxu0 0.0
  %1781 = vmatprep.subr.mxu0 0.0
  %1782 = vmatpush1.msra.mxu0 %v204
  %1783 = vmatprep.subr.mxu0 0.0
  %1784 = vmatpush1.msra.mxu0 %v203
  %1785 = vmatprep.subr.mxu0 0.0
  %1786 = vmatpush1.msra.mxu0 %v202
  %1787 = vmatprep.subr.mxu0 0.0
  %1788 = vmatpush1.msra.mxu0 %v201
  %1789 = vmatprep.subr.mxu0 0.0
  %1790 = vmatpush2.msra.mxu0 0.0
  %1791 = vmatprep.subr.mxu0 0.0
  %1792 = vmatpush2.msra.mxu0 0.0
  %1793 = vmatprep.subr.mxu0 0.0
  %1794 = vmatpush2.msra.mxu0 0.0
  %1795 = vmatprep.subr.mxu0 0.0
  %1796 = vmatpush2.msra.mxu0 0.0
  %1797 = vmatprep.subr.mxu0 0.0
  %1798 = vmatpush2.msra.mxu0 0.0
  %1799 = vmatprep.subr.mxu0 0.0
  %1800 = vmatpush2.msra.mxu0 0.0
  %1801 = vmatprep.subr.mxu0 0.0
  %1802 = vmatpush2.msra.mxu0 0.0
  %1803 = vmatprep.subr.mxu0 0.0
  %1804 = vmatpush2.msra.mxu0 0.0
  %1805 = vmatprep.subr.mxu0 0.0
  %1806 = vmatpush2.msra.mxu0 0.0
  %1807 = vmatprep.subr.mxu0 0.0
  %1808 = vmatpush2.msra.mxu0 0.0
  %1809 = vmatprep.subr.mxu0 0.0
  %1810 = vmatpush2.msra.mxu0 0.0
  %1811 = vmatprep.subr.mxu0 0.0
  %1812 = vmatpush2.msra.mxu0 0.0
  %1813 = vmatprep.subr.mxu0 0.0
  %1814 = vmatpush2.msra.mxu0 0.0
  %1815 = vmatprep.subr.mxu0 0.0
  %1816 = vmatpush2.msra.mxu0 0.0
  %1817 = vmatprep.subr.mxu0 0.0
  %1818 = vmatpush2.msra.mxu0 0.0
  %1819 = vmatprep.subr.mxu0 0.0
  %1820 = vmatpush2.msra.mxu0 0.0
  %1821 = vmatprep.mubr.f32.mxu0 0.0
  %1822 = vmatmul.mubr.f32.gmra.mxu0 %v1755
  %v1823 = vpop.f32.mrf.mxu0
  %v1824 = vadd.f32 0.0, %v1823
  %v1825 = vpop.f32.mrf.mxu0
  %1826 = vdwg.mxu0
  %v1827 = vadd.f32 %v1751, %v1824
  %v1828 = vxor.u32 %v1827, 2147483648
  %v1829 = vmul.f32 %v1828, 1.442695
  %v1830 = vpow.pop %v1829
  %v1831 = vadd.f32 %v1830, 1.0
  %v1832 = vrcp.pop %v1831
  %v1833 = vmul.f32 1.0, %v1832
  %v1834 = vtanh.pop %v1827
  %v1835 = vmul.f32 %v1833, %v1577
  %1837 = vrot.lane.b32.xlu0 %v1834, 64
  %v1838 = vpop.permute.xlu0 %1837
  %v1840 = vmul.f32 %v1833, %v1838
  %1842 = vrot.lane.b32.xlu0 %v1840, 32
  %v1843 = vpop.permute.xlu0 %1842
  %v1845 = vadd.f32 %v1835, %v1843
  %v1846 = vtanh.pop %v1845
  %1848 = vrot.lane.b32.xlu0 %v1846, 64
  %v1849 = vpop.permute.xlu0 %1848
  %v1851 = vmul.f32 %v1833, %v1849
  %s1852 = sadd.s32 %s214, 6
  %p1853 = scmp.lt.s32.totalorder %s1852, 8
  %s1854 = scalar_select %p1853, 1, 0
  %v1855 = vstv %s1854
  %vm1856 = vcmp.eq.s32.totalorder %v1855, 1
  %v1857 = vsel %vm1856, %v1851, %v1576
  %v1858 = vsel %vm1856, %v1845, %v1577
  %1860 = vrot.lane.b32.xlu0 %v1748, 32
  %v1861 = vpop.permute.xlu0 %1860
  %v1862 = vsel %vm222, %v1861, 0
  %1864 = vmatprep.subr.mxu0 0.0
  %1865 = vmatpush1.msra.mxu0 0.0
  %1866 = vmatprep.subr.mxu0 0.0
  %1867 = vmatpush1.msra.mxu0 0.0
  %1868 = vmatprep.subr.mxu0 0.0
  %1869 = vmatpush1.msra.mxu0 0.0
  %1870 = vmatprep.subr.mxu0 0.0
  %1871 = vmatpush1.msra.mxu0 0.0
  %1872 = vmatprep.subr.mxu0 0.0
  %1873 = vmatpush1.msra.mxu0 0.0
  %1874 = vmatprep.subr.mxu0 0.0
  %1875 = vmatpush1.msra.mxu0 0.0
  %1876 = vmatprep.subr.mxu0 0.0
  %1877 = vmatpush1.msra.mxu0 0.0
  %1878 = vmatprep.subr.mxu0 0.0
  %1879 = vmatpush1.msra.mxu0 0.0
  %1880 = vmatprep.subr.mxu0 0.0
  %1881 = vmatpush1.msra.mxu0 0.0
  %1882 = vmatprep.subr.mxu0 0.0
  %1883 = vmatpush1.msra.mxu0 0.0
  %1884 = vmatprep.subr.mxu0 0.0
  %1885 = vmatpush1.msra.mxu0 0.0
  %1886 = vmatprep.subr.mxu0 0.0
  %1887 = vmatpush1.msra.mxu0 0.0
  %1888 = vmatprep.subr.mxu0 0.0
  %1889 = vmatpush1.msra.mxu0 %v208
  %1890 = vmatprep.subr.mxu0 0.0
  %1891 = vmatpush1.msra.mxu0 %v207
  %1892 = vmatprep.subr.mxu0 0.0
  %1893 = vmatpush1.msra.mxu0 %v206
  %1894 = vmatprep.subr.mxu0 0.0
  %1895 = vmatpush1.msra.mxu0 %v205
  %1896 = vmatprep.subr.mxu0 0.0
  %1897 = vmatpush2.msra.mxu0 0.0
  %1898 = vmatprep.subr.mxu0 0.0
  %1899 = vmatpush2.msra.mxu0 0.0
  %1900 = vmatprep.subr.mxu0 0.0
  %1901 = vmatpush2.msra.mxu0 0.0
  %1902 = vmatprep.subr.mxu0 0.0
  %1903 = vmatpush2.msra.mxu0 0.0
  %1904 = vmatprep.subr.mxu0 0.0
  %1905 = vmatpush2.msra.mxu0 0.0
  %1906 = vmatprep.subr.mxu0 0.0
  %1907 = vmatpush2.msra.mxu0 0.0
  %1908 = vmatprep.subr.mxu0 0.0
  %1909 = vmatpush2.msra.mxu0 0.0
  %1910 = vmatprep.subr.mxu0 0.0
  %1911 = vmatpush2.msra.mxu0 0.0
  %1912 = vmatprep.subr.mxu0 0.0
  %1913 = vmatpush2.msra.mxu0 0.0
  %1914 = vmatprep.subr.mxu0 0.0
  %1915 = vmatpush2.msra.mxu0 0.0
  %1916 = vmatprep.subr.mxu0 0.0
  %1917 = vmatpush2.msra.mxu0 0.0
  %1918 = vmatprep.subr.mxu0 0.0
  %1919 = vmatpush2.msra.mxu0 0.0
  %1920 = vmatprep.subr.mxu0 0.0
  %1921 = vmatpush2.msra.mxu0 0.0
  %1922 = vmatprep.subr.mxu0 0.0
  %1923 = vmatpush2.msra.mxu0 0.0
  %1924 = vmatprep.subr.mxu0 0.0
  %1925 = vmatpush2.msra.mxu0 0.0
  %1926 = vmatprep.subr.mxu0 0.0
  %1927 = vmatpush2.msra.mxu0 0.0
  %1928 = vmatprep.mubr.f32.mxu0 0.0
  %1929 = vmatmul.mubr.f32.gmra.mxu0 %v1862
  %v1930 = vpop.f32.mrf.mxu0
  %v1931 = vadd.f32 0.0, %v1930
  %v1932 = vpop.f32.mrf.mxu0
  %1933 = vdwg.mxu0
  %1934 = vmatprep.subr.mxu0 0.0
  %1935 = vmatpush1.msra.mxu0 0.0
  %1936 = vmatprep.subr.mxu0 0.0
  %1937 = vmatpush1.msra.mxu0 0.0
  %1938 = vmatprep.subr.mxu0 0.0
  %1939 = vmatpush1.msra.mxu0 0.0
  %1940 = vmatprep.subr.mxu0 0.0
  %1941 = vmatpush1.msra.mxu0 0.0
  %1942 = vmatprep.subr.mxu0 0.0
  %1943 = vmatpush1.msra.mxu0 0.0
  %1944 = vmatprep.subr.mxu0 0.0
  %1945 = vmatpush1.msra.mxu0 0.0
  %1946 = vmatprep.subr.mxu0 0.0
  %1947 = vmatpush1.msra.mxu0 0.0
  %1948 = vmatprep.subr.mxu0 0.0
  %1949 = vmatpush1.msra.mxu0 0.0
  %1950 = vmatprep.subr.mxu0 0.0
  %1951 = vmatpush1.msra.mxu0 0.0
  %1952 = vmatprep.subr.mxu0 0.0
  %1953 = vmatpush1.msra.mxu0 0.0
  %1954 = vmatprep.subr.mxu0 0.0
  %1955 = vmatpush1.msra.mxu0 0.0
  %1956 = vmatprep.subr.mxu0 0.0
  %1957 = vmatpush1.msra.mxu0 0.0
  %1958 = vmatprep.subr.mxu0 0.0
  %1959 = vmatpush1.msra.mxu0 %v212
  %1960 = vmatprep.subr.mxu0 0.0
  %1961 = vmatpush1.msra.mxu0 %v211
  %1962 = vmatprep.subr.mxu0 0.0
  %1963 = vmatpush1.msra.mxu0 %v210
  %1964 = vmatprep.subr.mxu0 0.0
  %1965 = vmatpush1.msra.mxu0 %v209
  %1966 = vmatprep.subr.mxu0 0.0
  %1967 = vmatpush2.msra.mxu0 0.0
  %1968 = vmatprep.subr.mxu0 0.0
  %1969 = vmatpush2.msra.mxu0 0.0
  %1970 = vmatprep.subr.mxu0 0.0
  %1971 = vmatpush2.msra.mxu0 0.0
  %1972 = vmatprep.subr.mxu0 0.0
  %1973 = vmatpush2.msra.mxu0 0.0
  %1974 = vmatprep.subr.mxu0 0.0
  %1975 = vmatpush2.msra.mxu0 0.0
  %1976 = vmatprep.subr.mxu0 0.0
  %1977 = vmatpush2.msra.mxu0 0.0
  %1978 = vmatprep.subr.mxu0 0.0
  %1979 = vmatpush2.msra.mxu0 0.0
  %1980 = vmatprep.subr.mxu0 0.0
  %1981 = vmatpush2.msra.mxu0 0.0
  %1982 = vmatprep.subr.mxu0 0.0
  %1983 = vmatpush2.msra.mxu0 0.0
  %1984 = vmatprep.subr.mxu0 0.0
  %1985 = vmatpush2.msra.mxu0 0.0
  %1986 = vmatprep.subr.mxu0 0.0
  %1987 = vmatpush2.msra.mxu0 0.0
  %1988 = vmatprep.subr.mxu0 0.0
  %1989 = vmatpush2.msra.mxu0 0.0
  %1990 = vmatprep.subr.mxu0 0.0
  %1991 = vmatpush2.msra.mxu0 0.0
  %1992 = vmatprep.subr.mxu0 0.0
  %1993 = vmatpush2.msra.mxu0 0.0
  %1994 = vmatprep.subr.mxu0 0.0
  %1995 = vmatpush2.msra.mxu0 0.0
  %1996 = vmatprep.subr.mxu0 0.0
  %1997 = vmatpush2.msra.mxu0 0.0
  %1998 = vmatprep.mubr.f32.mxu0 0.0
  %1999 = vmatmul.mubr.f32.gmra.mxu0 %v1755
  %v2000 = vpop.f32.mrf.mxu0
  %v2001 = vadd.f32 %v1931, %v2000
  %v2002 = vpop.f32.mrf.mxu0
  %2003 = vdwg.mxu0
  %v2004 = vadd.f32 %v2001, %v590
  %v2005 = vxor.u32 %v2004, 2147483648
  %v2006 = vmul.f32 %v2005, 1.442695
  %v2007 = vpow.pop %v2006
  %v2008 = vadd.f32 %v2007, 1.0
  %v2009 = vrcp.pop %v2008
  %v2010 = vmul.f32 1.0, %v2009
  %v2011 = vtanh.pop %v2004
  %v2012 = vmul.f32 %v2010, %v1749
  %2014 = vrot.lane.b32.xlu0 %v2011, 64
  %v2015 = vpop.permute.xlu0 %2014
  %v2017 = vmul.f32 %v2010, %v2015
  %2019 = vrot.lane.b32.xlu0 %v2017, 32
  %v2020 = vpop.permute.xlu0 %2019
  %v2022 = vadd.f32 %v2012, %v2020
  %v2023 = vtanh.pop %v2022
  %2025 = vrot.lane.b32.xlu0 %v2023, 64
  %v2026 = vpop.permute.xlu0 %2025
  %v2028 = vmul.f32 %v2010, %v2026
  %v2029 = vsel %vm1575, %v2028, %v1748
  %v2030 = vsel %vm1575, %v2022, %v1749
  %s2031 = scalar_lea.vmem [#allocation2], 56
  %v2032 = vld [vmem:[%s2031] sm:$0xff]
  %2034 = vrot.lane.b32.xlu0 %v1857, 32
  %v2035 = vpop.permute.xlu0 %2034
  %v2036 = vsel %vm222, %v2035, 0
  %2038 = vmatprep.subr.mxu0 0.0
  %2039 = vmatpush1.msra.mxu0 0.0
  %2040 = vmatprep.subr.mxu0 0.0
  %2041 = vmatpush1.msra.mxu0 0.0
  %2042 = vmatprep.subr.mxu0 0.0
  %2043 = vmatpush1.msra.mxu0 0.0
  %2044 = vmatprep.subr.mxu0 0.0
  %2045 = vmatpush1.msra.mxu0 0.0
  %2046 = vmatprep.subr.mxu0 0.0
  %2047 = vmatpush1.msra.mxu0 0.0
  %2048 = vmatprep.subr.mxu0 0.0
  %2049 = vmatpush1.msra.mxu0 0.0
  %2050 = vmatprep.subr.mxu0 0.0
  %2051 = vmatpush1.msra.mxu0 0.0
  %2052 = vmatprep.subr.mxu0 0.0
  %2053 = vmatpush1.msra.mxu0 0.0
  %2054 = vmatprep.subr.mxu0 0.0
  %2055 = vmatpush1.msra.mxu0 0.0
  %2056 = vmatprep.subr.mxu0 0.0
  %2057 = vmatpush1.msra.mxu0 0.0
  %2058 = vmatprep.subr.mxu0 0.0
  %2059 = vmatpush1.msra.mxu0 0.0
  %2060 = vmatprep.subr.mxu0 0.0
  %2061 = vmatpush1.msra.mxu0 0.0
  %2062 = vmatprep.subr.mxu0 0.0
  %2063 = vmatpush1.msra.mxu0 %v204
  %2064 = vmatprep.subr.mxu0 0.0
  %2065 = vmatpush1.msra.mxu0 %v203
  %2066 = vmatprep.subr.mxu0 0.0
  %2067 = vmatpush1.msra.mxu0 %v202
  %2068 = vmatprep.subr.mxu0 0.0
  %2069 = vmatpush1.msra.mxu0 %v201
  %2070 = vmatprep.subr.mxu0 0.0
  %2071 = vmatpush2.msra.mxu0 0.0
  %2072 = vmatprep.subr.mxu0 0.0
  %2073 = vmatpush2.msra.mxu0 0.0
  %2074 = vmatprep.subr.mxu0 0.0
  %2075 = vmatpush2.msra.mxu0 0.0
  %2076 = vmatprep.subr.mxu0 0.0
  %2077 = vmatpush2.msra.mxu0 0.0
  %2078 = vmatprep.subr.mxu0 0.0
  %2079 = vmatpush2.msra.mxu0 0.0
  %2080 = vmatprep.subr.mxu0 0.0
  %2081 = vmatpush2.msra.mxu0 0.0
  %2082 = vmatprep.subr.mxu0 0.0
  %2083 = vmatpush2.msra.mxu0 0.0
  %2084 = vmatprep.subr.mxu0 0.0
  %2085 = vmatpush2.msra.mxu0 0.0
  %2086 = vmatprep.subr.mxu0 0.0
  %2087 = vmatpush2.msra.mxu0 0.0
  %2088 = vmatprep.subr.mxu0 0.0
  %2089 = vmatpush2.msra.mxu0 0.0
  %2090 = vmatprep.subr.mxu0 0.0
  %2091 = vmatpush2.msra.mxu0 0.0
  %2092 = vmatprep.subr.mxu0 0.0
  %2093 = vmatpush2.msra.mxu0 0.0
  %2094 = vmatprep.subr.mxu0 0.0
  %2095 = vmatpush2.msra.mxu0 0.0
  %2096 = vmatprep.subr.mxu0 0.0
  %2097 = vmatpush2.msra.mxu0 0.0
  %2098 = vmatprep.subr.mxu0 0.0
  %2099 = vmatpush2.msra.mxu0 0.0
  %2100 = vmatprep.subr.mxu0 0.0
  %2101 = vmatpush2.msra.mxu0 0.0
  %2102 = vmatprep.mubr.f32.mxu0 0.0
  %2103 = vmatmul.mubr.f32.gmra.mxu0 %v2036
  %v2104 = vpop.f32.mrf.mxu0
  %v2105 = vadd.f32 0.0, %v2104
  %v2106 = vpop.f32.mrf.mxu0
  %2107 = vdwg.mxu0
  %v2108 = vadd.f32 %v2032, %v2105
  %v2109 = vxor.u32 %v2108, 2147483648
  %v2110 = vmul.f32 %v2109, 1.442695
  %v2111 = vpow.pop %v2110
  %v2112 = vadd.f32 %v2111, 1.0
  %v2113 = vrcp.pop %v2112
  %v2114 = vmul.f32 1.0, %v2113
  %v2115 = vtanh.pop %v2108
  %v2116 = vmul.f32 %v2114, %v1858
  %2118 = vrot.lane.b32.xlu0 %v2115, 64
  %v2119 = vpop.permute.xlu0 %2118
  %v2121 = vmul.f32 %v2114, %v2119
  %2123 = vrot.lane.b32.xlu0 %v2121, 32
  %v2124 = vpop.permute.xlu0 %2123
  %v2126 = vadd.f32 %v2116, %v2124
  %v2127 = vtanh.pop %v2126
  %2129 = vrot.lane.b32.xlu0 %v2127, 64
  %v2130 = vpop.permute.xlu0 %2129
  %v2132 = vmul.f32 %v2114, %v2130
  %s2133 = sadd.s32 %s214, 7
  %p2134 = scmp.lt.s32.totalorder %s2133, 8
  %s2135 = scalar_select %p2134, 1, 0
  %v2136 = vstv %s2135
  %vm2137 = vcmp.eq.s32.totalorder %v2136, 1
  %v2138 = vsel %vm2137, %v2132, %v1857
  %v2139 = vsel %vm2137, %v2126, %v1858
  %2141 = vrot.lane.b32.xlu0 %v2029, 32
  %v2142 = vpop.permute.xlu0 %2141
  %v2143 = vsel %vm222, %v2142, 0
  %2145 = vmatprep.subr.mxu0 0.0
  %2146 = vmatpush1.msra.mxu0 0.0
  %2147 = vmatprep.subr.mxu0 0.0
  %2148 = vmatpush1.msra.mxu0 0.0
  %2149 = vmatprep.subr.mxu0 0.0
  %2150 = vmatpush1.msra.mxu0 0.0
  %2151 = vmatprep.subr.mxu0 0.0
  %2152 = vmatpush1.msra.mxu0 0.0
  %2153 = vmatprep.subr.mxu0 0.0
  %2154 = vmatpush1.msra.mxu0 0.0
  %2155 = vmatprep.subr.mxu0 0.0
  %2156 = vmatpush1.msra.mxu0 0.0
  %2157 = vmatprep.subr.mxu0 0.0
  %2158 = vmatpush1.msra.mxu0 0.0
  %2159 = vmatprep.subr.mxu0 0.0
  %2160 = vmatpush1.msra.mxu0 0.0
  %2161 = vmatprep.subr.mxu0 0.0
  %2162 = vmatpush1.msra.mxu0 0.0
  %2163 = vmatprep.subr.mxu0 0.0
  %2164 = vmatpush1.msra.mxu0 0.0
  %2165 = vmatprep.subr.mxu0 0.0
  %2166 = vmatpush1.msra.mxu0 0.0
  %2167 = vmatprep.subr.mxu0 0.0
  %2168 = vmatpush1.msra.mxu0 0.0
  %2169 = vmatprep.subr.mxu0 0.0
  %2170 = vmatpush1.msra.mxu0 %v208
  %2171 = vmatprep.subr.mxu0 0.0
  %2172 = vmatpush1.msra.mxu0 %v207
  %2173 = vmatprep.subr.mxu0 0.0
  %2174 = vmatpush1.msra.mxu0 %v206
  %2175 = vmatprep.subr.mxu0 0.0
  %2176 = vmatpush1.msra.mxu0 %v205
  %2177 = vmatprep.subr.mxu0 0.0
  %2178 = vmatpush2.msra.mxu0 0.0
  %2179 = vmatprep.subr.mxu0 0.0
  %2180 = vmatpush2.msra.mxu0 0.0
  %2181 = vmatprep.subr.mxu0 0.0
  %2182 = vmatpush2.msra.mxu0 0.0
  %2183 = vmatprep.subr.mxu0 0.0
  %2184 = vmatpush2.msra.mxu0 0.0
  %2185 = vmatprep.subr.mxu0 0.0
  %2186 = vmatpush2.msra.mxu0 0.0
  %2187 = vmatprep.subr.mxu0 0.0
  %2188 = vmatpush2.msra.mxu0 0.0
  %2189 = vmatprep.subr.mxu0 0.0
  %2190 = vmatpush2.msra.mxu0 0.0
  %2191 = vmatprep.subr.mxu0 0.0
  %2192 = vmatpush2.msra.mxu0 0.0
  %2193 = vmatprep.subr.mxu0 0.0
  %2194 = vmatpush2.msra.mxu0 0.0
  %2195 = vmatprep.subr.mxu0 0.0
  %2196 = vmatpush2.msra.mxu0 0.0
  %2197 = vmatprep.subr.mxu0 0.0
  %2198 = vmatpush2.msra.mxu0 0.0
  %2199 = vmatprep.subr.mxu0 0.0
  %2200 = vmatpush2.msra.mxu0 0.0
  %2201 = vmatprep.subr.mxu0 0.0
  %2202 = vmatpush2.msra.mxu0 0.0
  %2203 = vmatprep.subr.mxu0 0.0
  %2204 = vmatpush2.msra.mxu0 0.0
  %2205 = vmatprep.subr.mxu0 0.0
  %2206 = vmatpush2.msra.mxu0 0.0
  %2207 = vmatprep.subr.mxu0 0.0
  %2208 = vmatpush2.msra.mxu0 0.0
  %2209 = vmatprep.mubr.f32.mxu0 0.0
  %2210 = vmatmul.mubr.f32.gmra.mxu0 %v2143
  %v2211 = vpop.f32.mrf.mxu0
  %v2212 = vadd.f32 0.0, %v2211
  %v2213 = vpop.f32.mrf.mxu0
  %2214 = vdwg.mxu0
  %2215 = vmatprep.subr.mxu0 0.0
  %2216 = vmatpush1.msra.mxu0 0.0
  %2217 = vmatprep.subr.mxu0 0.0
  %2218 = vmatpush1.msra.mxu0 0.0
  %2219 = vmatprep.subr.mxu0 0.0
  %2220 = vmatpush1.msra.mxu0 0.0
  %2221 = vmatprep.subr.mxu0 0.0
  %2222 = vmatpush1.msra.mxu0 0.0
  %2223 = vmatprep.subr.mxu0 0.0
  %2224 = vmatpush1.msra.mxu0 0.0
  %2225 = vmatprep.subr.mxu0 0.0
  %2226 = vmatpush1.msra.mxu0 0.0
  %2227 = vmatprep.subr.mxu0 0.0
  %2228 = vmatpush1.msra.mxu0 0.0
  %2229 = vmatprep.subr.mxu0 0.0
  %2230 = vmatpush1.msra.mxu0 0.0
  %2231 = vmatprep.subr.mxu0 0.0
  %2232 = vmatpush1.msra.mxu0 0.0
  %2233 = vmatprep.subr.mxu0 0.0
  %2234 = vmatpush1.msra.mxu0 0.0
  %2235 = vmatprep.subr.mxu0 0.0
  %2236 = vmatpush1.msra.mxu0 0.0
  %2237 = vmatprep.subr.mxu0 0.0
  %2238 = vmatpush1.msra.mxu0 0.0
  %2239 = vmatprep.subr.mxu0 0.0
  %2240 = vmatpush1.msra.mxu0 %v212
  %2241 = vmatprep.subr.mxu0 0.0
  %2242 = vmatpush1.msra.mxu0 %v211
  %2243 = vmatprep.subr.mxu0 0.0
  %2244 = vmatpush1.msra.mxu0 %v210
  %2245 = vmatprep.subr.mxu0 0.0
  %2246 = vmatpush1.msra.mxu0 %v209
  %2247 = vmatprep.subr.mxu0 0.0
  %2248 = vmatpush2.msra.mxu0 0.0
  %2249 = vmatprep.subr.mxu0 0.0
  %2250 = vmatpush2.msra.mxu0 0.0
  %2251 = vmatprep.subr.mxu0 0.0
  %2252 = vmatpush2.msra.mxu0 0.0
  %2253 = vmatprep.subr.mxu0 0.0
  %2254 = vmatpush2.msra.mxu0 0.0
  %2255 = vmatprep.subr.mxu0 0.0
  %2256 = vmatpush2.msra.mxu0 0.0
  %2257 = vmatprep.subr.mxu0 0.0
  %2258 = vmatpush2.msra.mxu0 0.0
  %2259 = vmatprep.subr.mxu0 0.0
  %2260 = vmatpush2.msra.mxu0 0.0
  %2261 = vmatprep.subr.mxu0 0.0
  %2262 = vmatpush2.msra.mxu0 0.0
  %2263 = vmatprep.subr.mxu0 0.0
  %2264 = vmatpush2.msra.mxu0 0.0
  %2265 = vmatprep.subr.mxu0 0.0
  %2266 = vmatpush2.msra.mxu0 0.0
  %2267 = vmatprep.subr.mxu0 0.0
  %2268 = vmatpush2.msra.mxu0 0.0
  %2269 = vmatprep.subr.mxu0 0.0
  %2270 = vmatpush2.msra.mxu0 0.0
  %2271 = vmatprep.subr.mxu0 0.0
  %2272 = vmatpush2.msra.mxu0 0.0
  %2273 = vmatprep.subr.mxu0 0.0
  %2274 = vmatpush2.msra.mxu0 0.0
  %2275 = vmatprep.subr.mxu0 0.0
  %2276 = vmatpush2.msra.mxu0 0.0
  %2277 = vmatprep.subr.mxu0 0.0
  %2278 = vmatpush2.msra.mxu0 0.0
  %2279 = vmatprep.mubr.f32.mxu0 0.0
  %2280 = vmatmul.mubr.f32.gmra.mxu0 %v2036
  %v2281 = vpop.f32.mrf.mxu0
  %v2282 = vadd.f32 %v2212, %v2281
  %v2283 = vpop.f32.mrf.mxu0
  %2284 = vdwg.mxu0
  %v2285 = vadd.f32 %v2282, %v590
  %v2286 = vxor.u32 %v2285, 2147483648
  %v2287 = vmul.f32 %v2286, 1.442695
  %v2288 = vpow.pop %v2287
  %v2289 = vadd.f32 %v2288, 1.0
  %v2290 = vrcp.pop %v2289
  %v2291 = vmul.f32 1.0, %v2290
  %v2292 = vtanh.pop %v2285
  %v2293 = vmul.f32 %v2291, %v2030
  %2295 = vrot.lane.b32.xlu0 %v2292, 64
  %v2296 = vpop.permute.xlu0 %2295
  %v2298 = vmul.f32 %v2291, %v2296
  %2300 = vrot.lane.b32.xlu0 %v2298, 32
  %v2301 = vpop.permute.xlu0 %2300
  %v2303 = vadd.f32 %v2293, %v2301
  %v2304 = vtanh.pop %v2303
  %2306 = vrot.lane.b32.xlu0 %v2304, 64
  %v2307 = vpop.permute.xlu0 %2306
  %v2309 = vmul.f32 %v2291, %v2307
  %v2310 = vsel %vm1856, %v2309, %v2029
  %v2311 = vsel %vm1856, %v2303, %v2030
  %2313 = vrot.lane.b32.xlu0 %v2310, 32
  %v2314 = vpop.permute.xlu0 %2313
  %v2315 = vsel %vm222, %v2314, 0
  %2317 = vmatprep.subr.mxu0 0.0
  %2318 = vmatpush1.msra.mxu0 0.0
  %2319 = vmatprep.subr.mxu0 0.0
  %2320 = vmatpush1.msra.mxu0 0.0
  %2321 = vmatprep.subr.mxu0 0.0
  %2322 = vmatpush1.msra.mxu0 0.0
  %2323 = vmatprep.subr.mxu0 0.0
  %2324 = vmatpush1.msra.mxu0 0.0
  %2325 = vmatprep.subr.mxu0 0.0
  %2326 = vmatpush1.msra.mxu0 0.0
  %2327 = vmatprep.subr.mxu0 0.0
  %2328 = vmatpush1.msra.mxu0 0.0
  %2329 = vmatprep.subr.mxu0 0.0
  %2330 = vmatpush1.msra.mxu0 0.0
  %2331 = vmatprep.subr.mxu0 0.0
  %2332 = vmatpush1.msra.mxu0 0.0
  %2333 = vmatprep.subr.mxu0 0.0
  %2334 = vmatpush1.msra.mxu0 0.0
  %2335 = vmatprep.subr.mxu0 0.0
  %2336 = vmatpush1.msra.mxu0 0.0
  %2337 = vmatprep.subr.mxu0 0.0
  %2338 = vmatpush1.msra.mxu0 0.0
  %2339 = vmatprep.subr.mxu0 0.0
  %2340 = vmatpush1.msra.mxu0 0.0
  %2341 = vmatprep.subr.mxu0 0.0
  %2342 = vmatpush1.msra.mxu0 %v208
  %2343 = vmatprep.subr.mxu0 0.0
  %2344 = vmatpush1.msra.mxu0 %v207
  %2345 = vmatprep.subr.mxu0 0.0
  %2346 = vmatpush1.msra.mxu0 %v206
  %2347 = vmatprep.subr.mxu0 0.0
  %2348 = vmatpush1.msra.mxu0 %v205
  %2349 = vmatprep.subr.mxu0 0.0
  %2350 = vmatpush2.msra.mxu0 0.0
  %2351 = vmatprep.subr.mxu0 0.0
  %2352 = vmatpush2.msra.mxu0 0.0
  %2353 = vmatprep.subr.mxu0 0.0
  %2354 = vmatpush2.msra.mxu0 0.0
  %2355 = vmatprep.subr.mxu0 0.0
  %2356 = vmatpush2.msra.mxu0 0.0
  %2357 = vmatprep.subr.mxu0 0.0
  %2358 = vmatpush2.msra.mxu0 0.0
  %2359 = vmatprep.subr.mxu0 0.0
  %2360 = vmatpush2.msra.mxu0 0.0
  %2361 = vmatprep.subr.mxu0 0.0
  %2362 = vmatpush2.msra.mxu0 0.0
  %2363 = vmatprep.subr.mxu0 0.0
  %2364 = vmatpush2.msra.mxu0 0.0
  %2365 = vmatprep.subr.mxu0 0.0
  %2366 = vmatpush2.msra.mxu0 0.0
  %2367 = vmatprep.subr.mxu0 0.0
  %2368 = vmatpush2.msra.mxu0 0.0
  %2369 = vmatprep.subr.mxu0 0.0
  %2370 = vmatpush2.msra.mxu0 0.0
  %2371 = vmatprep.subr.mxu0 0.0
  %2372 = vmatpush2.msra.mxu0 0.0
  %2373 = vmatprep.subr.mxu0 0.0
  %2374 = vmatpush2.msra.mxu0 0.0
  %2375 = vmatprep.subr.mxu0 0.0
  %2376 = vmatpush2.msra.mxu0 0.0
  %2377 = vmatprep.subr.mxu0 0.0
  %2378 = vmatpush2.msra.mxu0 0.0
  %2379 = vmatprep.subr.mxu0 0.0
  %2380 = vmatpush2.msra.mxu0 0.0
  %2381 = vmatprep.mubr.f32.mxu0 0.0
  %2382 = vmatmul.mubr.f32.gmra.mxu0 %v2315
  %v2383 = vpop.f32.mrf.mxu0
  %v2384 = vadd.f32 0.0, %v2383
  %v2385 = vpop.f32.mrf.mxu0
  %2386 = vdwg.mxu0
  %2388 = vrot.lane.b32.xlu0 %v2138, 32
  %v2389 = vpop.permute.xlu0 %2388
  %v2390 = vsel %vm222, %v2389, 0
  %2392 = vmatprep.subr.mxu0 0.0
  %2393 = vmatpush1.msra.mxu0 0.0
  %2394 = vmatprep.subr.mxu0 0.0
  %2395 = vmatpush1.msra.mxu0 0.0
  %2396 = vmatprep.subr.mxu0 0.0
  %2397 = vmatpush1.msra.mxu0 0.0
  %2398 = vmatprep.subr.mxu0 0.0
  %2399 = vmatpush1.msra.mxu0 0.0
  %2400 = vmatprep.subr.mxu0 0.0
  %2401 = vmatpush1.msra.mxu0 0.0
  %2402 = vmatprep.subr.mxu0 0.0
  %2403 = vmatpush1.msra.mxu0 0.0
  %2404 = vmatprep.subr.mxu0 0.0
  %2405 = vmatpush1.msra.mxu0 0.0
  %2406 = vmatprep.subr.mxu0 0.0
  %2407 = vmatpush1.msra.mxu0 0.0
  %2408 = vmatprep.subr.mxu0 0.0
  %2409 = vmatpush1.msra.mxu0 0.0
  %2410 = vmatprep.subr.mxu0 0.0
  %2411 = vmatpush1.msra.mxu0 0.0
  %2412 = vmatprep.subr.mxu0 0.0
  %2413 = vmatpush1.msra.mxu0 0.0
  %2414 = vmatprep.subr.mxu0 0.0
  %2415 = vmatpush1.msra.mxu0 0.0
  %2416 = vmatprep.subr.mxu0 0.0
  %2417 = vmatpush1.msra.mxu0 %v212
  %2418 = vmatprep.subr.mxu0 0.0
  %2419 = vmatpush1.msra.mxu0 %v211
  %2420 = vmatprep.subr.mxu0 0.0
  %2421 = vmatpush1.msra.mxu0 %v210
  %2422 = vmatprep.subr.mxu0 0.0
  %2423 = vmatpush1.msra.mxu0 %v209
  %2424 = vmatprep.subr.mxu0 0.0
  %2425 = vmatpush2.msra.mxu0 0.0
  %2426 = vmatprep.subr.mxu0 0.0
  %2427 = vmatpush2.msra.mxu0 0.0
  %2428 = vmatprep.subr.mxu0 0.0
  %2429 = vmatpush2.msra.mxu0 0.0
  %2430 = vmatprep.subr.mxu0 0.0
  %2431 = vmatpush2.msra.mxu0 0.0
  %2432 = vmatprep.subr.mxu0 0.0
  %2433 = vmatpush2.msra.mxu0 0.0
  %2434 = vmatprep.subr.mxu0 0.0
  %2435 = vmatpush2.msra.mxu0 0.0
  %2436 = vmatprep.subr.mxu0 0.0
  %2437 = vmatpush2.msra.mxu0 0.0
  %2438 = vmatprep.subr.mxu0 0.0
  %2439 = vmatpush2.msra.mxu0 0.0
  %2440 = vmatprep.subr.mxu0 0.0
  %2441 = vmatpush2.msra.mxu0 0.0
  %2442 = vmatprep.subr.mxu0 0.0
  %2443 = vmatpush2.msra.mxu0 0.0
  %2444 = vmatprep.subr.mxu0 0.0
  %2445 = vmatpush2.msra.mxu0 0.0
  %2446 = vmatprep.subr.mxu0 0.0
  %2447 = vmatpush2.msra.mxu0 0.0
  %2448 = vmatprep.subr.mxu0 0.0
  %2449 = vmatpush2.msra.mxu0 0.0
  %2450 = vmatprep.subr.mxu0 0.0
  %2451 = vmatpush2.msra.mxu0 0.0
  %2452 = vmatprep.subr.mxu0 0.0
  %2453 = vmatpush2.msra.mxu0 0.0
  %2454 = vmatprep.subr.mxu0 0.0
  %2455 = vmatpush2.msra.mxu0 0.0
  %2456 = vmatprep.mubr.f32.mxu0 0.0
  %2457 = vmatmul.mubr.f32.gmra.mxu0 %v2390
  %v2458 = vpop.f32.mrf.mxu0
  %v2459 = vadd.f32 %v2384, %v2458
  %v2460 = vpop.f32.mrf.mxu0
  %2461 = vdwg.mxu0
  %v2462 = vadd.f32 %v2459, %v590
  %v2463 = vxor.u32 %v2462, 2147483648
  %v2464 = vmul.f32 %v2463, 1.442695
  %v2465 = vpow.pop %v2464
  %v2466 = vadd.f32 %v2465, 1.0
  %v2467 = vrcp.pop %v2466
  %v2468 = vmul.f32 1.0, %v2467
  %v2469 = vtanh.pop %v2462
  %v2470 = vmul.f32 %v2468, %v2311
  %2472 = vrot.lane.b32.xlu0 %v2469, 64
  %v2473 = vpop.permute.xlu0 %2472
  %v2475 = vmul.f32 %v2468, %v2473
  %2477 = vrot.lane.b32.xlu0 %v2475, 32
  %v2478 = vpop.permute.xlu0 %2477
  %v2480 = vadd.f32 %v2470, %v2478
  %v2481 = vtanh.pop %v2480
  %2483 = vrot.lane.b32.xlu0 %v2481, 64
  %v2484 = vpop.permute.xlu0 %2483
  %v2486 = vmul.f32 %v2468, %v2484
  %v2487 = vsel %vm2137, %v2486, %v2310
  %v2488 = vsel %vm2137, %v2480, %v2311
  %2490 = vst.msk [vmem:[#allocation3] sm:$0xff] %vm222, %v2389
  %2492 = vrot.lane.b32.xlu0 %v2139, 96
  %v2493 = vpop.permute.xlu0 %2492
  %2495 = vst.msk [vmem:[#allocation4] sm:$0xff] %vm222, %v2493
  %2497 = vrot.lane.b32.xlu0 %v2487, 32
  %v2498 = vpop.permute.xlu0 %2497
  %2500 = vst.msk [vmem:[%s216] sm:$0xff] %vm222, %v2498
  %2502 = vrot.lane.b32.xlu0 %v2488, 96
  %v2503 = vpop.permute.xlu0 %2502
  %2505 = vst.msk [vmem:[%s219] sm:$0xff] %vm222, %v2503
  // Predicated region
  $region42: #{lstm1_forward_impl.1} parent=0 // pred_check
    %p2506 = pneg %p34
  $region43: #{lstm1_forward_impl.1} parent=0 // pred_check_branch
    %2508 = sbr.rel (%p2506) target = $region45
  $region44: #{lstm1_forward_impl.1} parent=0 // pred_region
    %v2509 = vld [vmem:[%s7] sm:$0x1]
    %v2511 = vlaneseq
    %v2512 = vshrl.u32 %v2511, 7
    %v2513 = vsub.s32 0, %v2512
    %v2514 = vrot.slane %v2509, %v2513
    %2515 = vrot.lane.b32.xlu0 %v2514, 96
    %v2516 = vpop.permute.xlu0 %2515
    %v2518 = vmul.f32 %v2487, %v2516
    %2520 = vrot.lane.b32.xlu0 %v2518, 32
    %v2521 = vpop.permute.xlu0 %2520
    %v2523 = vsel %vm222, %v2521, 0.0
    %2524 = vadd.xlane.f32.xlu0 %v2523
    %v2525 = vpop.xlane.xlu0 %2524
    %v2526 = vld [vmem:[#allocation5] sm:$0x1]
    %v2528 = vlaneseq
    %v2529 = vshrl.u32 %v2528, 7
    %v2530 = vsub.s32 0, %v2529
    %v2531 = vrot.slane %v2526, %v2530
    %v2533 = vadd.f32 %v2525, %v2531
    %v2534 = vmax.f32 %v2533, 0.0
    %vm2535 = vcmask 7168
    %2536 = vst.msk [vmem:[%s9] sm:$0xff] %vm2535, %v2534
  $region45: #{lstm1_forward_impl.1} parent=0 // pred_fallthru
    _
  // Predicated region
  $region46: #{lstm1_forward_impl.1} parent=0 // pred_check
    _
  $region47: #{lstm1_forward_impl.1} parent=0 // pred_check_branch
    %2538 = sbr.rel (0) target = $region49
  $region48: #{lstm1_forward_impl.1} parent=0 // pred_region
    _
  $region49: #{lstm1_forward_impl.1} parent=0 // pred_fallthru
    _
  // Predicated region
  $region50: #{lstm1_forward_impl.1} parent=0 // pred_check
    _
  $region51: #{lstm1_forward_impl.1} parent=0 // pred_check_branch
    %2540 = sbr.rel (0) target = $region53
  $region52: #{lstm1_forward_impl.1} parent=0 // pred_region
    _
  $region53: #{lstm1_forward_impl.1} parent=0 // pred_fallthru
    _

</llo_original>
